<compile_context>
chip_gen: v7x
topology: tpu7x:2x2x1
jax: 0.10.0
libtpu: 0.0.40
codegen_flags: <defaults>
</compile_context>

<pallas_src>
import functools

import numpy as np
import jax
import jax.numpy as jnp
from jax.experimental import pallas as pl
from jax.experimental.pallas import tpu as pltpu

# ----------------------- small, module-consistent config ---------------------
RESOLUTION = 8          # cfg.MODEL.ROI_BOX_HEAD.POOLER_RESOLUTION
POOLER_SCALE = 0.25     # single FPN level (cfg.MODEL.ROI_BOX_HEAD.POOLER_SCALES)
SAMPLING_RATIO = 2      # cfg.MODEL.ROI_BOX_HEAD.POOLER_SAMPLING_RATIO
IN_CHANNELS = 16        # cfg.MODEL.BACKBONE.OUT_CHANNELS
CONV_HEAD_DIM = 16      # cfg.MODEL.ROI_BOX_HEAD.CONV_HEAD_DIM
NUM_STACKED_CONVS = 4   # cfg.MODEL.ROI_BOX_HEAD.NUM_STACKED_CONVS
DILATION = 1            # cfg.MODEL.ROI_BOX_HEAD.DILATION
USE_GN = False          # cfg.MODEL.ROI_BOX_HEAD.USE_GN
MLP_HEAD_DIM = 32       # cfg.MODEL.ROI_BOX_HEAD.MLP_HEAD_DIM

R_BLK_DEFAULT = 128     # ROIs per grid step (amortizes per-step overhead,
                        # M = R_BLK*H = 1024 rows per MXU call)


def _round_up(x, m):
    return ((x + m - 1) // m) * m


# ----------------------------- fused Pallas kernel ----------------------------
def fused_head_kernel(x_ref, wc_ref, bc_ref, wf_ref, bf_ref, o_ref, pad_ref,
                      *, num_convs, res, dilation):
    # x_ref  : (R_BLK, res, W*C)            pooled ROI features, lane-dense
    # wc_ref : (num_convs, 3, W*C, W*C)     banded conv weights (h-taps folded in)
    # bc_ref : (num_convs, 1, W*C)          conv bias tiled across W
    # wf_ref : (res, W*C, MLP)              fc6 weight, rows permuted to (h, w*c)
    # bf_ref : (1, MLP)                     fc6 bias
    # o_ref  : (R_BLK, MLP)
    # pad_ref: (R_BLK, res + 2*dilation, W*C) VMEM scratch, activations live here
    d = dilation
    r_blk = x_ref.shape[0]
    wc = x_ref.shape[2]

    # zero the vertical halo rows (interior rows are overwritten every layer)
    zeros_halo = jnp.zeros((r_blk, d, wc), jnp.float32)
    pad_ref[:, 0:d, :] = zeros_halo
    pad_ref[:, res + d:, :] = zeros_halo

    # layer-0 input into the interior of the padded buffer
    pad_ref[:, d:d + res, :] = x_ref[...]

    # ---- stacked 3x3 convs: 3 lane-dense MXU matmuls per layer ----
    for layer in range(num_convs):
        acc = jnp.zeros((r_blk * res, wc), jnp.float32)
        for dh in range(3):
            xin = pad_ref[:, dh * d:dh * d + res, :].reshape(r_blk * res, wc)
            acc = acc + jnp.dot(xin, wc_ref[layer, dh],
                                preferred_element_type=jnp.float32)
        y = jnp.maximum(acc + bc_ref[layer], 0.0)
        pad_ref[:, d:d + res, :] = y.reshape(r_blk, res, wc)

    # ---- fc6 (+ReLU), fused: contract over (h, w*c) with K=128 slabs ----
    mlp = o_ref.shape[1]
    acc_fc = jnp.zeros((r_blk, mlp), jnp.float32)
    for h in range(res):
        acc_fc = acc_fc + jnp.dot(pad_ref[:, d + h, :], wf_ref[h],
                                  preferred_element_type=jnp.float32)
    o_ref[...] = jnp.maximum(acc_fc + bf_ref[...], 0.0)


def fused_xconv_fc_head(x_pooled, conv_w_band, conv_b_lane, fc_w_hwc, fc_b2,
                        *, dilation=1, r_blk=R_BLK_DEFAULT):
    """x_pooled: (R, res, res, C) NHWC pooled ROI features -> (R, MLP)."""
    R, res, _, C = x_pooled.shape
    wc = res * C                                   # 8*16 = 128 (lane-dense)
    num_convs = conv_w_band.shape[0]
    mlp = fc_w_hwc.shape[-1]

    x2 = x_pooled.reshape(R, res, wc)              # free row-major reshape
    r_blk = min(r_blk, _round_up(R, 8))            # keep blocks a multiple of 8
    r_pad = _round_up(R, r_blk)
    if r_pad != R:
        x2 = jnp.pad(x2, ((0, r_pad - R), (0, 0), (0, 0)))

    kern = functools.partial(fused_head_kernel, num_convs=num_convs,
                             res=res, dilation=dilation)
    out = pl.pallas_call(
        kern,
        out_shape=jax.ShapeDtypeStruct((r_pad, mlp), jnp.float32),
        grid=(r_pad // r_blk,),
        in_specs=[
            pl.BlockSpec((r_blk, res, wc), lambda i: (i, 0, 0)),
            pl.BlockSpec(conv_w_band.shape, lambda i: (0, 0, 0, 0)),
            pl.BlockSpec(conv_b_lane.shape, lambda i: (0, 0, 0)),
            pl.BlockSpec(fc_w_hwc.shape, lambda i: (0, 0, 0)),
            pl.BlockSpec((1, mlp), lambda i: (0, 0)),
        ],
        out_specs=pl.BlockSpec((r_blk, mlp), lambda i: (i, 0)),
        scratch_shapes=[pltpu.VMEM((r_blk, res + 2 * dilation, wc), jnp.float32)],
        compiler_params=pltpu.CompilerParams(
            dimension_semantics=("parallel",)),
    )(x2, conv_w_band, conv_b_lane, fc_w_hwc, fc_b2)
    return out[:R]


# --------------------- weight preprocessing (done once at init) ---------------
def _band_conv_weight(w, width, dilation):
    """(3, 3, Cin, Cout) conv weight -> (3, width*Cin, width*Cout) banded matrices.

    For vertical tap dh, Wband[dh] maps a lane-dense row (w*Cin + cin) to
    (w'*Cout + cout), with the horizontal taps and the horizontal zero-padding
    folded into the band structure (absent blocks == zero padding)."""
    kh, kw, cin, cout = w.shape
    m = np.zeros((kw, width, width), np.float32)
    for dw in range(kw):
        for wo in range(width):
            wi = wo + (dw - kw // 2) * dilation
            if 0 <= wi < width:
                m[dw, wi, wo] = 1.0
    band = jnp.einsum('hwio,wab->haibo', w, jnp.asarray(m))
    return band.reshape(kh, width * cin, width * cout)


# --------------------- ROIAlign pooler (plain-JAX glue) ----------------------
# TODO(synk): multi-level FPN level assignment (LevelMapper) not implemented;
#             single-level ROIAlign is equivalent when len(scales) == 1.
# TODO(synk): for production (C=256, R~1000) move this gather into a Pallas
#             kernel with PrefetchScalarGridSpec + per-ROI DMA.
def roi_align(features_nhwc, rois, roi_batch_idx, resolution, spatial_scale,
              sampling_ratio):
    B, H, W, C = features_nhwc.shape
    R = rois.shape[0]
    sr = sampling_ratio
    res = resolution

    x1 = rois[:, 0] * spatial_scale
    y1 = rois[:, 1] * spatial_scale
    x2 = rois[:, 2] * spatial_scale
    y2 = rois[:, 3] * spatial_scale
    roi_w = jnp.maximum(x2 - x1, 1.0)
    roi_h = jnp.maximum(y2 - y1, 1.0)
    bin_w = roi_w / res
    bin_h = roi_h / res

    ph = jnp.arange(res, dtype=jnp.float32)
    iy = jnp.arange(sr, dtype=jnp.float32)
    off = (ph[:, None] + (iy[None, :] + 0.5) / sr).reshape(-1)   # (res*sr,)
    ys = y1[:, None] + off[None, :] * bin_h[:, None]             # (R, res*sr)
    xs = x1[:, None] + off[None, :] * bin_w[:, None]             # (R, res*sr)

    # maskrcnn_benchmark semantics: samples outside [-1, H]/[-1, W] contribute 0
    valid_y = (ys >= -1.0) & (ys <= float(H))
    valid_x = (xs >= -1.0) & (xs <= float(W))

    y = jnp.clip(ys, 0.0, H - 1.0)
    x = jnp.clip(xs, 0.0, W - 1.0)
    y0 = jnp.floor(y).astype(jnp.int32)
    x0 = jnp.floor(x).astype(jnp.int32)
    y1i = jnp.minimum(y0 + 1, H - 1)
    x1i = jnp.minimum(x0 + 1, W - 1)
    ly = y - y0.astype(jnp.float32)
    lx = x - x0.astype(jnp.float32)
    hy = 1.0 - ly
    hx = 1.0 - lx

    bidx = roi_batch_idx[:, None, None]

    def gather(yi, xi):
        # batch index folded into the gather -> no (R, H, W, C) feature copy
        return features_nhwc[bidx, yi[:, :, None], xi[:, None, :]]  # (R,Sy,Sx,C)

    w1 = (hy[:, :, None] * hx[:, None, :])[..., None]
    w2 = (hy[:, :, None] * lx[:, None, :])[..., None]
    w3 = (ly[:, :, None] * hx[:, None, :])[..., None]
    w4 = (ly[:, :, None] * lx[:, None, :])[..., None]
    samples = (gather(y0, x0) * w1 + gather(y0, x1i) * w2 +
               gather(y1i, x0) * w3 + gather(y1i, x1i) * w4)     # (R, Sy, Sx, C)

    valid = (valid_y[:, :, None] & valid_x[:, None, :]).astype(samples.dtype)
    samples = samples * valid[..., None]

    samples = samples.reshape(R, res, sr, res, sr, C)
    return samples.mean(axis=(2, 4))                             # (R, res, res, C)


# ------------------------------- module ---------------------------------------
class FPNXconv1fcFeatureExtractorPallas:
    def __init__(self, key):
        assert IN_CHANNELS == CONV_HEAD_DIM, "fused head assumes Cin == Cout"
        keys = jax.random.split(key, NUM_STACKED_CONVS + 1)
        conv_w, conv_b = [], []
        cin = IN_CHANNELS
        for i in range(NUM_STACKED_CONVS):
            # nn.init.normal_(weight, std=0.01); bias = 0 (use_gn=False)
            w = 0.01 * jax.random.normal(keys[i], (3, 3, cin, CONV_HEAD_DIM),
                                         jnp.float32)
            conv_w.append(w)
            conv_b.append(jnp.zeros((CONV_HEAD_DIM,), jnp.float32))
            cin = CONV_HEAD_DIM
        self.conv_w = conv_w
        self.conv_b = conv_b

        input_size = CONV_HEAD_DIM * RESOLUTION ** 2
        # make_fc(use_gn=False): kaiming_uniform_(a=1) -> bound = sqrt(3/fan_in)
        bound = float(np.sqrt(3.0 / input_size))
        # fc weight stored in PyTorch flatten (NCHW) row order: row = c*H*W+h*W+w
        self.fc_w = jax.random.uniform(keys[-1], (input_size, MLP_HEAD_DIM),
                                       jnp.float32, -bound, bound)
        self.fc_b = jnp.zeros((MLP_HEAD_DIM,), jnp.float32)

        # ----- precompute fused-kernel weight forms (offline, zero runtime) ----
        # banded conv weights: (L, 3, W*C, W*C)
        self.conv_w_band = jnp.stack(
            [_band_conv_weight(w, RESOLUTION, DILATION) for w in conv_w])
        # bias tiled across W so it broadcasts over the lane-dense layout
        self.conv_b_lane = jnp.stack(
            [jnp.tile(b, RESOLUTION)[None, :] for b in conv_b])      # (L, 1, W*C)
        # fold the NCHW-flatten permutation of fc6 into its rows: (H, W*C, MLP)
        self.fc_w_hwc = (self.fc_w
                         .reshape(CONV_HEAD_DIM, RESOLUTION, RESOLUTION,
                                  MLP_HEAD_DIM)
                         .transpose(1, 2, 0, 3)
                         .reshape(RESOLUTION, RESOLUTION * CONV_HEAD_DIM,
                                  MLP_HEAD_DIM))
        self.fc_b2 = self.fc_b.reshape(1, MLP_HEAD_DIM)

    def __call__(self, features_nchw, rois, roi_batch_idx):
        # NCHW -> NHWC (channels on the lane axis)
        feat = jnp.transpose(features_nchw, (0, 2, 3, 1))
        x = roi_align(feat, rois, roi_batch_idx, RESOLUTION, POOLER_SCALE,
                      SAMPLING_RATIO)                       # (R, res, res, Cin)
        # fused: 4x(conv3x3+bias+ReLU) + fc6 + ReLU, one Pallas kernel
        return fused_xconv_fc_head(x, self.conv_w_band, self.conv_b_lane,
                                   self.fc_w_hwc, self.fc_b2,
                                   dilation=DILATION)


# -------------------------------- main ----------------------------------------
if __name__ == "__main__":
    key = jax.random.PRNGKey(0)
    k_feat, k_param = jax.random.split(key, 2)

    B, H, W = 2, 16, 16
    features = jax.random.normal(k_feat, (B, IN_CHANNELS, H, W), jnp.float32)

    # proposals: 3 boxes per image, (x1, y1, x2, y2) in image coords
    # (image is 1/POOLER_SCALE times the feature map -> 64 x 64)
    rois = jnp.array([
        [4.0, 4.0, 40.0, 40.0],
        [10.0, 8.0, 50.0, 60.0],
        [0.0, 0.0, 63.0, 63.0],
        [20.0, 20.0, 44.0, 52.0],
        [5.0, 30.0, 35.0, 62.0],
        [16.0, 0.0, 60.0, 28.0],
    ], jnp.float32)
    roi_batch_idx = jnp.array([0, 0, 0, 1, 1, 1], jnp.int32)

    model = FPNXconv1fcFeatureExtractorPallas(k_param)
    out = model(features, rois, roi_batch_idx)
    out = jax.block_until_ready(out)
    assert out.shape == (rois.shape[0], MLP_HEAD_DIM), out.shape
    assert bool(jnp.all(jnp.isfinite(out)))
    print("KERNEL_OK")
</pallas_src>

<mosaic_0001>
module attributes {stable_mosaic.version = 11 : i64} {
  func.func @fused_head_kernel(%arg0: i32, %arg1: memref<8x8x128xf32, #tpu.memory_space<vmem>>, %arg2: memref<4x3x128x128xf32, #tpu.memory_space<vmem>>, %arg3: memref<4x1x128xf32, #tpu.memory_space<vmem>>, %arg4: memref<8x128x32xf32, #tpu.memory_space<vmem>>, %arg5: memref<1x32xf32, #tpu.memory_space<vmem>>, %arg6: memref<8x32xf32, #tpu.memory_space<vmem>>, %arg7: memref<8x10x128xf32, #tpu.memory_space<vmem>>) attributes {dimension_semantics = [#tpu.dimension_semantics<parallel>], iteration_bounds = array<i64: 1>, scalar_prefetch = 0 : i64, scratch_operands = 1 : i64, tpu.core_type = #tpu.core_type<tc>, window_params = [{transform_indices = @transform_0, window_bounds = array<i64: 8, 8, 128>}, {pipeline_mode = #tpu.pipeline_mode<synchronous>, transform_indices = @transform_1, window_bounds = array<i64: 4, 3, 128, 128>}, {pipeline_mode = #tpu.pipeline_mode<synchronous>, transform_indices = @transform_2, window_bounds = array<i64: 4, 1, 128>}, {pipeline_mode = #tpu.pipeline_mode<synchronous>, transform_indices = @transform_3, window_bounds = array<i64: 8, 128, 32>}, {pipeline_mode = #tpu.pipeline_mode<synchronous>, transform_indices = @transform_4, window_bounds = array<i64: 1, 32>}, {transform_indices = @transform_5, window_bounds = array<i64: 8, 32>}]} {
    %cst = arith.constant 0.000000e+00 : f32
    %0 = vector.broadcast %cst : f32 to vector<8x1x128xf32>
    %c0 = arith.constant 0 : index
    %c0_0 = arith.constant 0 : index
    %c0_1 = arith.constant 0 : index
    %1 = vector.load %arg7[%c0, %c0_0, %c0_1] : memref<8x10x128xf32, #tpu.memory_space<vmem>>, vector<8x1x128xf32>
    tpu.vector_store %arg7[%c0, %c0_0, %c0_1], %0 {strides = array<i32>} : memref<8x10x128xf32, #tpu.memory_space<vmem>>, vector<8x1x128xf32>,
    %c0_2 = arith.constant 0 : index
    %c9 = arith.constant 9 : index
    %c0_3 = arith.constant 0 : index
    %2 = vector.load %arg7[%c0_2, %c9, %c0_3] : memref<8x10x128xf32, #tpu.memory_space<vmem>>, vector<8x1x128xf32>
    tpu.vector_store %arg7[%c0_2, %c9, %c0_3], %0 {strides = array<i32>} : memref<8x10x128xf32, #tpu.memory_space<vmem>>, vector<8x1x128xf32>,
    %c0_4 = arith.constant 0 : index
    %c0_5 = arith.constant 0 : index
    %c0_6 = arith.constant 0 : index
    %3 = vector.load %arg1[%c0_4, %c0_5, %c0_6] : memref<8x8x128xf32, #tpu.memory_space<vmem>>, vector<8x8x128xf32>
    %c0_7 = arith.constant 0 : index
    %c1 = arith.constant 1 : index
    %c0_8 = arith.constant 0 : index
    %4 = vector.load %arg7[%c0_7, %c1, %c0_8] : memref<8x10x128xf32, #tpu.memory_space<vmem>>, vector<8x8x128xf32>
    tpu.vector_store %arg7[%c0_7, %c1, %c0_8], %3 {strides = array<i32>} : memref<8x10x128xf32, #tpu.memory_space<vmem>>, vector<8x8x128xf32>,
    %cst_9 = arith.constant 0.000000e+00 : f32
    %5 = vector.broadcast %cst_9 : f32 to vector<64x128xf32>
    %c0_10 = arith.constant 0 : index
    %c0_11 = arith.constant 0 : index
    %c0_12 = arith.constant 0 : index
    %6 = vector.load %arg7[%c0_10, %c0_11, %c0_12] : memref<8x10x128xf32, #tpu.memory_space<vmem>>, vector<8x8x128xf32>
    %7 = vector.shape_cast %6 : vector<8x8x128xf32> to vector<64x128xf32>
    %c0_13 = arith.constant 0 : index
    %c0_14 = arith.constant 0 : index
    %c0_15 = arith.constant 0 : index
    %c0_16 = arith.constant 0 : index
    %8 = vector.load %arg2[%c0_13, %c0_14, %c0_15, %c0_16] : memref<4x3x128x128xf32, #tpu.memory_space<vmem>>, vector<1x1x128x128xf32>
    %9 = vector.shape_cast %8 : vector<1x1x128x128xf32> to vector<128x128xf32>
    %cst_17 = arith.constant dense<0.000000e+00> : vector<64x128xf32>
    %10 = tpu.matmul %7, %9, %cst_17 {dimension_numbers = #tpu.dot_dimension_numbers<[1], [0], [0], [1], [0, 0, 1, 1], [], []>} : vector<64x128xf32>, vector<128x128xf32>, vector<64x128xf32> -> vector<64x128xf32>
    %11 = arith.addf %5, %10 : vector<64x128xf32>
    %c0_18 = arith.constant 0 : index
    %c1_19 = arith.constant 1 : index
    %c0_20 = arith.constant 0 : index
    %12 = vector.load %arg7[%c0_18, %c1_19, %c0_20] : memref<8x10x128xf32, #tpu.memory_space<vmem>>, vector<8x8x128xf32>
    %13 = vector.shape_cast %12 : vector<8x8x128xf32> to vector<64x128xf32>
    %c0_21 = arith.constant 0 : index
    %c1_22 = arith.constant 1 : index
    %c0_23 = arith.constant 0 : index
    %c0_24 = arith.constant 0 : index
    %14 = vector.load %arg2[%c0_21, %c1_22, %c0_23, %c0_24] : memref<4x3x128x128xf32, #tpu.memory_space<vmem>>, vector<1x1x128x128xf32>
    %15 = vector.shape_cast %14 : vector<1x1x128x128xf32> to vector<128x128xf32>
    %cst_25 = arith.constant dense<0.000000e+00> : vector<64x128xf32>
    %16 = tpu.matmul %13, %15, %cst_25 {dimension_numbers = #tpu.dot_dimension_numbers<[1], [0], [0], [1], [0, 0, 1, 1], [], []>} : vector<64x128xf32>, vector<128x128xf32>, vector<64x128xf32> -> vector<64x128xf32>
    %17 = arith.addf %11, %16 : vector<64x128xf32>
    %c0_26 = arith.constant 0 : index
    %c2 = arith.constant 2 : index
    %c0_27 = arith.constant 0 : index
    %18 = vector.load %arg7[%c0_26, %c2, %c0_27] : memref<8x10x128xf32, #tpu.memory_space<vmem>>, vector<8x8x128xf32>
    %19 = vector.shape_cast %18 : vector<8x8x128xf32> to vector<64x128xf32>
    %c0_28 = arith.constant 0 : index
    %c2_29 = arith.constant 2 : index
    %c0_30 = arith.constant 0 : index
    %c0_31 = arith.constant 0 : index
    %20 = vector.load %arg2[%c0_28, %c2_29, %c0_30, %c0_31] : memref<4x3x128x128xf32, #tpu.memory_space<vmem>>, vector<1x1x128x128xf32>
    %21 = vector.shape_cast %20 : vector<1x1x128x128xf32> to vector<128x128xf32>
    %cst_32 = arith.constant dense<0.000000e+00> : vector<64x128xf32>
    %22 = tpu.matmul %19, %21, %cst_32 {dimension_numbers = #tpu.dot_dimension_numbers<[1], [0], [0], [1], [0, 0, 1, 1], [], []>} : vector<64x128xf32>, vector<128x128xf32>, vector<64x128xf32> -> vector<64x128xf32>
    %23 = arith.addf %17, %22 : vector<64x128xf32>
    %c0_33 = arith.constant 0 : index
    %c0_34 = arith.constant 0 : index
    %c0_35 = arith.constant 0 : index
    %24 = vector.load %arg3[%c0_33, %c0_34, %c0_35] : memref<4x1x128xf32, #tpu.memory_space<vmem>>, vector<1x1x128xf32>
    %25 = vector.shape_cast %24 : vector<1x1x128xf32> to vector<1x128xf32>
    %26 = vector.broadcast %25 : vector<1x128xf32> to vector<64x128xf32>
    %27 = arith.addf %23, %26 : vector<64x128xf32>
    %cst_36 = arith.constant 0.000000e+00 : f32
    %28 = vector.broadcast %cst_36 : f32 to vector<64x128xf32>
    %29 = arith.maximumf %27, %28 : vector<64x128xf32>
    %30 = vector.shape_cast %29 : vector<64x128xf32> to vector<8x8x128xf32>
    %c0_37 = arith.constant 0 : index
    %c1_38 = arith.constant 1 : index
    %c0_39 = arith.constant 0 : index
    %31 = vector.load %arg7[%c0_37, %c1_38, %c0_39] : memref<8x10x128xf32, #tpu.memory_space<vmem>>, vector<8x8x128xf32>
    tpu.vector_store %arg7[%c0_37, %c1_38, %c0_39], %30 {strides = array<i32>} : memref<8x10x128xf32, #tpu.memory_space<vmem>>, vector<8x8x128xf32>,
    %cst_40 = arith.constant 0.000000e+00 : f32
    %32 = vector.broadcast %cst_40 : f32 to vector<64x128xf32>
    %c0_41 = arith.constant 0 : index
    %c0_42 = arith.constant 0 : index
    %c0_43 = arith.constant 0 : index
    %33 = vector.load %arg7[%c0_41, %c0_42, %c0_43] : memref<8x10x128xf32, #tpu.memory_space<vmem>>, vector<8x8x128xf32>
    %34 = vector.shape_cast %33 : vector<8x8x128xf32> to vector<64x128xf32>
    %c1_44 = arith.constant 1 : index
    %c0_45 = arith.constant 0 : index
    %c0_46 = arith.constant 0 : index
    %c0_47 = arith.constant 0 : index
    %35 = vector.load %arg2[%c1_44, %c0_45, %c0_46, %c0_47] : memref<4x3x128x128xf32, #tpu.memory_space<vmem>>, vector<1x1x128x128xf32>
    %36 = vector.shape_cast %35 : vector<1x1x128x128xf32> to vector<128x128xf32>
    %cst_48 = arith.constant dense<0.000000e+00> : vector<64x128xf32>
    %37 = tpu.matmul %34, %36, %cst_48 {dimension_numbers = #tpu.dot_dimension_numbers<[1], [0], [0], [1], [0, 0, 1, 1], [], []>} : vector<64x128xf32>, vector<128x128xf32>, vector<64x128xf32> -> vector<64x128xf32>
    %38 = arith.addf %32, %37 : vector<64x128xf32>
    %c0_49 = arith.constant 0 : index
    %c1_50 = arith.constant 1 : index
    %c0_51 = arith.constant 0 : index
    %39 = vector.load %arg7[%c0_49, %c1_50, %c0_51] : memref<8x10x128xf32, #tpu.memory_space<vmem>>, vector<8x8x128xf32>
    %40 = vector.shape_cast %39 : vector<8x8x128xf32> to vector<64x128xf32>
    %c1_52 = arith.constant 1 : index
    %c1_53 = arith.constant 1 : index
    %c0_54 = arith.constant 0 : index
    %c0_55 = arith.constant 0 : index
    %41 = vector.load %arg2[%c1_52, %c1_53, %c0_54, %c0_55] : memref<4x3x128x128xf32, #tpu.memory_space<vmem>>, vector<1x1x128x128xf32>
    %42 = vector.shape_cast %41 : vector<1x1x128x128xf32> to vector<128x128xf32>
    %cst_56 = arith.constant dense<0.000000e+00> : vector<64x128xf32>
    %43 = tpu.matmul %40, %42, %cst_56 {dimension_numbers = #tpu.dot_dimension_numbers<[1], [0], [0], [1], [0, 0, 1, 1], [], []>} : vector<64x128xf32>, vector<128x128xf32>, vector<64x128xf32> -> vector<64x128xf32>
    %44 = arith.addf %38, %43 : vector<64x128xf32>
    %c0_57 = arith.constant 0 : index
    %c2_58 = arith.constant 2 : index
    %c0_59 = arith.constant 0 : index
    %45 = vector.load %arg7[%c0_57, %c2_58, %c0_59] : memref<8x10x128xf32, #tpu.memory_space<vmem>>, vector<8x8x128xf32>
    %46 = vector.shape_cast %45 : vector<8x8x128xf32> to vector<64x128xf32>
    %c1_60 = arith.constant 1 : index
    %c2_61 = arith.constant 2 : index
    %c0_62 = arith.constant 0 : index
    %c0_63 = arith.constant 0 : index
    %47 = vector.load %arg2[%c1_60, %c2_61, %c0_62, %c0_63] : memref<4x3x128x128xf32, #tpu.memory_space<vmem>>, vector<1x1x128x128xf32>
    %48 = vector.shape_cast %47 : vector<1x1x128x128xf32> to vector<128x128xf32>
    %cst_64 = arith.constant dense<0.000000e+00> : vector<64x128xf32>
    %49 = tpu.matmul %46, %48, %cst_64 {dimension_numbers = #tpu.dot_dimension_numbers<[1], [0], [0], [1], [0, 0, 1, 1], [], []>} : vector<64x128xf32>, vector<128x128xf32>, vector<64x128xf32> -> vector<64x128xf32>
    %50 = arith.addf %44, %49 : vector<64x128xf32>
    %c1_65 = arith.constant 1 : index
    %c0_66 = arith.constant 0 : index
    %c0_67 = arith.constant 0 : index
    %51 = vector.load %arg3[%c1_65, %c0_66, %c0_67] : memref<4x1x128xf32, #tpu.memory_space<vmem>>, vector<1x1x128xf32>
    %52 = vector.shape_cast %51 : vector<1x1x128xf32> to vector<1x128xf32>
    %53 = vector.broadcast %52 : vector<1x128xf32> to vector<64x128xf32>
    %54 = arith.addf %50, %53 : vector<64x128xf32>
    %cst_68 = arith.constant 0.000000e+00 : f32
    %55 = vector.broadcast %cst_68 : f32 to vector<64x128xf32>
    %56 = arith.maximumf %54, %55 : vector<64x128xf32>
    %57 = vector.shape_cast %56 : vector<64x128xf32> to vector<8x8x128xf32>
    %c0_69 = arith.constant 0 : index
    %c1_70 = arith.constant 1 : index
    %c0_71 = arith.constant 0 : index
    %58 = vector.load %arg7[%c0_69, %c1_70, %c0_71] : memref<8x10x128xf32, #tpu.memory_space<vmem>>, vector<8x8x128xf32>
    tpu.vector_store %arg7[%c0_69, %c1_70, %c0_71], %57 {strides = array<i32>} : memref<8x10x128xf32, #tpu.memory_space<vmem>>, vector<8x8x128xf32>,
    %cst_72 = arith.constant 0.000000e+00 : f32
    %59 = vector.broadcast %cst_72 : f32 to vector<64x128xf32>
    %c0_73 = arith.constant 0 : index
    %c0_74 = arith.constant 0 : index
    %c0_75 = arith.constant 0 : index
    %60 = vector.load %arg7[%c0_73, %c0_74, %c0_75] : memref<8x10x128xf32, #tpu.memory_space<vmem>>, vector<8x8x128xf32>
    %61 = vector.shape_cast %60 : vector<8x8x128xf32> to vector<64x128xf32>
    %c2_76 = arith.constant 2 : index
    %c0_77 = arith.constant 0 : index
    %c0_78 = arith.constant 0 : index
    %c0_79 = arith.constant 0 : index
    %62 = vector.load %arg2[%c2_76, %c0_77, %c0_78, %c0_79] : memref<4x3x128x128xf32, #tpu.memory_space<vmem>>, vector<1x1x128x128xf32>
    %63 = vector.shape_cast %62 : vector<1x1x128x128xf32> to vector<128x128xf32>
    %cst_80 = arith.constant dense<0.000000e+00> : vector<64x128xf32>
    %64 = tpu.matmul %61, %63, %cst_80 {dimension_numbers = #tpu.dot_dimension_numbers<[1], [0], [0], [1], [0, 0, 1, 1], [], []>} : vector<64x128xf32>, vector<128x128xf32>, vector<64x128xf32> -> vector<64x128xf32>
    %65 = arith.addf %59, %64 : vector<64x128xf32>
    %c0_81 = arith.constant 0 : index
    %c1_82 = arith.constant 1 : index
    %c0_83 = arith.constant 0 : index
    %66 = vector.load %arg7[%c0_81, %c1_82, %c0_83] : memref<8x10x128xf32, #tpu.memory_space<vmem>>, vector<8x8x128xf32>
    %67 = vector.shape_cast %66 : vector<8x8x128xf32> to vector<64x128xf32>
    %c2_84 = arith.constant 2 : index
    %c1_85 = arith.constant 1 : index
    %c0_86 = arith.constant 0 : index
    %c0_87 = arith.constant 0 : index
    %68 = vector.load %arg2[%c2_84, %c1_85, %c0_86, %c0_87] : memref<4x3x128x128xf32, #tpu.memory_space<vmem>>, vector<1x1x128x128xf32>
    %69 = vector.shape_cast %68 : vector<1x1x128x128xf32> to vector<128x128xf32>
    %cst_88 = arith.constant dense<0.000000e+00> : vector<64x128xf32>
    %70 = tpu.matmul %67, %69, %cst_88 {dimension_numbers = #tpu.dot_dimension_numbers<[1], [0], [0], [1], [0, 0, 1, 1], [], []>} : vector<64x128xf32>, vector<128x128xf32>, vector<64x128xf32> -> vector<64x128xf32>
    %71 = arith.addf %65, %70 : vector<64x128xf32>
    %c0_89 = arith.constant 0 : index
    %c2_90 = arith.constant 2 : index
    %c0_91 = arith.constant 0 : index
    %72 = vector.load %arg7[%c0_89, %c2_90, %c0_91] : memref<8x10x128xf32, #tpu.memory_space<vmem>>, vector<8x8x128xf32>
    %73 = vector.shape_cast %72 : vector<8x8x128xf32> to vector<64x128xf32>
    %c2_92 = arith.constant 2 : index
    %c2_93 = arith.constant 2 : index
    %c0_94 = arith.constant 0 : index
    %c0_95 = arith.constant 0 : index
    %74 = vector.load %arg2[%c2_92, %c2_93, %c0_94, %c0_95] : memref<4x3x128x128xf32, #tpu.memory_space<vmem>>, vector<1x1x128x128xf32>
    %75 = vector.shape_cast %74 : vector<1x1x128x128xf32> to vector<128x128xf32>
    %cst_96 = arith.constant dense<0.000000e+00> : vector<64x128xf32>
    %76 = tpu.matmul %73, %75, %cst_96 {dimension_numbers = #tpu.dot_dimension_numbers<[1], [0], [0], [1], [0, 0, 1, 1], [], []>} : vector<64x128xf32>, vector<128x128xf32>, vector<64x128xf32> -> vector<64x128xf32>
    %77 = arith.addf %71, %76 : vector<64x128xf32>
    %c2_97 = arith.constant 2 : index
    %c0_98 = arith.constant 0 : index
    %c0_99 = arith.constant 0 : index
    %78 = vector.load %arg3[%c2_97, %c0_98, %c0_99] : memref<4x1x128xf32, #tpu.memory_space<vmem>>, vector<1x1x128xf32>
    %79 = vector.shape_cast %78 : vector<1x1x128xf32> to vector<1x128xf32>
    %80 = vector.broadcast %79 : vector<1x128xf32> to vector<64x128xf32>
    %81 = arith.addf %77, %80 : vector<64x128xf32>
    %cst_100 = arith.constant 0.000000e+00 : f32
    %82 = vector.broadcast %cst_100 : f32 to vector<64x128xf32>
    %83 = arith.maximumf %81, %82 : vector<64x128xf32>
    %84 = vector.shape_cast %83 : vector<64x128xf32> to vector<8x8x128xf32>
    %c0_101 = arith.constant 0 : index
    %c1_102 = arith.constant 1 : index
    %c0_103 = arith.constant 0 : index
    %85 = vector.load %arg7[%c0_101, %c1_102, %c0_103] : memref<8x10x128xf32, #tpu.memory_space<vmem>>, vector<8x8x128xf32>
    tpu.vector_store %arg7[%c0_101, %c1_102, %c0_103], %84 {strides = array<i32>} : memref<8x10x128xf32, #tpu.memory_space<vmem>>, vector<8x8x128xf32>,
    %cst_104 = arith.constant 0.000000e+00 : f32
    %86 = vector.broadcast %cst_104 : f32 to vector<64x128xf32>
    %c0_105 = arith.constant 0 : index
    %c0_106 = arith.constant 0 : index
    %c0_107 = arith.constant 0 : index
    %87 = vector.load %arg7[%c0_105, %c0_106, %c0_107] : memref<8x10x128xf32, #tpu.memory_space<vmem>>, vector<8x8x128xf32>
    %88 = vector.shape_cast %87 : vector<8x8x128xf32> to vector<64x128xf32>
    %c3 = arith.constant 3 : index
    %c0_108 = arith.constant 0 : index
    %c0_109 = arith.constant 0 : index
    %c0_110 = arith.constant 0 : index
    %89 = vector.load %arg2[%c3, %c0_108, %c0_109, %c0_110] : memref<4x3x128x128xf32, #tpu.memory_space<vmem>>, vector<1x1x128x128xf32>
    %90 = vector.shape_cast %89 : vector<1x1x128x128xf32> to vector<128x128xf32>
    %cst_111 = arith.constant dense<0.000000e+00> : vector<64x128xf32>
    %91 = tpu.matmul %88, %90, %cst_111 {dimension_numbers = #tpu.dot_dimension_numbers<[1], [0], [0], [1], [0, 0, 1, 1], [], []>} : vector<64x128xf32>, vector<128x128xf32>, vector<64x128xf32> -> vector<64x128xf32>
    %92 = arith.addf %86, %91 : vector<64x128xf32>
    %c0_112 = arith.constant 0 : index
    %c1_113 = arith.constant 1 : index
    %c0_114 = arith.constant 0 : index
    %93 = vector.load %arg7[%c0_112, %c1_113, %c0_114] : memref<8x10x128xf32, #tpu.memory_space<vmem>>, vector<8x8x128xf32>
    %94 = vector.shape_cast %93 : vector<8x8x128xf32> to vector<64x128xf32>
    %c3_115 = arith.constant 3 : index
    %c1_116 = arith.constant 1 : index
    %c0_117 = arith.constant 0 : index
    %c0_118 = arith.constant 0 : index
    %95 = vector.load %arg2[%c3_115, %c1_116, %c0_117, %c0_118] : memref<4x3x128x128xf32, #tpu.memory_space<vmem>>, vector<1x1x128x128xf32>
    %96 = vector.shape_cast %95 : vector<1x1x128x128xf32> to vector<128x128xf32>
    %cst_119 = arith.constant dense<0.000000e+00> : vector<64x128xf32>
    %97 = tpu.matmul %94, %96, %cst_119 {dimension_numbers = #tpu.dot_dimension_numbers<[1], [0], [0], [1], [0, 0, 1, 1], [], []>} : vector<64x128xf32>, vector<128x128xf32>, vector<64x128xf32> -> vector<64x128xf32>
    %98 = arith.addf %92, %97 : vector<64x128xf32>
    %c0_120 = arith.constant 0 : index
    %c2_121 = arith.constant 2 : index
    %c0_122 = arith.constant 0 : index
    %99 = vector.load %arg7[%c0_120, %c2_121, %c0_122] : memref<8x10x128xf32, #tpu.memory_space<vmem>>, vector<8x8x128xf32>
    %100 = vector.shape_cast %99 : vector<8x8x128xf32> to vector<64x128xf32>
    %c3_123 = arith.constant 3 : index
    %c2_124 = arith.constant 2 : index
    %c0_125 = arith.constant 0 : index
    %c0_126 = arith.constant 0 : index
    %101 = vector.load %arg2[%c3_123, %c2_124, %c0_125, %c0_126] : memref<4x3x128x128xf32, #tpu.memory_space<vmem>>, vector<1x1x128x128xf32>
    %102 = vector.shape_cast %101 : vector<1x1x128x128xf32> to vector<128x128xf32>
    %cst_127 = arith.constant dense<0.000000e+00> : vector<64x128xf32>
    %103 = tpu.matmul %100, %102, %cst_127 {dimension_numbers = #tpu.dot_dimension_numbers<[1], [0], [0], [1], [0, 0, 1, 1], [], []>} : vector<64x128xf32>, vector<128x128xf32>, vector<64x128xf32> -> vector<64x128xf32>
    %104 = arith.addf %98, %103 : vector<64x128xf32>
    %c3_128 = arith.constant 3 : index
    %c0_129 = arith.constant 0 : index
    %c0_130 = arith.constant 0 : index
    %105 = vector.load %arg3[%c3_128, %c0_129, %c0_130] : memref<4x1x128xf32, #tpu.memory_space<vmem>>, vector<1x1x128xf32>
    %106 = vector.shape_cast %105 : vector<1x1x128xf32> to vector<1x128xf32>
    %107 = vector.broadcast %106 : vector<1x128xf32> to vector<64x128xf32>
    %108 = arith.addf %104, %107 : vector<64x128xf32>
    %cst_131 = arith.constant 0.000000e+00 : f32
    %109 = vector.broadcast %cst_131 : f32 to vector<64x128xf32>
    %110 = arith.maximumf %108, %109 : vector<64x128xf32>
    %111 = vector.shape_cast %110 : vector<64x128xf32> to vector<8x8x128xf32>
    %c0_132 = arith.constant 0 : index
    %c1_133 = arith.constant 1 : index
    %c0_134 = arith.constant 0 : index
    %112 = vector.load %arg7[%c0_132, %c1_133, %c0_134] : memref<8x10x128xf32, #tpu.memory_space<vmem>>, vector<8x8x128xf32>
    tpu.vector_store %arg7[%c0_132, %c1_133, %c0_134], %111 {strides = array<i32>} : memref<8x10x128xf32, #tpu.memory_space<vmem>>, vector<8x8x128xf32>,
    %cst_135 = arith.constant 0.000000e+00 : f32
    %113 = vector.broadcast %cst_135 : f32 to vector<8x32xf32>
    %c0_136 = arith.constant 0 : index
    %c1_137 = arith.constant 1 : index
    %c0_138 = arith.constant 0 : index
    %114 = vector.load %arg7[%c0_136, %c1_137, %c0_138] : memref<8x10x128xf32, #tpu.memory_space<vmem>>, vector<8x1x128xf32>
    %115 = vector.shape_cast %114 : vector<8x1x128xf32> to vector<8x128xf32>
    %c0_139 = arith.constant 0 : index
    %c0_140 = arith.constant 0 : index
    %c0_141 = arith.constant 0 : index
    %116 = vector.load %arg4[%c0_139, %c0_140, %c0_141] : memref<8x128x32xf32, #tpu.memory_space<vmem>>, vector<1x128x32xf32>
    %117 = vector.shape_cast %116 : vector<1x128x32xf32> to vector<128x32xf32>
    %cst_142 = arith.constant dense<0.000000e+00> : vector<8x32xf32>
    %118 = tpu.matmul %115, %117, %cst_142 {dimension_numbers = #tpu.dot_dimension_numbers<[1], [0], [0], [1], [0, 0, 1, 1], [], []>} : vector<8x128xf32>, vector<128x32xf32>, vector<8x32xf32> -> vector<8x32xf32>
    %119 = arith.addf %113, %118 : vector<8x32xf32>
    %c0_143 = arith.constant 0 : index
    %c2_144 = arith.constant 2 : index
    %c0_145 = arith.constant 0 : index
    %120 = vector.load %arg7[%c0_143, %c2_144, %c0_145] : memref<8x10x128xf32, #tpu.memory_space<vmem>>, vector<8x1x128xf32>
    %121 = vector.shape_cast %120 : vector<8x1x128xf32> to vector<8x128xf32>
    %c1_146 = arith.constant 1 : index
    %c0_147 = arith.constant 0 : index
    %c0_148 = arith.constant 0 : index
    %122 = vector.load %arg4[%c1_146, %c0_147, %c0_148] : memref<8x128x32xf32, #tpu.memory_space<vmem>>, vector<1x128x32xf32>
    %123 = vector.shape_cast %122 : vector<1x128x32xf32> to vector<128x32xf32>
    %cst_149 = arith.constant dense<0.000000e+00> : vector<8x32xf32>
    %124 = tpu.matmul %121, %123, %cst_149 {dimension_numbers = #tpu.dot_dimension_numbers<[1], [0], [0], [1], [0, 0, 1, 1], [], []>} : vector<8x128xf32>, vector<128x32xf32>, vector<8x32xf32> -> vector<8x32xf32>
    %125 = arith.addf %119, %124 : vector<8x32xf32>
    %c0_150 = arith.constant 0 : index
    %c3_151 = arith.constant 3 : index
    %c0_152 = arith.constant 0 : index
    %126 = vector.load %arg7[%c0_150, %c3_151, %c0_152] : memref<8x10x128xf32, #tpu.memory_space<vmem>>, vector<8x1x128xf32>
    %127 = vector.shape_cast %126 : vector<8x1x128xf32> to vector<8x128xf32>
    %c2_153 = arith.constant 2 : index
    %c0_154 = arith.constant 0 : index
    %c0_155 = arith.constant 0 : index
    %128 = vector.load %arg4[%c2_153, %c0_154, %c0_155] : memref<8x128x32xf32, #tpu.memory_space<vmem>>, vector<1x128x32xf32>
    %129 = vector.shape_cast %128 : vector<1x128x32xf32> to vector<128x32xf32>
    %cst_156 = arith.constant dense<0.000000e+00> : vector<8x32xf32>
    %130 = tpu.matmul %127, %129, %cst_156 {dimension_numbers = #tpu.dot_dimension_numbers<[1], [0], [0], [1], [0, 0, 1, 1], [], []>} : vector<8x128xf32>, vector<128x32xf32>, vector<8x32xf32> -> vector<8x32xf32>
    %131 = arith.addf %125, %130 : vector<8x32xf32>
    %c0_157 = arith.constant 0 : index
    %c4 = arith.constant 4 : index
    %c0_158 = arith.constant 0 : index
    %132 = vector.load %arg7[%c0_157, %c4, %c0_158] : memref<8x10x128xf32, #tpu.memory_space<vmem>>, vector<8x1x128xf32>
    %133 = vector.shape_cast %132 : vector<8x1x128xf32> to vector<8x128xf32>
    %c3_159 = arith.constant 3 : index
    %c0_160 = arith.constant 0 : index
    %c0_161 = arith.constant 0 : index
    %134 = vector.load %arg4[%c3_159, %c0_160, %c0_161] : memref<8x128x32xf32, #tpu.memory_space<vmem>>, vector<1x128x32xf32>
    %135 = vector.shape_cast %134 : vector<1x128x32xf32> to vector<128x32xf32>
    %cst_162 = arith.constant dense<0.000000e+00> : vector<8x32xf32>
    %136 = tpu.matmul %133, %135, %cst_162 {dimension_numbers = #tpu.dot_dimension_numbers<[1], [0], [0], [1], [0, 0, 1, 1], [], []>} : vector<8x128xf32>, vector<128x32xf32>, vector<8x32xf32> -> vector<8x32xf32>
    %137 = arith.addf %131, %136 : vector<8x32xf32>
    %c0_163 = arith.constant 0 : index
    %c5 = arith.constant 5 : index
    %c0_164 = arith.constant 0 : index
    %138 = vector.load %arg7[%c0_163, %c5, %c0_164] : memref<8x10x128xf32, #tpu.memory_space<vmem>>, vector<8x1x128xf32>
    %139 = vector.shape_cast %138 : vector<8x1x128xf32> to vector<8x128xf32>
    %c4_165 = arith.constant 4 : index
    %c0_166 = arith.constant 0 : index
    %c0_167 = arith.constant 0 : index
    %140 = vector.load %arg4[%c4_165, %c0_166, %c0_167] : memref<8x128x32xf32, #tpu.memory_space<vmem>>, vector<1x128x32xf32>
    %141 = vector.shape_cast %140 : vector<1x128x32xf32> to vector<128x32xf32>
    %cst_168 = arith.constant dense<0.000000e+00> : vector<8x32xf32>
    %142 = tpu.matmul %139, %141, %cst_168 {dimension_numbers = #tpu.dot_dimension_numbers<[1], [0], [0], [1], [0, 0, 1, 1], [], []>} : vector<8x128xf32>, vector<128x32xf32>, vector<8x32xf32> -> vector<8x32xf32>
    %143 = arith.addf %137, %142 : vector<8x32xf32>
    %c0_169 = arith.constant 0 : index
    %c6 = arith.constant 6 : index
    %c0_170 = arith.constant 0 : index
    %144 = vector.load %arg7[%c0_169, %c6, %c0_170] : memref<8x10x128xf32, #tpu.memory_space<vmem>>, vector<8x1x128xf32>
    %145 = vector.shape_cast %144 : vector<8x1x128xf32> to vector<8x128xf32>
    %c5_171 = arith.constant 5 : index
    %c0_172 = arith.constant 0 : index
    %c0_173 = arith.constant 0 : index
    %146 = vector.load %arg4[%c5_171, %c0_172, %c0_173] : memref<8x128x32xf32, #tpu.memory_space<vmem>>, vector<1x128x32xf32>
    %147 = vector.shape_cast %146 : vector<1x128x32xf32> to vector<128x32xf32>
    %cst_174 = arith.constant dense<0.000000e+00> : vector<8x32xf32>
    %148 = tpu.matmul %145, %147, %cst_174 {dimension_numbers = #tpu.dot_dimension_numbers<[1], [0], [0], [1], [0, 0, 1, 1], [], []>} : vector<8x128xf32>, vector<128x32xf32>, vector<8x32xf32> -> vector<8x32xf32>
    %149 = arith.addf %143, %148 : vector<8x32xf32>
    %c0_175 = arith.constant 0 : index
    %c7 = arith.constant 7 : index
    %c0_176 = arith.constant 0 : index
    %150 = vector.load %arg7[%c0_175, %c7, %c0_176] : memref<8x10x128xf32, #tpu.memory_space<vmem>>, vector<8x1x128xf32>
    %151 = vector.shape_cast %150 : vector<8x1x128xf32> to vector<8x128xf32>
    %c6_177 = arith.constant 6 : index
    %c0_178 = arith.constant 0 : index
    %c0_179 = arith.constant 0 : index
    %152 = vector.load %arg4[%c6_177, %c0_178, %c0_179] : memref<8x128x32xf32, #tpu.memory_space<vmem>>, vector<1x128x32xf32>
    %153 = vector.shape_cast %152 : vector<1x128x32xf32> to vector<128x32xf32>
    %cst_180 = arith.constant dense<0.000000e+00> : vector<8x32xf32>
    %154 = tpu.matmul %151, %153, %cst_180 {dimension_numbers = #tpu.dot_dimension_numbers<[1], [0], [0], [1], [0, 0, 1, 1], [], []>} : vector<8x128xf32>, vector<128x32xf32>, vector<8x32xf32> -> vector<8x32xf32>
    %155 = arith.addf %149, %154 : vector<8x32xf32>
    %c0_181 = arith.constant 0 : index
    %c8 = arith.constant 8 : index
    %c0_182 = arith.constant 0 : index
    %156 = vector.load %arg7[%c0_181, %c8, %c0_182] : memref<8x10x128xf32, #tpu.memory_space<vmem>>, vector<8x1x128xf32>
    %157 = vector.shape_cast %156 : vector<8x1x128xf32> to vector<8x128xf32>
    %c7_183 = arith.constant 7 : index
    %c0_184 = arith.constant 0 : index
    %c0_185 = arith.constant 0 : index
    %158 = vector.load %arg4[%c7_183, %c0_184, %c0_185] : memref<8x128x32xf32, #tpu.memory_space<vmem>>, vector<1x128x32xf32>
    %159 = vector.shape_cast %158 : vector<1x128x32xf32> to vector<128x32xf32>
    %cst_186 = arith.constant dense<0.000000e+00> : vector<8x32xf32>
    %160 = tpu.matmul %157, %159, %cst_186 {dimension_numbers = #tpu.dot_dimension_numbers<[1], [0], [0], [1], [0, 0, 1, 1], [], []>} : vector<8x128xf32>, vector<128x32xf32>, vector<8x32xf32> -> vector<8x32xf32>
    %161 = arith.addf %155, %160 : vector<8x32xf32>
    %c0_187 = arith.constant 0 : index
    %c0_188 = arith.constant 0 : index
    %162 = vector.load %arg5[%c0_187, %c0_188] : memref<1x32xf32, #tpu.memory_space<vmem>>, vector<1x32xf32>
    %163 = vector.broadcast %162 : vector<1x32xf32> to vector<8x32xf32>
    %164 = arith.addf %161, %163 : vector<8x32xf32>
    %cst_189 = arith.constant 0.000000e+00 : f32
    %165 = vector.broadcast %cst_189 : f32 to vector<8x32xf32>
    %166 = arith.maximumf %164, %165 : vector<8x32xf32>
    %c0_190 = arith.constant 0 : index
    %c0_191 = arith.constant 0 : index
    %167 = vector.load %arg6[%c0_190, %c0_191] : memref<8x32xf32, #tpu.memory_space<vmem>>, vector<8x32xf32>
    tpu.vector_store %arg6[%c0_190, %c0_191], %166 {strides = array<i32>} : memref<8x32xf32, #tpu.memory_space<vmem>>, vector<8x32xf32>,
    return
  }
  func.func @transform_0(%arg0: i32) -> (i32, i32, i32) {
    %c0_i32 = arith.constant 0 : i32
    %c0_i32_0 = arith.constant 0 : i32
    %c0_i32_1 = arith.constant 0 : i32
    return %arg0, %c0_i32, %c0_i32_0 : i32, i32, i32
  }
  func.func @transform_1(%arg0: i32) -> (i32, i32, i32, i32) {
    %c0_i32 = arith.constant 0 : i32
    %c0_i32_0 = arith.constant 0 : i32
    %c0_i32_1 = arith.constant 0 : i32
    %c0_i32_2 = arith.constant 0 : i32
    %c0_i32_3 = arith.constant 0 : i32
    return %c0_i32, %c0_i32_0, %c0_i32_1, %c0_i32_2 : i32, i32, i32, i32
  }
  func.func @transform_2(%arg0: i32) -> (i32, i32, i32) {
    %c0_i32 = arith.constant 0 : i32
    %c0_i32_0 = arith.constant 0 : i32
    %c0_i32_1 = arith.constant 0 : i32
    %c0_i32_2 = arith.constant 0 : i32
    return %c0_i32, %c0_i32_0, %c0_i32_1 : i32, i32, i32
  }
  func.func @transform_3(%arg0: i32) -> (i32, i32, i32) {
    %c0_i32 = arith.constant 0 : i32
    %c0_i32_0 = arith.constant 0 : i32
    %c0_i32_1 = arith.constant 0 : i32
    %c0_i32_2 = arith.constant 0 : i32
    return %c0_i32, %c0_i32_0, %c0_i32_1 : i32, i32, i32
  }
  func.func @transform_4(%arg0: i32) -> (i32, i32) {
    %c0_i32 = arith.constant 0 : i32
    %c0_i32_0 = arith.constant 0 : i32
    %c0_i32_1 = arith.constant 0 : i32
    return %c0_i32, %c0_i32_0 : i32, i32
  }
  func.func @transform_5(%arg0: i32) -> (i32, i32) {
    %c0_i32 = arith.constant 0 : i32
    %c0_i32_0 = arith.constant 0 : i32
    return %arg0, %c0_i32 : i32, i32
  }
}

</mosaic_0001>

<llo_original>
// kernel: tpu_custom_call.1
$region0: #{tpu_custom_call.1}
  #allocation0 [shape = 'u32[]', space=smem, size = 0x4, offset = 0x4, fixed_abs, tag = 'smem constant byte address 0x4 - core index']
  #allocation1 [shape = 'u32[144,128]{1,0:T(1,128)}', space=vmem, size = 0x12000, scoped, tag = 'internal scratch']
  #allocation2 [shape = 'f32[8,10,128]{2,1,0:T(8,128)}', space=vmem, size = 0x10000, scoped, tag = 'scratch operand']
  %s0 = inlined_call_operand.vmem [shape: f32[8,8,128], index: 0, kind: input, shape index: {}]
  %s1 = inlined_call_operand.hbm [shape: f32[4,3,128,128], index: 1, kind: input, shape index: {}]
  %s2 = inlined_call_operand.vmem [shape: f32[4,1,128], index: 2, kind: input, shape index: {}]
  %s3 = inlined_call_operand.vmem [shape: f32[8,128,32], index: 3, kind: input, shape index: {}]
  %s4 = inlined_call_operand.vmem [shape: f32[1,32], index: 4, kind: input, shape index: {}]
  %s5 = inlined_call_operand.hbm [shape: f32[8,32], index: 5, kind: output, shape index: {}]
  %s6 = sld [smem:[#allocation0]]
  $region34: #{tpu_custom_call.1} parent=0
    _
  %s8 = ssub.s32 1, %s6
  %s9 = scalar_select 0, %s8, %s6
  $region1: #{tpu_custom_call.1} parent=0
    #allocation3 [shape = 'u8[786432]{0}', space=vmem, size = 0xc0000, scoped, tag = 'input window, operand 1, single buffered']
    #allocation4 [shape = 's32[1]{0}', space=sflag, size = 0x4, scoped, tag = 'scoped memory for tpu_custom_call.1']
    #allocation5 [shape = 's32[1]{0}', space=sflag, size = 0x4, scoped, tag = 'scoped memory for tpu_custom_call.1']
    #allocation6 [shape = 'u8[4096]{0}', space=vmem, size = 0x1000, scoped, tag = 'output window, operand 0, single buffered']
    %10 = vsyncpa [#allocation4], 0
    %11 = vsyncpa [#allocation5], 0
    // Predicated region
    $region2: #{tpu_custom_call.1} parent=1 // pred_check
      _
    $region3: #{tpu_custom_call.1} parent=1 // pred_check_branch
      %13 = sbr.rel (0) target = $region5
    $region4: #{tpu_custom_call.1} parent=1 // pred_region
      _
    $region5: #{tpu_custom_call.1} parent=1 // pred_fallthru
      _
    // Predicated region
    $region6: #{tpu_custom_call.1} parent=1 // pred_check
      _
    $region7: #{tpu_custom_call.1} parent=1 // pred_check_branch
      %15 = sbr.rel (0) target = $region9
    $region8: #{tpu_custom_call.1} parent=1 // pred_region
      %s17 = ssub.s32 24576, 24576
      %18 = vsyncadd [#allocation4], %s17
      %s19 = sshll.u32 [#allocation3], 4
      %s20 = int_to_ptr.vmem [resolvable:$true] %s19
      %25 = dma.hbm_to_vmem [thread:$0]  %s1, 24576, %s20, [#allocation4], 128, 128, 8
    $region9: #{tpu_custom_call.1} parent=1 // pred_fallthru
      _
    // Predicated region
    $region10: #{tpu_custom_call.1} parent=1 // pred_check
      _
    $region11: #{tpu_custom_call.1} parent=1 // pred_check_branch
      %27 = sbr.rel (0) target = $region13
    $region12: #{tpu_custom_call.1} parent=1 // pred_region
      _
    $region13: #{tpu_custom_call.1} parent=1 // pred_fallthru
      _
    // Predicated region
    $region14: #{tpu_custom_call.1} parent=1 // pred_check
      _
    $region15: #{tpu_custom_call.1} parent=1 // pred_check_branch
      %29 = sbr.rel (0) target = $region17
    $region16: #{tpu_custom_call.1} parent=1 // pred_region
      _
    $region17: #{tpu_custom_call.1} parent=1 // pred_fallthru
      _
    // Predicated region
    $region18: #{tpu_custom_call.1} parent=1 // pred_check
      _
    $region19: #{tpu_custom_call.1} parent=1 // pred_check_branch
      %31 = sbr.rel (0) target = $region21
    $region20: #{tpu_custom_call.1} parent=1 // pred_region
      _
    $region21: #{tpu_custom_call.1} parent=1 // pred_fallthru
      _
    // Predicated region
    $region22: #{tpu_custom_call.1} parent=1 // pred_check
      _
    $region23: #{tpu_custom_call.1} parent=1 // pred_check_branch
      %33 = sbr.rel (0) target = $region25
    $region24: #{tpu_custom_call.1} parent=1 // pred_region
      %34 = dma.done [#allocation4], 24576
    $region25: #{tpu_custom_call.1} parent=1 // pred_fallthru
      _
    %35 = vst [vmem:[#allocation2] sm:$0x1] 0.0
    %36 = vst [vmem:[#allocation2 + $0x10] sm:$0x1] 0.0
    %37 = vst [vmem:[#allocation2 + $0x20] sm:$0x1] 0.0
    %38 = vst [vmem:[#allocation2 + $0x30] sm:$0x1] 0.0
    %39 = vst [vmem:[#allocation2 + $0x40] sm:$0x1] 0.0
    %40 = vst [vmem:[#allocation2 + $0x50] sm:$0x1] 0.0
    %41 = vst [vmem:[#allocation2 + $0x60] sm:$0x1] 0.0
    %42 = vst [vmem:[#allocation2 + $0x70] sm:$0x1] 0.0
    %43 = vst [vmem:[#allocation2 + $0x9] sm:$0x1] 0.0
    %44 = vst [vmem:[#allocation2 + $0x19] sm:$0x1] 0.0
    %45 = vst [vmem:[#allocation2 + $0x29] sm:$0x1] 0.0
    %46 = vst [vmem:[#allocation2 + $0x39] sm:$0x1] 0.0
    %47 = vst [vmem:[#allocation2 + $0x49] sm:$0x1] 0.0
    %48 = vst [vmem:[#allocation2 + $0x59] sm:$0x1] 0.0
    %49 = vst [vmem:[#allocation2 + $0x69] sm:$0x1] 0.0
    %50 = vst [vmem:[#allocation2 + $0x79] sm:$0x1] 0.0
    %v51 = vld [vmem:[%s0] sm:$0xff]
    %v52 = vld [vmem:[%s0 + $0x8] sm:$0xff]
    %v53 = vld [vmem:[%s0 + $0x10] sm:$0xff]
    %v54 = vld [vmem:[%s0 + $0x18] sm:$0xff]
    %v55 = vld [vmem:[%s0 + $0x20] sm:$0xff]
    %v56 = vld [vmem:[%s0 + $0x28] sm:$0xff]
    %v57 = vld [vmem:[%s0 + $0x30] sm:$0xff]
    %v58 = vld [vmem:[%s0 + $0x38] sm:$0xff]
    %59 = vst [vmem:[#allocation2 + $0x1] sm:$0xff] %v51
    %60 = vst [vmem:[#allocation2 + $0x11] sm:$0xff] %v52
    %61 = vst [vmem:[#allocation2 + $0x21] sm:$0xff] %v53
    %62 = vst [vmem:[#allocation2 + $0x31] sm:$0xff] %v54
    %63 = vst [vmem:[#allocation2 + $0x41] sm:$0xff] %v55
    %64 = vst [vmem:[#allocation2 + $0x51] sm:$0xff] %v56
    %65 = vst [vmem:[#allocation2 + $0x61] sm:$0xff] %v57
    %66 = vst [vmem:[#allocation2 + $0x71] sm:$0xff] %v58
    %v67 = vld [vmem:[#allocation2] sm:$0xff]
    %v68 = vld [vmem:[#allocation2 + $0x10] sm:$0xff]
    %v69 = vld [vmem:[#allocation2 + $0x20] sm:$0xff]
    %v70 = vld [vmem:[#allocation2 + $0x30] sm:$0xff]
    %v71 = vld [vmem:[#allocation2 + $0x40] sm:$0xff]
    %v72 = vld [vmem:[#allocation2 + $0x50] sm:$0xff]
    %v73 = vld [vmem:[#allocation2 + $0x60] sm:$0xff]
    %v74 = vld [vmem:[#allocation2 + $0x70] sm:$0xff]
    %v75 = vld [vmem:[#allocation3] sm:$0xff]
    %v76 = vld [vmem:[#allocation3 + $0x8] sm:$0xff]
    %v77 = vld [vmem:[#allocation3 + $0x10] sm:$0xff]
    %v78 = vld [vmem:[#allocation3 + $0x18] sm:$0xff]
    %v79 = vld [vmem:[#allocation3 + $0x20] sm:$0xff]
    %v80 = vld [vmem:[#allocation3 + $0x28] sm:$0xff]
    %v81 = vld [vmem:[#allocation3 + $0x30] sm:$0xff]
    %v82 = vld [vmem:[#allocation3 + $0x38] sm:$0xff]
    %v83 = vld [vmem:[#allocation3 + $0x40] sm:$0xff]
    %v84 = vld [vmem:[#allocation3 + $0x48] sm:$0xff]
    %v85 = vld [vmem:[#allocation3 + $0x50] sm:$0xff]
    %v86 = vld [vmem:[#allocation3 + $0x58] sm:$0xff]
    %v87 = vld [vmem:[#allocation3 + $0x60] sm:$0xff]
    %v88 = vld [vmem:[#allocation3 + $0x68] sm:$0xff]
    %v89 = vld [vmem:[#allocation3 + $0x70] sm:$0xff]
    %v90 = vld [vmem:[#allocation3 + $0x78] sm:$0xff]
    %v91 = vld [vmem:[#allocation2 + $0x1] sm:$0xff]
    %v92 = vld [vmem:[#allocation2 + $0x11] sm:$0xff]
    %v93 = vld [vmem:[#allocation2 + $0x21] sm:$0xff]
    %v94 = vld [vmem:[#allocation2 + $0x31] sm:$0xff]
    %v95 = vld [vmem:[#allocation2 + $0x41] sm:$0xff]
    %v96 = vld [vmem:[#allocation2 + $0x51] sm:$0xff]
    %v97 = vld [vmem:[#allocation2 + $0x61] sm:$0xff]
    %v98 = vld [vmem:[#allocation2 + $0x71] sm:$0xff]
    %s99 = scalar_lea.vmem [#allocation3], 128
    %v100 = vld [vmem:[%s99] sm:$0xff]
    %v101 = vld [vmem:[%s99 + $0x8] sm:$0xff]
    %v102 = vld [vmem:[%s99 + $0x10] sm:$0xff]
    %v103 = vld [vmem:[%s99 + $0x18] sm:$0xff]
    %v104 = vld [vmem:[%s99 + $0x20] sm:$0xff]
    %v105 = vld [vmem:[%s99 + $0x28] sm:$0xff]
    %v106 = vld [vmem:[%s99 + $0x30] sm:$0xff]
    %v107 = vld [vmem:[%s99 + $0x38] sm:$0xff]
    %v108 = vld [vmem:[%s99 + $0x40] sm:$0xff]
    %v109 = vld [vmem:[%s99 + $0x48] sm:$0xff]
    %v110 = vld [vmem:[%s99 + $0x50] sm:$0xff]
    %v111 = vld [vmem:[%s99 + $0x58] sm:$0xff]
    %v112 = vld [vmem:[%s99 + $0x60] sm:$0xff]
    %v113 = vld [vmem:[%s99 + $0x68] sm:$0xff]
    %v114 = vld [vmem:[%s99 + $0x70] sm:$0xff]
    %v115 = vld [vmem:[%s99 + $0x78] sm:$0xff]
    %116 = vmatprep.subr.mxu0 0.0
    %117 = vmatpush1.msra.mxu0 %v100
    %118 = vmatprep.subr.mxu0 0.0
    %119 = vmatpush1.msra.mxu0 %v101
    %120 = vmatprep.subr.mxu0 0.0
    %121 = vmatpush1.msra.mxu0 %v102
    %122 = vmatprep.subr.mxu0 0.0
    %123 = vmatpush1.msra.mxu0 %v103
    %124 = vmatprep.subr.mxu0 0.0
    %125 = vmatpush1.msra.mxu0 %v104
    %126 = vmatprep.subr.mxu0 0.0
    %127 = vmatpush1.msra.mxu0 %v105
    %128 = vmatprep.subr.mxu0 0.0
    %129 = vmatpush1.msra.mxu0 %v106
    %130 = vmatprep.subr.mxu0 0.0
    %131 = vmatpush1.msra.mxu0 %v107
    %132 = vmatprep.subr.mxu0 0.0
    %133 = vmatpush1.msra.mxu0 %v108
    %134 = vmatprep.subr.mxu0 0.0
    %135 = vmatpush1.msra.mxu0 %v109
    %136 = vmatprep.subr.mxu0 0.0
    %137 = vmatpush1.msra.mxu0 %v110
    %138 = vmatprep.subr.mxu0 0.0
    %139 = vmatpush1.msra.mxu0 %v111
    %140 = vmatprep.subr.mxu0 0.0
    %141 = vmatpush1.msra.mxu0 %v112
    %142 = vmatprep.subr.mxu0 0.0
    %143 = vmatpush1.msra.mxu0 %v113
    %144 = vmatprep.subr.mxu0 0.0
    %145 = vmatpush1.msra.mxu0 %v114
    %146 = vmatprep.subr.mxu0 0.0
    %147 = vmatpush1.msra.mxu0 %v115
    %148 = vmatprep.subr.mxu0 0.0
    %149 = vmatpush1.msra.mxu0 0.0
    %150 = vmatprep.subr.mxu0 0.0
    %151 = vmatpush1.msra.mxu0 0.0
    %152 = vmatprep.subr.mxu0 0.0
    %153 = vmatpush1.msra.mxu0 0.0
    %154 = vmatprep.subr.mxu0 0.0
    %155 = vmatpush1.msra.mxu0 0.0
    %156 = vmatprep.subr.mxu0 0.0
    %157 = vmatpush1.msra.mxu0 0.0
    %158 = vmatprep.subr.mxu0 0.0
    %159 = vmatpush1.msra.mxu0 0.0
    %160 = vmatprep.subr.mxu0 0.0
    %161 = vmatpush1.msra.mxu0 0.0
    %162 = vmatprep.subr.mxu0 0.0
    %163 = vmatpush1.msra.mxu0 0.0
    %164 = vmatprep.subr.mxu0 0.0
    %165 = vmatpush1.msra.mxu0 0.0
    %166 = vmatprep.subr.mxu0 0.0
    %167 = vmatpush1.msra.mxu0 0.0
    %168 = vmatprep.subr.mxu0 0.0
    %169 = vmatpush1.msra.mxu0 0.0
    %170 = vmatprep.subr.mxu0 0.0
    %171 = vmatpush1.msra.mxu0 0.0
    %172 = vmatprep.subr.mxu0 0.0
    %173 = vmatpush1.msra.mxu0 0.0
    %174 = vmatprep.subr.mxu0 0.0
    %175 = vmatpush1.msra.mxu0 0.0
    %176 = vmatprep.subr.mxu0 0.0
    %177 = vmatpush1.msra.mxu0 0.0
    %178 = vmatprep.subr.mxu0 0.0
    %179 = vmatpush1.msra.mxu0 0.0
    %180 = vmatprep.mubr.f32.mxu0 0.0
    %181 = vmatmul.mubr.f32.gmra.mrb[0].mxu0 %v91
    %v182 = vpop.f32.mrb[0].mxu0
    %v183 = vadd.f32 0.0, %v182
    %v184 = vpop.f32.mrb[0].mxu0
    %185 = vmatprep.mubr.f32.mxu0 0.0
    %186 = vmatmul.mubr.f32.gmra.mrb[0].mxu0 %v92
    %v187 = vpop.f32.mrb[0].mxu0
    %v188 = vadd.f32 0.0, %v187
    %v189 = vpop.f32.mrb[0].mxu0
    %190 = vmatprep.mubr.f32.mxu0 0.0
    %191 = vmatmul.mubr.f32.gmra.mrb[0].mxu0 %v93
    %v192 = vpop.f32.mrb[0].mxu0
    %v193 = vadd.f32 0.0, %v192
    %v194 = vpop.f32.mrb[0].mxu0
    %195 = vmatprep.mubr.f32.mxu0 0.0
    %196 = vmatmul.mubr.f32.gmra.mrb[0].mxu0 %v94
    %v197 = vpop.f32.mrb[0].mxu0
    %v198 = vadd.f32 0.0, %v197
    %v199 = vpop.f32.mrb[0].mxu0
    %200 = vmatprep.mubr.f32.mxu0 0.0
    %201 = vmatmul.mubr.f32.gmra.mrb[0].mxu0 %v95
    %v202 = vpop.f32.mrb[0].mxu0
    %v203 = vadd.f32 0.0, %v202
    %v204 = vpop.f32.mrb[0].mxu0
    %205 = vmatprep.mubr.f32.mxu0 0.0
    %206 = vmatmul.mubr.f32.gmra.mrb[0].mxu0 %v96
    %v207 = vpop.f32.mrb[0].mxu0
    %v208 = vadd.f32 0.0, %v207
    %v209 = vpop.f32.mrb[0].mxu0
    %210 = vmatprep.mubr.f32.mxu0 0.0
    %211 = vmatmul.mubr.f32.gmra.mrb[0].mxu0 %v97
    %v212 = vpop.f32.mrb[0].mxu0
    %v213 = vadd.f32 0.0, %v212
    %v214 = vpop.f32.mrb[0].mxu0
    %215 = vmatprep.mubr.f32.mxu0 0.0
    %216 = vmatmul.mubr.f32.gmra.mrb[0].mxu0 %v98
    %v217 = vpop.f32.mrb[0].mxu0
    %v218 = vadd.f32 0.0, %v217
    %v219 = vpop.f32.mrb[0].mxu0
    %220 = vdwg.mxu0
    %221 = vmatprep.subr.mxu0 0.0
    %222 = vmatpush1.msra.mxu0 %v75
    %223 = vmatprep.subr.mxu0 0.0
    %224 = vmatpush1.msra.mxu0 %v76
    %225 = vmatprep.subr.mxu0 0.0
    %226 = vmatpush1.msra.mxu0 %v77
    %227 = vmatprep.subr.mxu0 0.0
    %228 = vmatpush1.msra.mxu0 %v78
    %229 = vmatprep.subr.mxu0 0.0
    %230 = vmatpush1.msra.mxu0 %v79
    %231 = vmatprep.subr.mxu0 0.0
    %232 = vmatpush1.msra.mxu0 %v80
    %233 = vmatprep.subr.mxu0 0.0
    %234 = vmatpush1.msra.mxu0 %v81
    %235 = vmatprep.subr.mxu0 0.0
    %236 = vmatpush1.msra.mxu0 %v82
    %237 = vmatprep.subr.mxu0 0.0
    %238 = vmatpush1.msra.mxu0 %v83
    %239 = vmatprep.subr.mxu0 0.0
    %240 = vmatpush1.msra.mxu0 %v84
    %241 = vmatprep.subr.mxu0 0.0
    %242 = vmatpush1.msra.mxu0 %v85
    %243 = vmatprep.subr.mxu0 0.0
    %244 = vmatpush1.msra.mxu0 %v86
    %245 = vmatprep.subr.mxu0 0.0
    %246 = vmatpush1.msra.mxu0 %v87
    %247 = vmatprep.subr.mxu0 0.0
    %248 = vmatpush1.msra.mxu0 %v88
    %249 = vmatprep.subr.mxu0 0.0
    %250 = vmatpush1.msra.mxu0 %v89
    %251 = vmatprep.subr.mxu0 0.0
    %252 = vmatpush1.msra.mxu0 %v90
    %253 = vmatprep.subr.mxu0 0.0
    %254 = vmatpush1.msra.mxu0 0.0
    %255 = vmatprep.subr.mxu0 0.0
    %256 = vmatpush1.msra.mxu0 0.0
    %257 = vmatprep.subr.mxu0 0.0
    %258 = vmatpush1.msra.mxu0 0.0
    %259 = vmatprep.subr.mxu0 0.0
    %260 = vmatpush1.msra.mxu0 0.0
    %261 = vmatprep.subr.mxu0 0.0
    %262 = vmatpush1.msra.mxu0 0.0
    %263 = vmatprep.subr.mxu0 0.0
    %264 = vmatpush1.msra.mxu0 0.0
    %265 = vmatprep.subr.mxu0 0.0
    %266 = vmatpush1.msra.mxu0 0.0
    %267 = vmatprep.subr.mxu0 0.0
    %268 = vmatpush1.msra.mxu0 0.0
    %269 = vmatprep.subr.mxu0 0.0
    %270 = vmatpush1.msra.mxu0 0.0
    %271 = vmatprep.subr.mxu0 0.0
    %272 = vmatpush1.msra.mxu0 0.0
    %273 = vmatprep.subr.mxu0 0.0
    %274 = vmatpush1.msra.mxu0 0.0
    %275 = vmatprep.subr.mxu0 0.0
    %276 = vmatpush1.msra.mxu0 0.0
    %277 = vmatprep.subr.mxu0 0.0
    %278 = vmatpush1.msra.mxu0 0.0
    %279 = vmatprep.subr.mxu0 0.0
    %280 = vmatpush1.msra.mxu0 0.0
    %281 = vmatprep.subr.mxu0 0.0
    %282 = vmatpush1.msra.mxu0 0.0
    %283 = vmatprep.subr.mxu0 0.0
    %284 = vmatpush1.msra.mxu0 0.0
    %285 = vmatprep.mubr.f32.mxu0 0.0
    %286 = vmatmul.mubr.f32.gmra.mrb[0].mxu0 %v67
    %v287 = vpop.f32.mrb[0].mxu0
    %v288 = vadd.f32 %v183, %v287
    %v289 = vpop.f32.mrb[0].mxu0
    %290 = vmatprep.mubr.f32.mxu0 0.0
    %291 = vmatmul.mubr.f32.gmra.mrb[0].mxu0 %v68
    %v292 = vpop.f32.mrb[0].mxu0
    %v293 = vadd.f32 %v188, %v292
    %v294 = vpop.f32.mrb[0].mxu0
    %295 = vmatprep.mubr.f32.mxu0 0.0
    %296 = vmatmul.mubr.f32.gmra.mrb[0].mxu0 %v69
    %v297 = vpop.f32.mrb[0].mxu0
    %v298 = vadd.f32 %v193, %v297
    %v299 = vpop.f32.mrb[0].mxu0
    %300 = vmatprep.mubr.f32.mxu0 0.0
    %301 = vmatmul.mubr.f32.gmra.mrb[0].mxu0 %v70
    %v302 = vpop.f32.mrb[0].mxu0
    %v303 = vadd.f32 %v198, %v302
    %v304 = vpop.f32.mrb[0].mxu0
    %305 = vmatprep.mubr.f32.mxu0 0.0
    %306 = vmatmul.mubr.f32.gmra.mrb[0].mxu0 %v71
    %v307 = vpop.f32.mrb[0].mxu0
    %v308 = vadd.f32 %v203, %v307
    %v309 = vpop.f32.mrb[0].mxu0
    %310 = vmatprep.mubr.f32.mxu0 0.0
    %311 = vmatmul.mubr.f32.gmra.mrb[0].mxu0 %v72
    %v312 = vpop.f32.mrb[0].mxu0
    %v313 = vadd.f32 %v208, %v312
    %v314 = vpop.f32.mrb[0].mxu0
    %315 = vmatprep.mubr.f32.mxu0 0.0
    %316 = vmatmul.mubr.f32.gmra.mrb[0].mxu0 %v73
    %v317 = vpop.f32.mrb[0].mxu0
    %v318 = vadd.f32 %v213, %v317
    %v319 = vpop.f32.mrb[0].mxu0
    %320 = vmatprep.mubr.f32.mxu0 0.0
    %321 = vmatmul.mubr.f32.gmra.mrb[0].mxu0 %v74
    %v322 = vpop.f32.mrb[0].mxu0
    %v323 = vadd.f32 %v218, %v322
    %v324 = vpop.f32.mrb[0].mxu0
    %325 = vdwg.mxu0
    %v326 = vld [vmem:[#allocation2 + $0x2] sm:$0xff]
    %v327 = vld [vmem:[#allocation2 + $0x12] sm:$0xff]
    %v328 = vld [vmem:[#allocation2 + $0x22] sm:$0xff]
    %v329 = vld [vmem:[#allocation2 + $0x32] sm:$0xff]
    %v330 = vld [vmem:[#allocation2 + $0x42] sm:$0xff]
    %v331 = vld [vmem:[#allocation2 + $0x52] sm:$0xff]
    %v332 = vld [vmem:[#allocation2 + $0x62] sm:$0xff]
    %v333 = vld [vmem:[#allocation2 + $0x72] sm:$0xff]
    %s334 = scalar_lea.vmem [#allocation3], 256
    %v335 = vld [vmem:[%s334] sm:$0xff]
    %v336 = vld [vmem:[%s334 + $0x8] sm:$0xff]
    %v337 = vld [vmem:[%s334 + $0x10] sm:$0xff]
    %v338 = vld [vmem:[%s334 + $0x18] sm:$0xff]
    %v339 = vld [vmem:[%s334 + $0x20] sm:$0xff]
    %v340 = vld [vmem:[%s334 + $0x28] sm:$0xff]
    %v341 = vld [vmem:[%s334 + $0x30] sm:$0xff]
    %v342 = vld [vmem:[%s334 + $0x38] sm:$0xff]
    %v343 = vld [vmem:[%s334 + $0x40] sm:$0xff]
    %v344 = vld [vmem:[%s334 + $0x48] sm:$0xff]
    %v345 = vld [vmem:[%s334 + $0x50] sm:$0xff]
    %v346 = vld [vmem:[%s334 + $0x58] sm:$0xff]
    %v347 = vld [vmem:[%s334 + $0x60] sm:$0xff]
    %v348 = vld [vmem:[%s334 + $0x68] sm:$0xff]
    %v349 = vld [vmem:[%s334 + $0x70] sm:$0xff]
    %v350 = vld [vmem:[%s334 + $0x78] sm:$0xff]
    %351 = vmatprep.subr.mxu0 0.0
    %352 = vmatpush1.msra.mxu0 %v335
    %353 = vmatprep.subr.mxu0 0.0
    %354 = vmatpush1.msra.mxu0 %v336
    %355 = vmatprep.subr.mxu0 0.0
    %356 = vmatpush1.msra.mxu0 %v337
    %357 = vmatprep.subr.mxu0 0.0
    %358 = vmatpush1.msra.mxu0 %v338
    %359 = vmatprep.subr.mxu0 0.0
    %360 = vmatpush1.msra.mxu0 %v339
    %361 = vmatprep.subr.mxu0 0.0
    %362 = vmatpush1.msra.mxu0 %v340
    %363 = vmatprep.subr.mxu0 0.0
    %364 = vmatpush1.msra.mxu0 %v341
    %365 = vmatprep.subr.mxu0 0.0
    %366 = vmatpush1.msra.mxu0 %v342
    %367 = vmatprep.subr.mxu0 0.0
    %368 = vmatpush1.msra.mxu0 %v343
    %369 = vmatprep.subr.mxu0 0.0
    %370 = vmatpush1.msra.mxu0 %v344
    %371 = vmatprep.subr.mxu0 0.0
    %372 = vmatpush1.msra.mxu0 %v345
    %373 = vmatprep.subr.mxu0 0.0
    %374 = vmatpush1.msra.mxu0 %v346
    %375 = vmatprep.subr.mxu0 0.0
    %376 = vmatpush1.msra.mxu0 %v347
    %377 = vmatprep.subr.mxu0 0.0
    %378 = vmatpush1.msra.mxu0 %v348
    %379 = vmatprep.subr.mxu0 0.0
    %380 = vmatpush1.msra.mxu0 %v349
    %381 = vmatprep.subr.mxu0 0.0
    %382 = vmatpush1.msra.mxu0 %v350
    %383 = vmatprep.subr.mxu0 0.0
    %384 = vmatpush1.msra.mxu0 0.0
    %385 = vmatprep.subr.mxu0 0.0
    %386 = vmatpush1.msra.mxu0 0.0
    %387 = vmatprep.subr.mxu0 0.0
    %388 = vmatpush1.msra.mxu0 0.0
    %389 = vmatprep.subr.mxu0 0.0
    %390 = vmatpush1.msra.mxu0 0.0
    %391 = vmatprep.subr.mxu0 0.0
    %392 = vmatpush1.msra.mxu0 0.0
    %393 = vmatprep.subr.mxu0 0.0
    %394 = vmatpush1.msra.mxu0 0.0
    %395 = vmatprep.subr.mxu0 0.0
    %396 = vmatpush1.msra.mxu0 0.0
    %397 = vmatprep.subr.mxu0 0.0
    %398 = vmatpush1.msra.mxu0 0.0
    %399 = vmatprep.subr.mxu0 0.0
    %400 = vmatpush1.msra.mxu0 0.0
    %401 = vmatprep.subr.mxu0 0.0
    %402 = vmatpush1.msra.mxu0 0.0
    %403 = vmatprep.subr.mxu0 0.0
    %404 = vmatpush1.msra.mxu0 0.0
    %405 = vmatprep.subr.mxu0 0.0
    %406 = vmatpush1.msra.mxu0 0.0
    %407 = vmatprep.subr.mxu0 0.0
    %408 = vmatpush1.msra.mxu0 0.0
    %409 = vmatprep.subr.mxu0 0.0
    %410 = vmatpush1.msra.mxu0 0.0
    %411 = vmatprep.subr.mxu0 0.0
    %412 = vmatpush1.msra.mxu0 0.0
    %413 = vmatprep.subr.mxu0 0.0
    %414 = vmatpush1.msra.mxu0 0.0
    %415 = vmatprep.mubr.f32.mxu0 0.0
    %416 = vmatmul.mubr.f32.gmra.mrb[0].mxu0 %v326
    %v417 = vpop.f32.mrb[0].mxu0
    %v418 = vadd.f32 0.0, %v417
    %v419 = vpop.f32.mrb[0].mxu0
    %420 = vmatprep.mubr.f32.mxu0 0.0
    %421 = vmatmul.mubr.f32.gmra.mrb[0].mxu0 %v327
    %v422 = vpop.f32.mrb[0].mxu0
    %v423 = vadd.f32 0.0, %v422
    %v424 = vpop.f32.mrb[0].mxu0
    %425 = vmatprep.mubr.f32.mxu0 0.0
    %426 = vmatmul.mubr.f32.gmra.mrb[0].mxu0 %v328
    %v427 = vpop.f32.mrb[0].mxu0
    %v428 = vadd.f32 0.0, %v427
    %v429 = vpop.f32.mrb[0].mxu0
    %430 = vmatprep.mubr.f32.mxu0 0.0
    %431 = vmatmul.mubr.f32.gmra.mrb[0].mxu0 %v329
    %v432 = vpop.f32.mrb[0].mxu0
    %v433 = vadd.f32 0.0, %v432
    %v434 = vpop.f32.mrb[0].mxu0
    %435 = vmatprep.mubr.f32.mxu0 0.0
    %436 = vmatmul.mubr.f32.gmra.mrb[0].mxu0 %v330
    %v437 = vpop.f32.mrb[0].mxu0
    %v438 = vadd.f32 0.0, %v437
    %v439 = vpop.f32.mrb[0].mxu0
    %440 = vmatprep.mubr.f32.mxu0 0.0
    %441 = vmatmul.mubr.f32.gmra.mrb[0].mxu0 %v331
    %v442 = vpop.f32.mrb[0].mxu0
    %v443 = vadd.f32 0.0, %v442
    %v444 = vpop.f32.mrb[0].mxu0
    %445 = vmatprep.mubr.f32.mxu0 0.0
    %446 = vmatmul.mubr.f32.gmra.mrb[0].mxu0 %v332
    %v447 = vpop.f32.mrb[0].mxu0
    %v448 = vadd.f32 0.0, %v447
    %v449 = vpop.f32.mrb[0].mxu0
    %450 = vmatprep.mubr.f32.mxu0 0.0
    %451 = vmatmul.mubr.f32.gmra.mrb[0].mxu0 %v333
    %v452 = vpop.f32.mrb[0].mxu0
    %v453 = vadd.f32 0.0, %v452
    %v454 = vpop.f32.mrb[0].mxu0
    %455 = vdwg.mxu0
    %v456 = vadd.f32 %v288, %v418
    %v457 = vadd.f32 %v293, %v423
    %v458 = vadd.f32 %v298, %v428
    %v459 = vadd.f32 %v303, %v433
    %v460 = vadd.f32 %v308, %v438
    %v461 = vadd.f32 %v313, %v443
    %v462 = vadd.f32 %v318, %v448
    %v463 = vadd.f32 %v323, %v453
    %v464 = vld [vmem:[%s2] sm:$0x1]
    %v466 = vlaneseq
    %v467 = vshrl.u32 %v466, 7
    %v468 = vsub.s32 0, %v467
    %v469 = vrot.slane %v464, %v468
    %v471 = vadd.f32 %v456, %v469
    %v472 = vadd.f32 %v457, %v469
    %v473 = vadd.f32 %v458, %v469
    %v474 = vadd.f32 %v459, %v469
    %v475 = vadd.f32 %v460, %v469
    %v476 = vadd.f32 %v461, %v469
    %v477 = vadd.f32 %v462, %v469
    %v478 = vadd.f32 %v463, %v469
    %v479 = vmax.f32 %v471, 0.0
    %v480 = vmax.f32 %v472, 0.0
    %v481 = vmax.f32 %v473, 0.0
    %v482 = vmax.f32 %v474, 0.0
    %v483 = vmax.f32 %v475, 0.0
    %v484 = vmax.f32 %v476, 0.0
    %v485 = vmax.f32 %v477, 0.0
    %v486 = vmax.f32 %v478, 0.0
    %487 = vst [vmem:[#allocation2 + $0x1] sm:$0xff] %v479
    %488 = vst [vmem:[#allocation2 + $0x11] sm:$0xff] %v480
    %489 = vst [vmem:[#allocation2 + $0x21] sm:$0xff] %v481
    %490 = vst [vmem:[#allocation2 + $0x31] sm:$0xff] %v482
    %491 = vst [vmem:[#allocation2 + $0x41] sm:$0xff] %v483
    %492 = vst [vmem:[#allocation2 + $0x51] sm:$0xff] %v484
    %493 = vst [vmem:[#allocation2 + $0x61] sm:$0xff] %v485
    %494 = vst [vmem:[#allocation2 + $0x71] sm:$0xff] %v486
    %v495 = vld [vmem:[#allocation2] sm:$0xff]
    %v496 = vld [vmem:[#allocation2 + $0x10] sm:$0xff]
    %v497 = vld [vmem:[#allocation2 + $0x20] sm:$0xff]
    %v498 = vld [vmem:[#allocation2 + $0x30] sm:$0xff]
    %v499 = vld [vmem:[#allocation2 + $0x40] sm:$0xff]
    %v500 = vld [vmem:[#allocation2 + $0x50] sm:$0xff]
    %v501 = vld [vmem:[#allocation2 + $0x60] sm:$0xff]
    %v502 = vld [vmem:[#allocation2 + $0x70] sm:$0xff]
    %s503 = scalar_lea.vmem [#allocation3], 384
    %v504 = vld [vmem:[%s503] sm:$0xff]
    %v505 = vld [vmem:[%s503 + $0x8] sm:$0xff]
    %v506 = vld [vmem:[%s503 + $0x10] sm:$0xff]
    %v507 = vld [vmem:[%s503 + $0x18] sm:$0xff]
    %v508 = vld [vmem:[%s503 + $0x20] sm:$0xff]
    %v509 = vld [vmem:[%s503 + $0x28] sm:$0xff]
    %v510 = vld [vmem:[%s503 + $0x30] sm:$0xff]
    %v511 = vld [vmem:[%s503 + $0x38] sm:$0xff]
    %v512 = vld [vmem:[%s503 + $0x40] sm:$0xff]
    %v513 = vld [vmem:[%s503 + $0x48] sm:$0xff]
    %v514 = vld [vmem:[%s503 + $0x50] sm:$0xff]
    %v515 = vld [vmem:[%s503 + $0x58] sm:$0xff]
    %v516 = vld [vmem:[%s503 + $0x60] sm:$0xff]
    %v517 = vld [vmem:[%s503 + $0x68] sm:$0xff]
    %v518 = vld [vmem:[%s503 + $0x70] sm:$0xff]
    %v519 = vld [vmem:[%s503 + $0x78] sm:$0xff]
    %v520 = vld [vmem:[#allocation2 + $0x1] sm:$0xff]
    %v521 = vld [vmem:[#allocation2 + $0x11] sm:$0xff]
    %v522 = vld [vmem:[#allocation2 + $0x21] sm:$0xff]
    %v523 = vld [vmem:[#allocation2 + $0x31] sm:$0xff]
    %v524 = vld [vmem:[#allocation2 + $0x41] sm:$0xff]
    %v525 = vld [vmem:[#allocation2 + $0x51] sm:$0xff]
    %v526 = vld [vmem:[#allocation2 + $0x61] sm:$0xff]
    %v527 = vld [vmem:[#allocation2 + $0x71] sm:$0xff]
    %s528 = scalar_lea.vmem [#allocation3], 512
    %v529 = vld [vmem:[%s528] sm:$0xff]
    %v530 = vld [vmem:[%s528 + $0x8] sm:$0xff]
    %v531 = vld [vmem:[%s528 + $0x10] sm:$0xff]
    %v532 = vld [vmem:[%s528 + $0x18] sm:$0xff]
    %v533 = vld [vmem:[%s528 + $0x20] sm:$0xff]
    %v534 = vld [vmem:[%s528 + $0x28] sm:$0xff]
    %v535 = vld [vmem:[%s528 + $0x30] sm:$0xff]
    %v536 = vld [vmem:[%s528 + $0x38] sm:$0xff]
    %v537 = vld [vmem:[%s528 + $0x40] sm:$0xff]
    %v538 = vld [vmem:[%s528 + $0x48] sm:$0xff]
    %v539 = vld [vmem:[%s528 + $0x50] sm:$0xff]
    %v540 = vld [vmem:[%s528 + $0x58] sm:$0xff]
    %v541 = vld [vmem:[%s528 + $0x60] sm:$0xff]
    %v542 = vld [vmem:[%s528 + $0x68] sm:$0xff]
    %v543 = vld [vmem:[%s528 + $0x70] sm:$0xff]
    %v544 = vld [vmem:[%s528 + $0x78] sm:$0xff]
    %545 = vmatprep.subr.mxu0 0.0
    %546 = vmatpush1.msra.mxu0 %v529
    %547 = vmatprep.subr.mxu0 0.0
    %548 = vmatpush1.msra.mxu0 %v530
    %549 = vmatprep.subr.mxu0 0.0
    %550 = vmatpush1.msra.mxu0 %v531
    %551 = vmatprep.subr.mxu0 0.0
    %552 = vmatpush1.msra.mxu0 %v532
    %553 = vmatprep.subr.mxu0 0.0
    %554 = vmatpush1.msra.mxu0 %v533
    %555 = vmatprep.subr.mxu0 0.0
    %556 = vmatpush1.msra.mxu0 %v534
    %557 = vmatprep.subr.mxu0 0.0
    %558 = vmatpush1.msra.mxu0 %v535
    %559 = vmatprep.subr.mxu0 0.0
    %560 = vmatpush1.msra.mxu0 %v536
    %561 = vmatprep.subr.mxu0 0.0
    %562 = vmatpush1.msra.mxu0 %v537
    %563 = vmatprep.subr.mxu0 0.0
    %564 = vmatpush1.msra.mxu0 %v538
    %565 = vmatprep.subr.mxu0 0.0
    %566 = vmatpush1.msra.mxu0 %v539
    %567 = vmatprep.subr.mxu0 0.0
    %568 = vmatpush1.msra.mxu0 %v540
    %569 = vmatprep.subr.mxu0 0.0
    %570 = vmatpush1.msra.mxu0 %v541
    %571 = vmatprep.subr.mxu0 0.0
    %572 = vmatpush1.msra.mxu0 %v542
    %573 = vmatprep.subr.mxu0 0.0
    %574 = vmatpush1.msra.mxu0 %v543
    %575 = vmatprep.subr.mxu0 0.0
    %576 = vmatpush1.msra.mxu0 %v544
    %577 = vmatprep.subr.mxu0 0.0
    %578 = vmatpush1.msra.mxu0 0.0
    %579 = vmatprep.subr.mxu0 0.0
    %580 = vmatpush1.msra.mxu0 0.0
    %581 = vmatprep.subr.mxu0 0.0
    %582 = vmatpush1.msra.mxu0 0.0
    %583 = vmatprep.subr.mxu0 0.0
    %584 = vmatpush1.msra.mxu0 0.0
    %585 = vmatprep.subr.mxu0 0.0
    %586 = vmatpush1.msra.mxu0 0.0
    %587 = vmatprep.subr.mxu0 0.0
    %588 = vmatpush1.msra.mxu0 0.0
    %589 = vmatprep.subr.mxu0 0.0
    %590 = vmatpush1.msra.mxu0 0.0
    %591 = vmatprep.subr.mxu0 0.0
    %592 = vmatpush1.msra.mxu0 0.0
    %593 = vmatprep.subr.mxu0 0.0
    %594 = vmatpush1.msra.mxu0 0.0
    %595 = vmatprep.subr.mxu0 0.0
    %596 = vmatpush1.msra.mxu0 0.0
    %597 = vmatprep.subr.mxu0 0.0
    %598 = vmatpush1.msra.mxu0 0.0
    %599 = vmatprep.subr.mxu0 0.0
    %600 = vmatpush1.msra.mxu0 0.0
    %601 = vmatprep.subr.mxu0 0.0
    %602 = vmatpush1.msra.mxu0 0.0
    %603 = vmatprep.subr.mxu0 0.0
    %604 = vmatpush1.msra.mxu0 0.0
    %605 = vmatprep.subr.mxu0 0.0
    %606 = vmatpush1.msra.mxu0 0.0
    %607 = vmatprep.subr.mxu0 0.0
    %608 = vmatpush1.msra.mxu0 0.0
    %609 = vmatprep.mubr.f32.mxu0 0.0
    %610 = vmatmul.mubr.f32.gmra.mrb[0].mxu0 %v520
    %v611 = vpop.f32.mrb[0].mxu0
    %v612 = vadd.f32 0.0, %v611
    %v613 = vpop.f32.mrb[0].mxu0
    %614 = vmatprep.mubr.f32.mxu0 0.0
    %615 = vmatmul.mubr.f32.gmra.mrb[0].mxu0 %v521
    %v616 = vpop.f32.mrb[0].mxu0
    %v617 = vadd.f32 0.0, %v616
    %v618 = vpop.f32.mrb[0].mxu0
    %619 = vmatprep.mubr.f32.mxu0 0.0
    %620 = vmatmul.mubr.f32.gmra.mrb[0].mxu0 %v522
    %v621 = vpop.f32.mrb[0].mxu0
    %v622 = vadd.f32 0.0, %v621
    %v623 = vpop.f32.mrb[0].mxu0
    %624 = vmatprep.mubr.f32.mxu0 0.0
    %625 = vmatmul.mubr.f32.gmra.mrb[0].mxu0 %v523
    %v626 = vpop.f32.mrb[0].mxu0
    %v627 = vadd.f32 0.0, %v626
    %v628 = vpop.f32.mrb[0].mxu0
    %629 = vmatprep.mubr.f32.mxu0 0.0
    %630 = vmatmul.mubr.f32.gmra.mrb[0].mxu0 %v524
    %v631 = vpop.f32.mrb[0].mxu0
    %v632 = vadd.f32 0.0, %v631
    %v633 = vpop.f32.mrb[0].mxu0
    %634 = vmatprep.mubr.f32.mxu0 0.0
    %635 = vmatmul.mubr.f32.gmra.mrb[0].mxu0 %v525
    %v636 = vpop.f32.mrb[0].mxu0
    %v637 = vadd.f32 0.0, %v636
    %v638 = vpop.f32.mrb[0].mxu0
    %639 = vmatprep.mubr.f32.mxu0 0.0
    %640 = vmatmul.mubr.f32.gmra.mrb[0].mxu0 %v526
    %v641 = vpop.f32.mrb[0].mxu0
    %v642 = vadd.f32 0.0, %v641
    %v643 = vpop.f32.mrb[0].mxu0
    %644 = vmatprep.mubr.f32.mxu0 0.0
    %645 = vmatmul.mubr.f32.gmra.mrb[0].mxu0 %v527
    %v646 = vpop.f32.mrb[0].mxu0
    %v647 = vadd.f32 0.0, %v646
    %v648 = vpop.f32.mrb[0].mxu0
    %649 = vdwg.mxu0
    %650 = vmatprep.subr.mxu0 0.0
    %651 = vmatpush1.msra.mxu0 %v504
    %652 = vmatprep.subr.mxu0 0.0
    %653 = vmatpush1.msra.mxu0 %v505
    %654 = vmatprep.subr.mxu0 0.0
    %655 = vmatpush1.msra.mxu0 %v506
    %656 = vmatprep.subr.mxu0 0.0
    %657 = vmatpush1.msra.mxu0 %v507
    %658 = vmatprep.subr.mxu0 0.0
    %659 = vmatpush1.msra.mxu0 %v508
    %660 = vmatprep.subr.mxu0 0.0
    %661 = vmatpush1.msra.mxu0 %v509
    %662 = vmatprep.subr.mxu0 0.0
    %663 = vmatpush1.msra.mxu0 %v510
    %664 = vmatprep.subr.mxu0 0.0
    %665 = vmatpush1.msra.mxu0 %v511
    %666 = vmatprep.subr.mxu0 0.0
    %667 = vmatpush1.msra.mxu0 %v512
    %668 = vmatprep.subr.mxu0 0.0
    %669 = vmatpush1.msra.mxu0 %v513
    %670 = vmatprep.subr.mxu0 0.0
    %671 = vmatpush1.msra.mxu0 %v514
    %672 = vmatprep.subr.mxu0 0.0
    %673 = vmatpush1.msra.mxu0 %v515
    %674 = vmatprep.subr.mxu0 0.0
    %675 = vmatpush1.msra.mxu0 %v516
    %676 = vmatprep.subr.mxu0 0.0
    %677 = vmatpush1.msra.mxu0 %v517
    %678 = vmatprep.subr.mxu0 0.0
    %679 = vmatpush1.msra.mxu0 %v518
    %680 = vmatprep.subr.mxu0 0.0
    %681 = vmatpush1.msra.mxu0 %v519
    %682 = vmatprep.subr.mxu0 0.0
    %683 = vmatpush1.msra.mxu0 0.0
    %684 = vmatprep.subr.mxu0 0.0
    %685 = vmatpush1.msra.mxu0 0.0
    %686 = vmatprep.subr.mxu0 0.0
    %687 = vmatpush1.msra.mxu0 0.0
    %688 = vmatprep.subr.mxu0 0.0
    %689 = vmatpush1.msra.mxu0 0.0
    %690 = vmatprep.subr.mxu0 0.0
    %691 = vmatpush1.msra.mxu0 0.0
    %692 = vmatprep.subr.mxu0 0.0
    %693 = vmatpush1.msra.mxu0 0.0
    %694 = vmatprep.subr.mxu0 0.0
    %695 = vmatpush1.msra.mxu0 0.0
    %696 = vmatprep.subr.mxu0 0.0
    %697 = vmatpush1.msra.mxu0 0.0
    %698 = vmatprep.subr.mxu0 0.0
    %699 = vmatpush1.msra.mxu0 0.0
    %700 = vmatprep.subr.mxu0 0.0
    %701 = vmatpush1.msra.mxu0 0.0
    %702 = vmatprep.subr.mxu0 0.0
    %703 = vmatpush1.msra.mxu0 0.0
    %704 = vmatprep.subr.mxu0 0.0
    %705 = vmatpush1.msra.mxu0 0.0
    %706 = vmatprep.subr.mxu0 0.0
    %707 = vmatpush1.msra.mxu0 0.0
    %708 = vmatprep.subr.mxu0 0.0
    %709 = vmatpush1.msra.mxu0 0.0
    %710 = vmatprep.subr.mxu0 0.0
    %711 = vmatpush1.msra.mxu0 0.0
    %712 = vmatprep.subr.mxu0 0.0
    %713 = vmatpush1.msra.mxu0 0.0
    %714 = vmatprep.mubr.f32.mxu0 0.0
    %715 = vmatmul.mubr.f32.gmra.mrb[0].mxu0 %v495
    %v716 = vpop.f32.mrb[0].mxu0
    %v717 = vadd.f32 %v612, %v716
    %v718 = vpop.f32.mrb[0].mxu0
    %719 = vmatprep.mubr.f32.mxu0 0.0
    %720 = vmatmul.mubr.f32.gmra.mrb[0].mxu0 %v496
    %v721 = vpop.f32.mrb[0].mxu0
    %v722 = vadd.f32 %v617, %v721
    %v723 = vpop.f32.mrb[0].mxu0
    %724 = vmatprep.mubr.f32.mxu0 0.0
    %725 = vmatmul.mubr.f32.gmra.mrb[0].mxu0 %v497
    %v726 = vpop.f32.mrb[0].mxu0
    %v727 = vadd.f32 %v622, %v726
    %v728 = vpop.f32.mrb[0].mxu0
    %729 = vmatprep.mubr.f32.mxu0 0.0
    %730 = vmatmul.mubr.f32.gmra.mrb[0].mxu0 %v498
    %v731 = vpop.f32.mrb[0].mxu0
    %v732 = vadd.f32 %v627, %v731
    %v733 = vpop.f32.mrb[0].mxu0
    %734 = vmatprep.mubr.f32.mxu0 0.0
    %735 = vmatmul.mubr.f32.gmra.mrb[0].mxu0 %v499
    %v736 = vpop.f32.mrb[0].mxu0
    %v737 = vadd.f32 %v632, %v736
    %v738 = vpop.f32.mrb[0].mxu0
    %739 = vmatprep.mubr.f32.mxu0 0.0
    %740 = vmatmul.mubr.f32.gmra.mrb[0].mxu0 %v500
    %v741 = vpop.f32.mrb[0].mxu0
    %v742 = vadd.f32 %v637, %v741
    %v743 = vpop.f32.mrb[0].mxu0
    %744 = vmatprep.mubr.f32.mxu0 0.0
    %745 = vmatmul.mubr.f32.gmra.mrb[0].mxu0 %v501
    %v746 = vpop.f32.mrb[0].mxu0
    %v747 = vadd.f32 %v642, %v746
    %v748 = vpop.f32.mrb[0].mxu0
    %749 = vmatprep.mubr.f32.mxu0 0.0
    %750 = vmatmul.mubr.f32.gmra.mrb[0].mxu0 %v502
    %v751 = vpop.f32.mrb[0].mxu0
    %v752 = vadd.f32 %v647, %v751
    %v753 = vpop.f32.mrb[0].mxu0
    %754 = vdwg.mxu0
    %v755 = vld [vmem:[#allocation2 + $0x2] sm:$0xff]
    %v756 = vld [vmem:[#allocation2 + $0x12] sm:$0xff]
    %v757 = vld [vmem:[#allocation2 + $0x22] sm:$0xff]
    %v758 = vld [vmem:[#allocation2 + $0x32] sm:$0xff]
    %v759 = vld [vmem:[#allocation2 + $0x42] sm:$0xff]
    %v760 = vld [vmem:[#allocation2 + $0x52] sm:$0xff]
    %v761 = vld [vmem:[#allocation2 + $0x62] sm:$0xff]
    %v762 = vld [vmem:[#allocation2 + $0x72] sm:$0xff]
    %s763 = scalar_lea.vmem [#allocation3], 640
    %v764 = vld [vmem:[%s763] sm:$0xff]
    %v765 = vld [vmem:[%s763 + $0x8] sm:$0xff]
    %v766 = vld [vmem:[%s763 + $0x10] sm:$0xff]
    %v767 = vld [vmem:[%s763 + $0x18] sm:$0xff]
    %v768 = vld [vmem:[%s763 + $0x20] sm:$0xff]
    %v769 = vld [vmem:[%s763 + $0x28] sm:$0xff]
    %v770 = vld [vmem:[%s763 + $0x30] sm:$0xff]
    %v771 = vld [vmem:[%s763 + $0x38] sm:$0xff]
    %v772 = vld [vmem:[%s763 + $0x40] sm:$0xff]
    %v773 = vld [vmem:[%s763 + $0x48] sm:$0xff]
    %v774 = vld [vmem:[%s763 + $0x50] sm:$0xff]
    %v775 = vld [vmem:[%s763 + $0x58] sm:$0xff]
    %v776 = vld [vmem:[%s763 + $0x60] sm:$0xff]
    %v777 = vld [vmem:[%s763 + $0x68] sm:$0xff]
    %v778 = vld [vmem:[%s763 + $0x70] sm:$0xff]
    %v779 = vld [vmem:[%s763 + $0x78] sm:$0xff]
    %780 = vmatprep.subr.mxu0 0.0
    %781 = vmatpush1.msra.mxu0 %v764
    %782 = vmatprep.subr.mxu0 0.0
    %783 = vmatpush1.msra.mxu0 %v765
    %784 = vmatprep.subr.mxu0 0.0
    %785 = vmatpush1.msra.mxu0 %v766
    %786 = vmatprep.subr.mxu0 0.0
    %787 = vmatpush1.msra.mxu0 %v767
    %788 = vmatprep.subr.mxu0 0.0
    %789 = vmatpush1.msra.mxu0 %v768
    %790 = vmatprep.subr.mxu0 0.0
    %791 = vmatpush1.msra.mxu0 %v769
    %792 = vmatprep.subr.mxu0 0.0
    %793 = vmatpush1.msra.mxu0 %v770
    %794 = vmatprep.subr.mxu0 0.0
    %795 = vmatpush1.msra.mxu0 %v771
    %796 = vmatprep.subr.mxu0 0.0
    %797 = vmatpush1.msra.mxu0 %v772
    %798 = vmatprep.subr.mxu0 0.0
    %799 = vmatpush1.msra.mxu0 %v773
    %800 = vmatprep.subr.mxu0 0.0
    %801 = vmatpush1.msra.mxu0 %v774
    %802 = vmatprep.subr.mxu0 0.0
    %803 = vmatpush1.msra.mxu0 %v775
    %804 = vmatprep.subr.mxu0 0.0
    %805 = vmatpush1.msra.mxu0 %v776
    %806 = vmatprep.subr.mxu0 0.0
    %807 = vmatpush1.msra.mxu0 %v777
    %808 = vmatprep.subr.mxu0 0.0
    %809 = vmatpush1.msra.mxu0 %v778
    %810 = vmatprep.subr.mxu0 0.0
    %811 = vmatpush1.msra.mxu0 %v779
    %812 = vmatprep.subr.mxu0 0.0
    %813 = vmatpush1.msra.mxu0 0.0
    %814 = vmatprep.subr.mxu0 0.0
    %815 = vmatpush1.msra.mxu0 0.0
    %816 = vmatprep.subr.mxu0 0.0
    %817 = vmatpush1.msra.mxu0 0.0
    %818 = vmatprep.subr.mxu0 0.0
    %819 = vmatpush1.msra.mxu0 0.0
    %820 = vmatprep.subr.mxu0 0.0
    %821 = vmatpush1.msra.mxu0 0.0
    %822 = vmatprep.subr.mxu0 0.0
    %823 = vmatpush1.msra.mxu0 0.0
    %824 = vmatprep.subr.mxu0 0.0
    %825 = vmatpush1.msra.mxu0 0.0
    %826 = vmatprep.subr.mxu0 0.0
    %827 = vmatpush1.msra.mxu0 0.0
    %828 = vmatprep.subr.mxu0 0.0
    %829 = vmatpush1.msra.mxu0 0.0
    %830 = vmatprep.subr.mxu0 0.0
    %831 = vmatpush1.msra.mxu0 0.0
    %832 = vmatprep.subr.mxu0 0.0
    %833 = vmatpush1.msra.mxu0 0.0
    %834 = vmatprep.subr.mxu0 0.0
    %835 = vmatpush1.msra.mxu0 0.0
    %836 = vmatprep.subr.mxu0 0.0
    %837 = vmatpush1.msra.mxu0 0.0
    %838 = vmatprep.subr.mxu0 0.0
    %839 = vmatpush1.msra.mxu0 0.0
    %840 = vmatprep.subr.mxu0 0.0
    %841 = vmatpush1.msra.mxu0 0.0
    %842 = vmatprep.subr.mxu0 0.0
    %843 = vmatpush1.msra.mxu0 0.0
    %844 = vmatprep.mubr.f32.mxu0 0.0
    %845 = vmatmul.mubr.f32.gmra.mrb[0].mxu0 %v755
    %v846 = vpop.f32.mrb[0].mxu0
    %v847 = vadd.f32 0.0, %v846
    %v848 = vpop.f32.mrb[0].mxu0
    %849 = vmatprep.mubr.f32.mxu0 0.0
    %850 = vmatmul.mubr.f32.gmra.mrb[0].mxu0 %v756
    %v851 = vpop.f32.mrb[0].mxu0
    %v852 = vadd.f32 0.0, %v851
    %v853 = vpop.f32.mrb[0].mxu0
    %854 = vmatprep.mubr.f32.mxu0 0.0
    %855 = vmatmul.mubr.f32.gmra.mrb[0].mxu0 %v757
    %v856 = vpop.f32.mrb[0].mxu0
    %v857 = vadd.f32 0.0, %v856
    %v858 = vpop.f32.mrb[0].mxu0
    %859 = vmatprep.mubr.f32.mxu0 0.0
    %860 = vmatmul.mubr.f32.gmra.mrb[0].mxu0 %v758
    %v861 = vpop.f32.mrb[0].mxu0
    %v862 = vadd.f32 0.0, %v861
    %v863 = vpop.f32.mrb[0].mxu0
    %864 = vmatprep.mubr.f32.mxu0 0.0
    %865 = vmatmul.mubr.f32.gmra.mrb[0].mxu0 %v759
    %v866 = vpop.f32.mrb[0].mxu0
    %v867 = vadd.f32 0.0, %v866
    %v868 = vpop.f32.mrb[0].mxu0
    %869 = vmatprep.mubr.f32.mxu0 0.0
    %870 = vmatmul.mubr.f32.gmra.mrb[0].mxu0 %v760
    %v871 = vpop.f32.mrb[0].mxu0
    %v872 = vadd.f32 0.0, %v871
    %v873 = vpop.f32.mrb[0].mxu0
    %874 = vmatprep.mubr.f32.mxu0 0.0
    %875 = vmatmul.mubr.f32.gmra.mrb[0].mxu0 %v761
    %v876 = vpop.f32.mrb[0].mxu0
    %v877 = vadd.f32 0.0, %v876
    %v878 = vpop.f32.mrb[0].mxu0
    %879 = vmatprep.mubr.f32.mxu0 0.0
    %880 = vmatmul.mubr.f32.gmra.mrb[0].mxu0 %v762
    %v881 = vpop.f32.mrb[0].mxu0
    %v882 = vadd.f32 0.0, %v881
    %v883 = vpop.f32.mrb[0].mxu0
    %884 = vdwg.mxu0
    %v885 = vadd.f32 %v717, %v847
    %v886 = vadd.f32 %v722, %v852
    %v887 = vadd.f32 %v727, %v857
    %v888 = vadd.f32 %v732, %v862
    %v889 = vadd.f32 %v737, %v867
    %v890 = vadd.f32 %v742, %v872
    %v891 = vadd.f32 %v747, %v877
    %v892 = vadd.f32 %v752, %v882
    %s893 = scalar_lea.vmem %s2, 1
    %v894 = vld [vmem:[%s893] sm:$0x1]
    %v896 = vlaneseq
    %v897 = vshrl.u32 %v896, 7
    %v898 = vsub.s32 0, %v897
    %v899 = vrot.slane %v894, %v898
    %v901 = vadd.f32 %v885, %v899
    %v902 = vadd.f32 %v886, %v899
    %v903 = vadd.f32 %v887, %v899
    %v904 = vadd.f32 %v888, %v899
    %v905 = vadd.f32 %v889, %v899
    %v906 = vadd.f32 %v890, %v899
    %v907 = vadd.f32 %v891, %v899
    %v908 = vadd.f32 %v892, %v899
    %v909 = vmax.f32 %v901, 0.0
    %v910 = vmax.f32 %v902, 0.0
    %v911 = vmax.f32 %v903, 0.0
    %v912 = vmax.f32 %v904, 0.0
    %v913 = vmax.f32 %v905, 0.0
    %v914 = vmax.f32 %v906, 0.0
    %v915 = vmax.f32 %v907, 0.0
    %v916 = vmax.f32 %v908, 0.0
    %917 = vst [vmem:[#allocation2 + $0x1] sm:$0xff] %v909
    %918 = vst [vmem:[#allocation2 + $0x11] sm:$0xff] %v910
    %919 = vst [vmem:[#allocation2 + $0x21] sm:$0xff] %v911
    %920 = vst [vmem:[#allocation2 + $0x31] sm:$0xff] %v912
    %921 = vst [vmem:[#allocation2 + $0x41] sm:$0xff] %v913
    %922 = vst [vmem:[#allocation2 + $0x51] sm:$0xff] %v914
    %923 = vst [vmem:[#allocation2 + $0x61] sm:$0xff] %v915
    %924 = vst [vmem:[#allocation2 + $0x71] sm:$0xff] %v916
    %v925 = vld [vmem:[#allocation2] sm:$0xff]
    %v926 = vld [vmem:[#allocation2 + $0x10] sm:$0xff]
    %v927 = vld [vmem:[#allocation2 + $0x20] sm:$0xff]
    %v928 = vld [vmem:[#allocation2 + $0x30] sm:$0xff]
    %v929 = vld [vmem:[#allocation2 + $0x40] sm:$0xff]
    %v930 = vld [vmem:[#allocation2 + $0x50] sm:$0xff]
    %v931 = vld [vmem:[#allocation2 + $0x60] sm:$0xff]
    %v932 = vld [vmem:[#allocation2 + $0x70] sm:$0xff]
    %s933 = scalar_lea.vmem [#allocation3], 768
    %v934 = vld [vmem:[%s933] sm:$0xff]
    %v935 = vld [vmem:[%s933 + $0x8] sm:$0xff]
    %v936 = vld [vmem:[%s933 + $0x10] sm:$0xff]
    %v937 = vld [vmem:[%s933 + $0x18] sm:$0xff]
    %v938 = vld [vmem:[%s933 + $0x20] sm:$0xff]
    %v939 = vld [vmem:[%s933 + $0x28] sm:$0xff]
    %v940 = vld [vmem:[%s933 + $0x30] sm:$0xff]
    %v941 = vld [vmem:[%s933 + $0x38] sm:$0xff]
    %v942 = vld [vmem:[%s933 + $0x40] sm:$0xff]
    %v943 = vld [vmem:[%s933 + $0x48] sm:$0xff]
    %v944 = vld [vmem:[%s933 + $0x50] sm:$0xff]
    %v945 = vld [vmem:[%s933 + $0x58] sm:$0xff]
    %v946 = vld [vmem:[%s933 + $0x60] sm:$0xff]
    %v947 = vld [vmem:[%s933 + $0x68] sm:$0xff]
    %v948 = vld [vmem:[%s933 + $0x70] sm:$0xff]
    %v949 = vld [vmem:[%s933 + $0x78] sm:$0xff]
    %v950 = vld [vmem:[#allocation2 + $0x1] sm:$0xff]
    %v951 = vld [vmem:[#allocation2 + $0x11] sm:$0xff]
    %v952 = vld [vmem:[#allocation2 + $0x21] sm:$0xff]
    %v953 = vld [vmem:[#allocation2 + $0x31] sm:$0xff]
    %v954 = vld [vmem:[#allocation2 + $0x41] sm:$0xff]
    %v955 = vld [vmem:[#allocation2 + $0x51] sm:$0xff]
    %v956 = vld [vmem:[#allocation2 + $0x61] sm:$0xff]
    %v957 = vld [vmem:[#allocation2 + $0x71] sm:$0xff]
    %s958 = scalar_lea.vmem [#allocation3], 896
    %v959 = vld [vmem:[%s958] sm:$0xff]
    %v960 = vld [vmem:[%s958 + $0x8] sm:$0xff]
    %v961 = vld [vmem:[%s958 + $0x10] sm:$0xff]
    %v962 = vld [vmem:[%s958 + $0x18] sm:$0xff]
    %v963 = vld [vmem:[%s958 + $0x20] sm:$0xff]
    %v964 = vld [vmem:[%s958 + $0x28] sm:$0xff]
    %v965 = vld [vmem:[%s958 + $0x30] sm:$0xff]
    %v966 = vld [vmem:[%s958 + $0x38] sm:$0xff]
    %v967 = vld [vmem:[%s958 + $0x40] sm:$0xff]
    %v968 = vld [vmem:[%s958 + $0x48] sm:$0xff]
    %v969 = vld [vmem:[%s958 + $0x50] sm:$0xff]
    %v970 = vld [vmem:[%s958 + $0x58] sm:$0xff]
    %v971 = vld [vmem:[%s958 + $0x60] sm:$0xff]
    %v972 = vld [vmem:[%s958 + $0x68] sm:$0xff]
    %v973 = vld [vmem:[%s958 + $0x70] sm:$0xff]
    %v974 = vld [vmem:[%s958 + $0x78] sm:$0xff]
    %975 = vmatprep.subr.mxu0 0.0
    %976 = vmatpush1.msra.mxu0 %v959
    %977 = vmatprep.subr.mxu0 0.0
    %978 = vmatpush1.msra.mxu0 %v960
    %979 = vmatprep.subr.mxu0 0.0
    %980 = vmatpush1.msra.mxu0 %v961
    %981 = vmatprep.subr.mxu0 0.0
    %982 = vmatpush1.msra.mxu0 %v962
    %983 = vmatprep.subr.mxu0 0.0
    %984 = vmatpush1.msra.mxu0 %v963
    %985 = vmatprep.subr.mxu0 0.0
    %986 = vmatpush1.msra.mxu0 %v964
    %987 = vmatprep.subr.mxu0 0.0
    %988 = vmatpush1.msra.mxu0 %v965
    %989 = vmatprep.subr.mxu0 0.0
    %990 = vmatpush1.msra.mxu0 %v966
    %991 = vmatprep.subr.mxu0 0.0
    %992 = vmatpush1.msra.mxu0 %v967
    %993 = vmatprep.subr.mxu0 0.0
    %994 = vmatpush1.msra.mxu0 %v968
    %995 = vmatprep.subr.mxu0 0.0
    %996 = vmatpush1.msra.mxu0 %v969
    %997 = vmatprep.subr.mxu0 0.0
    %998 = vmatpush1.msra.mxu0 %v970
    %999 = vmatprep.subr.mxu0 0.0
    %1000 = vmatpush1.msra.mxu0 %v971
    %1001 = vmatprep.subr.mxu0 0.0
    %1002 = vmatpush1.msra.mxu0 %v972
    %1003 = vmatprep.subr.mxu0 0.0
    %1004 = vmatpush1.msra.mxu0 %v973
    %1005 = vmatprep.subr.mxu0 0.0
    %1006 = vmatpush1.msra.mxu0 %v974
    %1007 = vmatprep.subr.mxu0 0.0
    %1008 = vmatpush1.msra.mxu0 0.0
    %1009 = vmatprep.subr.mxu0 0.0
    %1010 = vmatpush1.msra.mxu0 0.0
    %1011 = vmatprep.subr.mxu0 0.0
    %1012 = vmatpush1.msra.mxu0 0.0
    %1013 = vmatprep.subr.mxu0 0.0
    %1014 = vmatpush1.msra.mxu0 0.0
    %1015 = vmatprep.subr.mxu0 0.0
    %1016 = vmatpush1.msra.mxu0 0.0
    %1017 = vmatprep.subr.mxu0 0.0
    %1018 = vmatpush1.msra.mxu0 0.0
    %1019 = vmatprep.subr.mxu0 0.0
    %1020 = vmatpush1.msra.mxu0 0.0
    %1021 = vmatprep.subr.mxu0 0.0
    %1022 = vmatpush1.msra.mxu0 0.0
    %1023 = vmatprep.subr.mxu0 0.0
    %1024 = vmatpush1.msra.mxu0 0.0
    %1025 = vmatprep.subr.mxu0 0.0
    %1026 = vmatpush1.msra.mxu0 0.0
    %1027 = vmatprep.subr.mxu0 0.0
    %1028 = vmatpush1.msra.mxu0 0.0
    %1029 = vmatprep.subr.mxu0 0.0
    %1030 = vmatpush1.msra.mxu0 0.0
    %1031 = vmatprep.subr.mxu0 0.0
    %1032 = vmatpush1.msra.mxu0 0.0
    %1033 = vmatprep.subr.mxu0 0.0
    %1034 = vmatpush1.msra.mxu0 0.0
    %1035 = vmatprep.subr.mxu0 0.0
    %1036 = vmatpush1.msra.mxu0 0.0
    %1037 = vmatprep.subr.mxu0 0.0
    %1038 = vmatpush1.msra.mxu0 0.0
    %1039 = vmatprep.mubr.f32.mxu0 0.0
    %1040 = vmatmul.mubr.f32.gmra.mrb[0].mxu0 %v950
    %v1041 = vpop.f32.mrb[0].mxu0
    %v1042 = vadd.f32 0.0, %v1041
    %v1043 = vpop.f32.mrb[0].mxu0
    %1044 = vmatprep.mubr.f32.mxu0 0.0
    %1045 = vmatmul.mubr.f32.gmra.mrb[0].mxu0 %v951
    %v1046 = vpop.f32.mrb[0].mxu0
    %v1047 = vadd.f32 0.0, %v1046
    %v1048 = vpop.f32.mrb[0].mxu0
    %1049 = vmatprep.mubr.f32.mxu0 0.0
    %1050 = vmatmul.mubr.f32.gmra.mrb[0].mxu0 %v952
    %v1051 = vpop.f32.mrb[0].mxu0
    %v1052 = vadd.f32 0.0, %v1051
    %v1053 = vpop.f32.mrb[0].mxu0
    %1054 = vmatprep.mubr.f32.mxu0 0.0
    %1055 = vmatmul.mubr.f32.gmra.mrb[0].mxu0 %v953
    %v1056 = vpop.f32.mrb[0].mxu0
    %v1057 = vadd.f32 0.0, %v1056
    %v1058 = vpop.f32.mrb[0].mxu0
    %1059 = vmatprep.mubr.f32.mxu0 0.0
    %1060 = vmatmul.mubr.f32.gmra.mrb[0].mxu0 %v954
    %v1061 = vpop.f32.mrb[0].mxu0
    %v1062 = vadd.f32 0.0, %v1061
    %v1063 = vpop.f32.mrb[0].mxu0
    %1064 = vmatprep.mubr.f32.mxu0 0.0
    %1065 = vmatmul.mubr.f32.gmra.mrb[0].mxu0 %v955
    %v1066 = vpop.f32.mrb[0].mxu0
    %v1067 = vadd.f32 0.0, %v1066
    %v1068 = vpop.f32.mrb[0].mxu0
    %1069 = vmatprep.mubr.f32.mxu0 0.0
    %1070 = vmatmul.mubr.f32.gmra.mrb[0].mxu0 %v956
    %v1071 = vpop.f32.mrb[0].mxu0
    %v1072 = vadd.f32 0.0, %v1071
    %v1073 = vpop.f32.mrb[0].mxu0
    %1074 = vmatprep.mubr.f32.mxu0 0.0
    %1075 = vmatmul.mubr.f32.gmra.mrb[0].mxu0 %v957
    %v1076 = vpop.f32.mrb[0].mxu0
    %v1077 = vadd.f32 0.0, %v1076
    %v1078 = vpop.f32.mrb[0].mxu0
    %1079 = vdwg.mxu0
    %1080 = vmatprep.subr.mxu0 0.0
    %1081 = vmatpush1.msra.mxu0 %v934
    %1082 = vmatprep.subr.mxu0 0.0
    %1083 = vmatpush1.msra.mxu0 %v935
    %1084 = vmatprep.subr.mxu0 0.0
    %1085 = vmatpush1.msra.mxu0 %v936
    %1086 = vmatprep.subr.mxu0 0.0
    %1087 = vmatpush1.msra.mxu0 %v937
    %1088 = vmatprep.subr.mxu0 0.0
    %1089 = vmatpush1.msra.mxu0 %v938
    %1090 = vmatprep.subr.mxu0 0.0
    %1091 = vmatpush1.msra.mxu0 %v939
    %1092 = vmatprep.subr.mxu0 0.0
    %1093 = vmatpush1.msra.mxu0 %v940
    %1094 = vmatprep.subr.mxu0 0.0
    %1095 = vmatpush1.msra.mxu0 %v941
    %1096 = vmatprep.subr.mxu0 0.0
    %1097 = vmatpush1.msra.mxu0 %v942
    %1098 = vmatprep.subr.mxu0 0.0
    %1099 = vmatpush1.msra.mxu0 %v943
    %1100 = vmatprep.subr.mxu0 0.0
    %1101 = vmatpush1.msra.mxu0 %v944
    %1102 = vmatprep.subr.mxu0 0.0
    %1103 = vmatpush1.msra.mxu0 %v945
    %1104 = vmatprep.subr.mxu0 0.0
    %1105 = vmatpush1.msra.mxu0 %v946
    %1106 = vmatprep.subr.mxu0 0.0
    %1107 = vmatpush1.msra.mxu0 %v947
    %1108 = vmatprep.subr.mxu0 0.0
    %1109 = vmatpush1.msra.mxu0 %v948
    %1110 = vmatprep.subr.mxu0 0.0
    %1111 = vmatpush1.msra.mxu0 %v949
    %1112 = vmatprep.subr.mxu0 0.0
    %1113 = vmatpush1.msra.mxu0 0.0
    %1114 = vmatprep.subr.mxu0 0.0
    %1115 = vmatpush1.msra.mxu0 0.0
    %1116 = vmatprep.subr.mxu0 0.0
    %1117 = vmatpush1.msra.mxu0 0.0
    %1118 = vmatprep.subr.mxu0 0.0
    %1119 = vmatpush1.msra.mxu0 0.0
    %1120 = vmatprep.subr.mxu0 0.0
    %1121 = vmatpush1.msra.mxu0 0.0
    %1122 = vmatprep.subr.mxu0 0.0
    %1123 = vmatpush1.msra.mxu0 0.0
    %1124 = vmatprep.subr.mxu0 0.0
    %1125 = vmatpush1.msra.mxu0 0.0
    %1126 = vmatprep.subr.mxu0 0.0
    %1127 = vmatpush1.msra.mxu0 0.0
    %1128 = vmatprep.subr.mxu0 0.0
    %1129 = vmatpush1.msra.mxu0 0.0
    %1130 = vmatprep.subr.mxu0 0.0
    %1131 = vmatpush1.msra.mxu0 0.0
    %1132 = vmatprep.subr.mxu0 0.0
    %1133 = vmatpush1.msra.mxu0 0.0
    %1134 = vmatprep.subr.mxu0 0.0
    %1135 = vmatpush1.msra.mxu0 0.0
    %1136 = vmatprep.subr.mxu0 0.0
    %1137 = vmatpush1.msra.mxu0 0.0
    %1138 = vmatprep.subr.mxu0 0.0
    %1139 = vmatpush1.msra.mxu0 0.0
    %1140 = vmatprep.subr.mxu0 0.0
    %1141 = vmatpush1.msra.mxu0 0.0
    %1142 = vmatprep.subr.mxu0 0.0
    %1143 = vmatpush1.msra.mxu0 0.0
    %1144 = vmatprep.mubr.f32.mxu0 0.0
    %1145 = vmatmul.mubr.f32.gmra.mrb[0].mxu0 %v925
    %v1146 = vpop.f32.mrb[0].mxu0
    %v1147 = vadd.f32 %v1042, %v1146
    %v1148 = vpop.f32.mrb[0].mxu0
    %1149 = vmatprep.mubr.f32.mxu0 0.0
    %1150 = vmatmul.mubr.f32.gmra.mrb[0].mxu0 %v926
    %v1151 = vpop.f32.mrb[0].mxu0
    %v1152 = vadd.f32 %v1047, %v1151
    %v1153 = vpop.f32.mrb[0].mxu0
    %1154 = vmatprep.mubr.f32.mxu0 0.0
    %1155 = vmatmul.mubr.f32.gmra.mrb[0].mxu0 %v927
    %v1156 = vpop.f32.mrb[0].mxu0
    %v1157 = vadd.f32 %v1052, %v1156
    %v1158 = vpop.f32.mrb[0].mxu0
    %1159 = vmatprep.mubr.f32.mxu0 0.0
    %1160 = vmatmul.mubr.f32.gmra.mrb[0].mxu0 %v928
    %v1161 = vpop.f32.mrb[0].mxu0
    %v1162 = vadd.f32 %v1057, %v1161
    %v1163 = vpop.f32.mrb[0].mxu0
    %1164 = vmatprep.mubr.f32.mxu0 0.0
    %1165 = vmatmul.mubr.f32.gmra.mrb[0].mxu0 %v929
    %v1166 = vpop.f32.mrb[0].mxu0
    %v1167 = vadd.f32 %v1062, %v1166
    %v1168 = vpop.f32.mrb[0].mxu0
    %1169 = vmatprep.mubr.f32.mxu0 0.0
    %1170 = vmatmul.mubr.f32.gmra.mrb[0].mxu0 %v930
    %v1171 = vpop.f32.mrb[0].mxu0
    %v1172 = vadd.f32 %v1067, %v1171
    %v1173 = vpop.f32.mrb[0].mxu0
    %1174 = vmatprep.mubr.f32.mxu0 0.0
    %1175 = vmatmul.mubr.f32.gmra.mrb[0].mxu0 %v931
    %v1176 = vpop.f32.mrb[0].mxu0
    %v1177 = vadd.f32 %v1072, %v1176
    %v1178 = vpop.f32.mrb[0].mxu0
    %1179 = vmatprep.mubr.f32.mxu0 0.0
    %1180 = vmatmul.mubr.f32.gmra.mrb[0].mxu0 %v932
    %v1181 = vpop.f32.mrb[0].mxu0
    %v1182 = vadd.f32 %v1077, %v1181
    %v1183 = vpop.f32.mrb[0].mxu0
    %1184 = vdwg.mxu0
    %v1185 = vld [vmem:[#allocation2 + $0x2] sm:$0xff]
    %v1186 = vld [vmem:[#allocation2 + $0x12] sm:$0xff]
    %v1187 = vld [vmem:[#allocation2 + $0x22] sm:$0xff]
    %v1188 = vld [vmem:[#allocation2 + $0x32] sm:$0xff]
    %v1189 = vld [vmem:[#allocation2 + $0x42] sm:$0xff]
    %v1190 = vld [vmem:[#allocation2 + $0x52] sm:$0xff]
    %v1191 = vld [vmem:[#allocation2 + $0x62] sm:$0xff]
    %v1192 = vld [vmem:[#allocation2 + $0x72] sm:$0xff]
    %s1193 = scalar_lea.vmem [#allocation3], 1024
    %v1194 = vld [vmem:[%s1193] sm:$0xff]
    %v1195 = vld [vmem:[%s1193 + $0x8] sm:$0xff]
    %v1196 = vld [vmem:[%s1193 + $0x10] sm:$0xff]
    %v1197 = vld [vmem:[%s1193 + $0x18] sm:$0xff]
    %v1198 = vld [vmem:[%s1193 + $0x20] sm:$0xff]
    %v1199 = vld [vmem:[%s1193 + $0x28] sm:$0xff]
    %v1200 = vld [vmem:[%s1193 + $0x30] sm:$0xff]
    %v1201 = vld [vmem:[%s1193 + $0x38] sm:$0xff]
    %v1202 = vld [vmem:[%s1193 + $0x40] sm:$0xff]
    %v1203 = vld [vmem:[%s1193 + $0x48] sm:$0xff]
    %v1204 = vld [vmem:[%s1193 + $0x50] sm:$0xff]
    %v1205 = vld [vmem:[%s1193 + $0x58] sm:$0xff]
    %v1206 = vld [vmem:[%s1193 + $0x60] sm:$0xff]
    %v1207 = vld [vmem:[%s1193 + $0x68] sm:$0xff]
    %v1208 = vld [vmem:[%s1193 + $0x70] sm:$0xff]
    %v1209 = vld [vmem:[%s1193 + $0x78] sm:$0xff]
    %1210 = vmatprep.subr.mxu0 0.0
    %1211 = vmatpush1.msra.mxu0 %v1194
    %1212 = vmatprep.subr.mxu0 0.0
    %1213 = vmatpush1.msra.mxu0 %v1195
    %1214 = vmatprep.subr.mxu0 0.0
    %1215 = vmatpush1.msra.mxu0 %v1196
    %1216 = vmatprep.subr.mxu0 0.0
    %1217 = vmatpush1.msra.mxu0 %v1197
    %1218 = vmatprep.subr.mxu0 0.0
    %1219 = vmatpush1.msra.mxu0 %v1198
    %1220 = vmatprep.subr.mxu0 0.0
    %1221 = vmatpush1.msra.mxu0 %v1199
    %1222 = vmatprep.subr.mxu0 0.0
    %1223 = vmatpush1.msra.mxu0 %v1200
    %1224 = vmatprep.subr.mxu0 0.0
    %1225 = vmatpush1.msra.mxu0 %v1201
    %1226 = vmatprep.subr.mxu0 0.0
    %1227 = vmatpush1.msra.mxu0 %v1202
    %1228 = vmatprep.subr.mxu0 0.0
    %1229 = vmatpush1.msra.mxu0 %v1203
    %1230 = vmatprep.subr.mxu0 0.0
    %1231 = vmatpush1.msra.mxu0 %v1204
    %1232 = vmatprep.subr.mxu0 0.0
    %1233 = vmatpush1.msra.mxu0 %v1205
    %1234 = vmatprep.subr.mxu0 0.0
    %1235 = vmatpush1.msra.mxu0 %v1206
    %1236 = vmatprep.subr.mxu0 0.0
    %1237 = vmatpush1.msra.mxu0 %v1207
    %1238 = vmatprep.subr.mxu0 0.0
    %1239 = vmatpush1.msra.mxu0 %v1208
    %1240 = vmatprep.subr.mxu0 0.0
    %1241 = vmatpush1.msra.mxu0 %v1209
    %1242 = vmatprep.subr.mxu0 0.0
    %1243 = vmatpush1.msra.mxu0 0.0
    %1244 = vmatprep.subr.mxu0 0.0
    %1245 = vmatpush1.msra.mxu0 0.0
    %1246 = vmatprep.subr.mxu0 0.0
    %1247 = vmatpush1.msra.mxu0 0.0
    %1248 = vmatprep.subr.mxu0 0.0
    %1249 = vmatpush1.msra.mxu0 0.0
    %1250 = vmatprep.subr.mxu0 0.0
    %1251 = vmatpush1.msra.mxu0 0.0
    %1252 = vmatprep.subr.mxu0 0.0
    %1253 = vmatpush1.msra.mxu0 0.0
    %1254 = vmatprep.subr.mxu0 0.0
    %1255 = vmatpush1.msra.mxu0 0.0
    %1256 = vmatprep.subr.mxu0 0.0
    %1257 = vmatpush1.msra.mxu0 0.0
    %1258 = vmatprep.subr.mxu0 0.0
    %1259 = vmatpush1.msra.mxu0 0.0
    %1260 = vmatprep.subr.mxu0 0.0
    %1261 = vmatpush1.msra.mxu0 0.0
    %1262 = vmatprep.subr.mxu0 0.0
    %1263 = vmatpush1.msra.mxu0 0.0
    %1264 = vmatprep.subr.mxu0 0.0
    %1265 = vmatpush1.msra.mxu0 0.0
    %1266 = vmatprep.subr.mxu0 0.0
    %1267 = vmatpush1.msra.mxu0 0.0
    %1268 = vmatprep.subr.mxu0 0.0
    %1269 = vmatpush1.msra.mxu0 0.0
    %1270 = vmatprep.subr.mxu0 0.0
    %1271 = vmatpush1.msra.mxu0 0.0
    %1272 = vmatprep.subr.mxu0 0.0
    %1273 = vmatpush1.msra.mxu0 0.0
    %1274 = vmatprep.mubr.f32.mxu0 0.0
    %1275 = vmatmul.mubr.f32.gmra.mrb[0].mxu0 %v1185
    %v1276 = vpop.f32.mrb[0].mxu0
    %v1277 = vadd.f32 0.0, %v1276
    %v1278 = vpop.f32.mrb[0].mxu0
    %1279 = vmatprep.mubr.f32.mxu0 0.0
    %1280 = vmatmul.mubr.f32.gmra.mrb[0].mxu0 %v1186
    %v1281 = vpop.f32.mrb[0].mxu0
    %v1282 = vadd.f32 0.0, %v1281
    %v1283 = vpop.f32.mrb[0].mxu0
    %1284 = vmatprep.mubr.f32.mxu0 0.0
    %1285 = vmatmul.mubr.f32.gmra.mrb[0].mxu0 %v1187
    %v1286 = vpop.f32.mrb[0].mxu0
    %v1287 = vadd.f32 0.0, %v1286
    %v1288 = vpop.f32.mrb[0].mxu0
    %1289 = vmatprep.mubr.f32.mxu0 0.0
    %1290 = vmatmul.mubr.f32.gmra.mrb[0].mxu0 %v1188
    %v1291 = vpop.f32.mrb[0].mxu0
    %v1292 = vadd.f32 0.0, %v1291
    %v1293 = vpop.f32.mrb[0].mxu0
    %1294 = vmatprep.mubr.f32.mxu0 0.0
    %1295 = vmatmul.mubr.f32.gmra.mrb[0].mxu0 %v1189
    %v1296 = vpop.f32.mrb[0].mxu0
    %v1297 = vadd.f32 0.0, %v1296
    %v1298 = vpop.f32.mrb[0].mxu0
    %1299 = vmatprep.mubr.f32.mxu0 0.0
    %1300 = vmatmul.mubr.f32.gmra.mrb[0].mxu0 %v1190
    %v1301 = vpop.f32.mrb[0].mxu0
    %v1302 = vadd.f32 0.0, %v1301
    %v1303 = vpop.f32.mrb[0].mxu0
    %1304 = vmatprep.mubr.f32.mxu0 0.0
    %1305 = vmatmul.mubr.f32.gmra.mrb[0].mxu0 %v1191
    %v1306 = vpop.f32.mrb[0].mxu0
    %v1307 = vadd.f32 0.0, %v1306
    %v1308 = vpop.f32.mrb[0].mxu0
    %1309 = vmatprep.mubr.f32.mxu0 0.0
    %1310 = vmatmul.mubr.f32.gmra.mrb[0].mxu0 %v1192
    %v1311 = vpop.f32.mrb[0].mxu0
    %v1312 = vadd.f32 0.0, %v1311
    %v1313 = vpop.f32.mrb[0].mxu0
    %1314 = vdwg.mxu0
    %v1315 = vadd.f32 %v1147, %v1277
    %v1316 = vadd.f32 %v1152, %v1282
    %v1317 = vadd.f32 %v1157, %v1287
    %v1318 = vadd.f32 %v1162, %v1292
    %v1319 = vadd.f32 %v1167, %v1297
    %v1320 = vadd.f32 %v1172, %v1302
    %v1321 = vadd.f32 %v1177, %v1307
    %v1322 = vadd.f32 %v1182, %v1312
    %s1323 = scalar_lea.vmem %s2, 2
    %v1324 = vld [vmem:[%s1323] sm:$0x1]
    %v1326 = vlaneseq
    %v1327 = vshrl.u32 %v1326, 7
    %v1328 = vsub.s32 0, %v1327
    %v1329 = vrot.slane %v1324, %v1328
    %v1331 = vadd.f32 %v1315, %v1329
    %v1332 = vadd.f32 %v1316, %v1329
    %v1333 = vadd.f32 %v1317, %v1329
    %v1334 = vadd.f32 %v1318, %v1329
    %v1335 = vadd.f32 %v1319, %v1329
    %v1336 = vadd.f32 %v1320, %v1329
    %v1337 = vadd.f32 %v1321, %v1329
    %v1338 = vadd.f32 %v1322, %v1329
    %v1339 = vmax.f32 %v1331, 0.0
    %v1340 = vmax.f32 %v1332, 0.0
    %v1341 = vmax.f32 %v1333, 0.0
    %v1342 = vmax.f32 %v1334, 0.0
    %v1343 = vmax.f32 %v1335, 0.0
    %v1344 = vmax.f32 %v1336, 0.0
    %v1345 = vmax.f32 %v1337, 0.0
    %v1346 = vmax.f32 %v1338, 0.0
    %1347 = vst [vmem:[#allocation2 + $0x1] sm:$0xff] %v1339
    %1348 = vst [vmem:[#allocation2 + $0x11] sm:$0xff] %v1340
    %1349 = vst [vmem:[#allocation2 + $0x21] sm:$0xff] %v1341
    %1350 = vst [vmem:[#allocation2 + $0x31] sm:$0xff] %v1342
    %1351 = vst [vmem:[#allocation2 + $0x41] sm:$0xff] %v1343
    %1352 = vst [vmem:[#allocation2 + $0x51] sm:$0xff] %v1344
    %1353 = vst [vmem:[#allocation2 + $0x61] sm:$0xff] %v1345
    %1354 = vst [vmem:[#allocation2 + $0x71] sm:$0xff] %v1346
    %v1355 = vld [vmem:[#allocation2] sm:$0xff]
    %v1356 = vld [vmem:[#allocation2 + $0x10] sm:$0xff]
    %v1357 = vld [vmem:[#allocation2 + $0x20] sm:$0xff]
    %v1358 = vld [vmem:[#allocation2 + $0x30] sm:$0xff]
    %v1359 = vld [vmem:[#allocation2 + $0x40] sm:$0xff]
    %v1360 = vld [vmem:[#allocation2 + $0x50] sm:$0xff]
    %v1361 = vld [vmem:[#allocation2 + $0x60] sm:$0xff]
    %v1362 = vld [vmem:[#allocation2 + $0x70] sm:$0xff]
    %s1363 = scalar_lea.vmem [#allocation3], 1152
    %v1364 = vld [vmem:[%s1363] sm:$0xff]
    %v1365 = vld [vmem:[%s1363 + $0x8] sm:$0xff]
    %v1366 = vld [vmem:[%s1363 + $0x10] sm:$0xff]
    %v1367 = vld [vmem:[%s1363 + $0x18] sm:$0xff]
    %v1368 = vld [vmem:[%s1363 + $0x20] sm:$0xff]
    %v1369 = vld [vmem:[%s1363 + $0x28] sm:$0xff]
    %v1370 = vld [vmem:[%s1363 + $0x30] sm:$0xff]
    %v1371 = vld [vmem:[%s1363 + $0x38] sm:$0xff]
    %v1372 = vld [vmem:[%s1363 + $0x40] sm:$0xff]
    %v1373 = vld [vmem:[%s1363 + $0x48] sm:$0xff]
    %v1374 = vld [vmem:[%s1363 + $0x50] sm:$0xff]
    %v1375 = vld [vmem:[%s1363 + $0x58] sm:$0xff]
    %v1376 = vld [vmem:[%s1363 + $0x60] sm:$0xff]
    %v1377 = vld [vmem:[%s1363 + $0x68] sm:$0xff]
    %v1378 = vld [vmem:[%s1363 + $0x70] sm:$0xff]
    %v1379 = vld [vmem:[%s1363 + $0x78] sm:$0xff]
    %v1380 = vld [vmem:[#allocation2 + $0x1] sm:$0xff]
    %v1381 = vld [vmem:[#allocation2 + $0x11] sm:$0xff]
    %v1382 = vld [vmem:[#allocation2 + $0x21] sm:$0xff]
    %v1383 = vld [vmem:[#allocation2 + $0x31] sm:$0xff]
    %v1384 = vld [vmem:[#allocation2 + $0x41] sm:$0xff]
    %v1385 = vld [vmem:[#allocation2 + $0x51] sm:$0xff]
    %v1386 = vld [vmem:[#allocation2 + $0x61] sm:$0xff]
    %v1387 = vld [vmem:[#allocation2 + $0x71] sm:$0xff]
    %s1388 = scalar_lea.vmem [#allocation3], 1280
    %v1389 = vld [vmem:[%s1388] sm:$0xff]
    %v1390 = vld [vmem:[%s1388 + $0x8] sm:$0xff]
    %v1391 = vld [vmem:[%s1388 + $0x10] sm:$0xff]
    %v1392 = vld [vmem:[%s1388 + $0x18] sm:$0xff]
    %v1393 = vld [vmem:[%s1388 + $0x20] sm:$0xff]
    %v1394 = vld [vmem:[%s1388 + $0x28] sm:$0xff]
    %v1395 = vld [vmem:[%s1388 + $0x30] sm:$0xff]
    %v1396 = vld [vmem:[%s1388 + $0x38] sm:$0xff]
    %v1397 = vld [vmem:[%s1388 + $0x40] sm:$0xff]
    %v1398 = vld [vmem:[%s1388 + $0x48] sm:$0xff]
    %v1399 = vld [vmem:[%s1388 + $0x50] sm:$0xff]
    %v1400 = vld [vmem:[%s1388 + $0x58] sm:$0xff]
    %v1401 = vld [vmem:[%s1388 + $0x60] sm:$0xff]
    %v1402 = vld [vmem:[%s1388 + $0x68] sm:$0xff]
    %v1403 = vld [vmem:[%s1388 + $0x70] sm:$0xff]
    %v1404 = vld [vmem:[%s1388 + $0x78] sm:$0xff]
    %1405 = vmatprep.subr.mxu0 0.0
    %1406 = vmatpush1.msra.mxu0 %v1389
    %1407 = vmatprep.subr.mxu0 0.0
    %1408 = vmatpush1.msra.mxu0 %v1390
    %1409 = vmatprep.subr.mxu0 0.0
    %1410 = vmatpush1.msra.mxu0 %v1391
    %1411 = vmatprep.subr.mxu0 0.0
    %1412 = vmatpush1.msra.mxu0 %v1392
    %1413 = vmatprep.subr.mxu0 0.0
    %1414 = vmatpush1.msra.mxu0 %v1393
    %1415 = vmatprep.subr.mxu0 0.0
    %1416 = vmatpush1.msra.mxu0 %v1394
    %1417 = vmatprep.subr.mxu0 0.0
    %1418 = vmatpush1.msra.mxu0 %v1395
    %1419 = vmatprep.subr.mxu0 0.0
    %1420 = vmatpush1.msra.mxu0 %v1396
    %1421 = vmatprep.subr.mxu0 0.0
    %1422 = vmatpush1.msra.mxu0 %v1397
    %1423 = vmatprep.subr.mxu0 0.0
    %1424 = vmatpush1.msra.mxu0 %v1398
    %1425 = vmatprep.subr.mxu0 0.0
    %1426 = vmatpush1.msra.mxu0 %v1399
    %1427 = vmatprep.subr.mxu0 0.0
    %1428 = vmatpush1.msra.mxu0 %v1400
    %1429 = vmatprep.subr.mxu0 0.0
    %1430 = vmatpush1.msra.mxu0 %v1401
    %1431 = vmatprep.subr.mxu0 0.0
    %1432 = vmatpush1.msra.mxu0 %v1402
    %1433 = vmatprep.subr.mxu0 0.0
    %1434 = vmatpush1.msra.mxu0 %v1403
    %1435 = vmatprep.subr.mxu0 0.0
    %1436 = vmatpush1.msra.mxu0 %v1404
    %1437 = vmatprep.subr.mxu0 0.0
    %1438 = vmatpush1.msra.mxu0 0.0
    %1439 = vmatprep.subr.mxu0 0.0
    %1440 = vmatpush1.msra.mxu0 0.0
    %1441 = vmatprep.subr.mxu0 0.0
    %1442 = vmatpush1.msra.mxu0 0.0
    %1443 = vmatprep.subr.mxu0 0.0
    %1444 = vmatpush1.msra.mxu0 0.0
    %1445 = vmatprep.subr.mxu0 0.0
    %1446 = vmatpush1.msra.mxu0 0.0
    %1447 = vmatprep.subr.mxu0 0.0
    %1448 = vmatpush1.msra.mxu0 0.0
    %1449 = vmatprep.subr.mxu0 0.0
    %1450 = vmatpush1.msra.mxu0 0.0
    %1451 = vmatprep.subr.mxu0 0.0
    %1452 = vmatpush1.msra.mxu0 0.0
    %1453 = vmatprep.subr.mxu0 0.0
    %1454 = vmatpush1.msra.mxu0 0.0
    %1455 = vmatprep.subr.mxu0 0.0
    %1456 = vmatpush1.msra.mxu0 0.0
    %1457 = vmatprep.subr.mxu0 0.0
    %1458 = vmatpush1.msra.mxu0 0.0
    %1459 = vmatprep.subr.mxu0 0.0
    %1460 = vmatpush1.msra.mxu0 0.0
    %1461 = vmatprep.subr.mxu0 0.0
    %1462 = vmatpush1.msra.mxu0 0.0
    %1463 = vmatprep.subr.mxu0 0.0
    %1464 = vmatpush1.msra.mxu0 0.0
    %1465 = vmatprep.subr.mxu0 0.0
    %1466 = vmatpush1.msra.mxu0 0.0
    %1467 = vmatprep.subr.mxu0 0.0
    %1468 = vmatpush1.msra.mxu0 0.0
    %1469 = vmatprep.mubr.f32.mxu0 0.0
    %1470 = vmatmul.mubr.f32.gmra.mrb[0].mxu0 %v1380
    %v1471 = vpop.f32.mrb[0].mxu0
    %v1472 = vadd.f32 0.0, %v1471
    %v1473 = vpop.f32.mrb[0].mxu0
    %1474 = vmatprep.mubr.f32.mxu0 0.0
    %1475 = vmatmul.mubr.f32.gmra.mrb[0].mxu0 %v1381
    %v1476 = vpop.f32.mrb[0].mxu0
    %v1477 = vadd.f32 0.0, %v1476
    %v1478 = vpop.f32.mrb[0].mxu0
    %1479 = vmatprep.mubr.f32.mxu0 0.0
    %1480 = vmatmul.mubr.f32.gmra.mrb[0].mxu0 %v1382
    %v1481 = vpop.f32.mrb[0].mxu0
    %v1482 = vadd.f32 0.0, %v1481
    %v1483 = vpop.f32.mrb[0].mxu0
    %1484 = vmatprep.mubr.f32.mxu0 0.0
    %1485 = vmatmul.mubr.f32.gmra.mrb[0].mxu0 %v1383
    %v1486 = vpop.f32.mrb[0].mxu0
    %v1487 = vadd.f32 0.0, %v1486
    %v1488 = vpop.f32.mrb[0].mxu0
    %1489 = vmatprep.mubr.f32.mxu0 0.0
    %1490 = vmatmul.mubr.f32.gmra.mrb[0].mxu0 %v1384
    %v1491 = vpop.f32.mrb[0].mxu0
    %v1492 = vadd.f32 0.0, %v1491
    %v1493 = vpop.f32.mrb[0].mxu0
    %1494 = vmatprep.mubr.f32.mxu0 0.0
    %1495 = vmatmul.mubr.f32.gmra.mrb[0].mxu0 %v1385
    %v1496 = vpop.f32.mrb[0].mxu0
    %v1497 = vadd.f32 0.0, %v1496
    %v1498 = vpop.f32.mrb[0].mxu0
    %1499 = vmatprep.mubr.f32.mxu0 0.0
    %1500 = vmatmul.mubr.f32.gmra.mrb[0].mxu0 %v1386
    %v1501 = vpop.f32.mrb[0].mxu0
    %v1502 = vadd.f32 0.0, %v1501
    %v1503 = vpop.f32.mrb[0].mxu0
    %1504 = vmatprep.mubr.f32.mxu0 0.0
    %1505 = vmatmul.mubr.f32.gmra.mrb[0].mxu0 %v1387
    %v1506 = vpop.f32.mrb[0].mxu0
    %v1507 = vadd.f32 0.0, %v1506
    %v1508 = vpop.f32.mrb[0].mxu0
    %1509 = vdwg.mxu0
    %1510 = vmatprep.subr.mxu0 0.0
    %1511 = vmatpush1.msra.mxu0 %v1364
    %1512 = vmatprep.subr.mxu0 0.0
    %1513 = vmatpush1.msra.mxu0 %v1365
    %1514 = vmatprep.subr.mxu0 0.0
    %1515 = vmatpush1.msra.mxu0 %v1366
    %1516 = vmatprep.subr.mxu0 0.0
    %1517 = vmatpush1.msra.mxu0 %v1367
    %1518 = vmatprep.subr.mxu0 0.0
    %1519 = vmatpush1.msra.mxu0 %v1368
    %1520 = vmatprep.subr.mxu0 0.0
    %1521 = vmatpush1.msra.mxu0 %v1369
    %1522 = vmatprep.subr.mxu0 0.0
    %1523 = vmatpush1.msra.mxu0 %v1370
    %1524 = vmatprep.subr.mxu0 0.0
    %1525 = vmatpush1.msra.mxu0 %v1371
    %1526 = vmatprep.subr.mxu0 0.0
    %1527 = vmatpush1.msra.mxu0 %v1372
    %1528 = vmatprep.subr.mxu0 0.0
    %1529 = vmatpush1.msra.mxu0 %v1373
    %1530 = vmatprep.subr.mxu0 0.0
    %1531 = vmatpush1.msra.mxu0 %v1374
    %1532 = vmatprep.subr.mxu0 0.0
    %1533 = vmatpush1.msra.mxu0 %v1375
    %1534 = vmatprep.subr.mxu0 0.0
    %1535 = vmatpush1.msra.mxu0 %v1376
    %1536 = vmatprep.subr.mxu0 0.0
    %1537 = vmatpush1.msra.mxu0 %v1377
    %1538 = vmatprep.subr.mxu0 0.0
    %1539 = vmatpush1.msra.mxu0 %v1378
    %1540 = vmatprep.subr.mxu0 0.0
    %1541 = vmatpush1.msra.mxu0 %v1379
    %1542 = vmatprep.subr.mxu0 0.0
    %1543 = vmatpush1.msra.mxu0 0.0
    %1544 = vmatprep.subr.mxu0 0.0
    %1545 = vmatpush1.msra.mxu0 0.0
    %1546 = vmatprep.subr.mxu0 0.0
    %1547 = vmatpush1.msra.mxu0 0.0
    %1548 = vmatprep.subr.mxu0 0.0
    %1549 = vmatpush1.msra.mxu0 0.0
    %1550 = vmatprep.subr.mxu0 0.0
    %1551 = vmatpush1.msra.mxu0 0.0
    %1552 = vmatprep.subr.mxu0 0.0
    %1553 = vmatpush1.msra.mxu0 0.0
    %1554 = vmatprep.subr.mxu0 0.0
    %1555 = vmatpush1.msra.mxu0 0.0
    %1556 = vmatprep.subr.mxu0 0.0
    %1557 = vmatpush1.msra.mxu0 0.0
    %1558 = vmatprep.subr.mxu0 0.0
    %1559 = vmatpush1.msra.mxu0 0.0
    %1560 = vmatprep.subr.mxu0 0.0
    %1561 = vmatpush1.msra.mxu0 0.0
    %1562 = vmatprep.subr.mxu0 0.0
    %1563 = vmatpush1.msra.mxu0 0.0
    %1564 = vmatprep.subr.mxu0 0.0
    %1565 = vmatpush1.msra.mxu0 0.0
    %1566 = vmatprep.subr.mxu0 0.0
    %1567 = vmatpush1.msra.mxu0 0.0
    %1568 = vmatprep.subr.mxu0 0.0
    %1569 = vmatpush1.msra.mxu0 0.0
    %1570 = vmatprep.subr.mxu0 0.0
    %1571 = vmatpush1.msra.mxu0 0.0
    %1572 = vmatprep.subr.mxu0 0.0
    %1573 = vmatpush1.msra.mxu0 0.0
    %1574 = vmatprep.mubr.f32.mxu0 0.0
    %1575 = vmatmul.mubr.f32.gmra.mrb[0].mxu0 %v1355
    %v1576 = vpop.f32.mrb[0].mxu0
    %v1577 = vadd.f32 %v1472, %v1576
    %v1578 = vpop.f32.mrb[0].mxu0
    %1579 = vmatprep.mubr.f32.mxu0 0.0
    %1580 = vmatmul.mubr.f32.gmra.mrb[0].mxu0 %v1356
    %v1581 = vpop.f32.mrb[0].mxu0
    %v1582 = vadd.f32 %v1477, %v1581
    %v1583 = vpop.f32.mrb[0].mxu0
    %1584 = vmatprep.mubr.f32.mxu0 0.0
    %1585 = vmatmul.mubr.f32.gmra.mrb[0].mxu0 %v1357
    %v1586 = vpop.f32.mrb[0].mxu0
    %v1587 = vadd.f32 %v1482, %v1586
    %v1588 = vpop.f32.mrb[0].mxu0
    %1589 = vmatprep.mubr.f32.mxu0 0.0
    %1590 = vmatmul.mubr.f32.gmra.mrb[0].mxu0 %v1358
    %v1591 = vpop.f32.mrb[0].mxu0
    %v1592 = vadd.f32 %v1487, %v1591
    %v1593 = vpop.f32.mrb[0].mxu0
    %1594 = vmatprep.mubr.f32.mxu0 0.0
    %1595 = vmatmul.mubr.f32.gmra.mrb[0].mxu0 %v1359
    %v1596 = vpop.f32.mrb[0].mxu0
    %v1597 = vadd.f32 %v1492, %v1596
    %v1598 = vpop.f32.mrb[0].mxu0
    %1599 = vmatprep.mubr.f32.mxu0 0.0
    %1600 = vmatmul.mubr.f32.gmra.mrb[0].mxu0 %v1360
    %v1601 = vpop.f32.mrb[0].mxu0
    %v1602 = vadd.f32 %v1497, %v1601
    %v1603 = vpop.f32.mrb[0].mxu0
    %1604 = vmatprep.mubr.f32.mxu0 0.0
    %1605 = vmatmul.mubr.f32.gmra.mrb[0].mxu0 %v1361
    %v1606 = vpop.f32.mrb[0].mxu0
    %v1607 = vadd.f32 %v1502, %v1606
    %v1608 = vpop.f32.mrb[0].mxu0
    %1609 = vmatprep.mubr.f32.mxu0 0.0
    %1610 = vmatmul.mubr.f32.gmra.mrb[0].mxu0 %v1362
    %v1611 = vpop.f32.mrb[0].mxu0
    %v1612 = vadd.f32 %v1507, %v1611
    %v1613 = vpop.f32.mrb[0].mxu0
    %1614 = vdwg.mxu0
    %v1615 = vld [vmem:[#allocation2 + $0x2] sm:$0xff]
    %v1616 = vld [vmem:[#allocation2 + $0x12] sm:$0xff]
    %v1617 = vld [vmem:[#allocation2 + $0x22] sm:$0xff]
    %v1618 = vld [vmem:[#allocation2 + $0x32] sm:$0xff]
    %v1619 = vld [vmem:[#allocation2 + $0x42] sm:$0xff]
    %v1620 = vld [vmem:[#allocation2 + $0x52] sm:$0xff]
    %v1621 = vld [vmem:[#allocation2 + $0x62] sm:$0xff]
    %v1622 = vld [vmem:[#allocation2 + $0x72] sm:$0xff]
    %s1623 = scalar_lea.vmem [#allocation3], 1408
    %v1624 = vld [vmem:[%s1623] sm:$0xff]
    %v1625 = vld [vmem:[%s1623 + $0x8] sm:$0xff]
    %v1626 = vld [vmem:[%s1623 + $0x10] sm:$0xff]
    %v1627 = vld [vmem:[%s1623 + $0x18] sm:$0xff]
    %v1628 = vld [vmem:[%s1623 + $0x20] sm:$0xff]
    %v1629 = vld [vmem:[%s1623 + $0x28] sm:$0xff]
    %v1630 = vld [vmem:[%s1623 + $0x30] sm:$0xff]
    %v1631 = vld [vmem:[%s1623 + $0x38] sm:$0xff]
    %v1632 = vld [vmem:[%s1623 + $0x40] sm:$0xff]
    %v1633 = vld [vmem:[%s1623 + $0x48] sm:$0xff]
    %v1634 = vld [vmem:[%s1623 + $0x50] sm:$0xff]
    %v1635 = vld [vmem:[%s1623 + $0x58] sm:$0xff]
    %v1636 = vld [vmem:[%s1623 + $0x60] sm:$0xff]
    %v1637 = vld [vmem:[%s1623 + $0x68] sm:$0xff]
    %v1638 = vld [vmem:[%s1623 + $0x70] sm:$0xff]
    %v1639 = vld [vmem:[%s1623 + $0x78] sm:$0xff]
    %1640 = vmatprep.subr.mxu0 0.0
    %1641 = vmatpush1.msra.mxu0 %v1624
    %1642 = vmatprep.subr.mxu0 0.0
    %1643 = vmatpush1.msra.mxu0 %v1625
    %1644 = vmatprep.subr.mxu0 0.0
    %1645 = vmatpush1.msra.mxu0 %v1626
    %1646 = vmatprep.subr.mxu0 0.0
    %1647 = vmatpush1.msra.mxu0 %v1627
    %1648 = vmatprep.subr.mxu0 0.0
    %1649 = vmatpush1.msra.mxu0 %v1628
    %1650 = vmatprep.subr.mxu0 0.0
    %1651 = vmatpush1.msra.mxu0 %v1629
    %1652 = vmatprep.subr.mxu0 0.0
    %1653 = vmatpush1.msra.mxu0 %v1630
    %1654 = vmatprep.subr.mxu0 0.0
    %1655 = vmatpush1.msra.mxu0 %v1631
    %1656 = vmatprep.subr.mxu0 0.0
    %1657 = vmatpush1.msra.mxu0 %v1632
    %1658 = vmatprep.subr.mxu0 0.0
    %1659 = vmatpush1.msra.mxu0 %v1633
    %1660 = vmatprep.subr.mxu0 0.0
    %1661 = vmatpush1.msra.mxu0 %v1634
    %1662 = vmatprep.subr.mxu0 0.0
    %1663 = vmatpush1.msra.mxu0 %v1635
    %1664 = vmatprep.subr.mxu0 0.0
    %1665 = vmatpush1.msra.mxu0 %v1636
    %1666 = vmatprep.subr.mxu0 0.0
    %1667 = vmatpush1.msra.mxu0 %v1637
    %1668 = vmatprep.subr.mxu0 0.0
    %1669 = vmatpush1.msra.mxu0 %v1638
    %1670 = vmatprep.subr.mxu0 0.0
    %1671 = vmatpush1.msra.mxu0 %v1639
    %1672 = vmatprep.subr.mxu0 0.0
    %1673 = vmatpush1.msra.mxu0 0.0
    %1674 = vmatprep.subr.mxu0 0.0
    %1675 = vmatpush1.msra.mxu0 0.0
    %1676 = vmatprep.subr.mxu0 0.0
    %1677 = vmatpush1.msra.mxu0 0.0
    %1678 = vmatprep.subr.mxu0 0.0
    %1679 = vmatpush1.msra.mxu0 0.0
    %1680 = vmatprep.subr.mxu0 0.0
    %1681 = vmatpush1.msra.mxu0 0.0
    %1682 = vmatprep.subr.mxu0 0.0
    %1683 = vmatpush1.msra.mxu0 0.0
    %1684 = vmatprep.subr.mxu0 0.0
    %1685 = vmatpush1.msra.mxu0 0.0
    %1686 = vmatprep.subr.mxu0 0.0
    %1687 = vmatpush1.msra.mxu0 0.0
    %1688 = vmatprep.subr.mxu0 0.0
    %1689 = vmatpush1.msra.mxu0 0.0
    %1690 = vmatprep.subr.mxu0 0.0
    %1691 = vmatpush1.msra.mxu0 0.0
    %1692 = vmatprep.subr.mxu0 0.0
    %1693 = vmatpush1.msra.mxu0 0.0
    %1694 = vmatprep.subr.mxu0 0.0
    %1695 = vmatpush1.msra.mxu0 0.0
    %1696 = vmatprep.subr.mxu0 0.0
    %1697 = vmatpush1.msra.mxu0 0.0
    %1698 = vmatprep.subr.mxu0 0.0
    %1699 = vmatpush1.msra.mxu0 0.0
    %1700 = vmatprep.subr.mxu0 0.0
    %1701 = vmatpush1.msra.mxu0 0.0
    %1702 = vmatprep.subr.mxu0 0.0
    %1703 = vmatpush1.msra.mxu0 0.0
    %1704 = vmatprep.mubr.f32.mxu0 0.0
    %1705 = vmatmul.mubr.f32.gmra.mrb[0].mxu0 %v1615
    %v1706 = vpop.f32.mrb[0].mxu0
    %v1707 = vadd.f32 0.0, %v1706
    %v1708 = vpop.f32.mrb[0].mxu0
    %1709 = vmatprep.mubr.f32.mxu0 0.0
    %1710 = vmatmul.mubr.f32.gmra.mrb[0].mxu0 %v1616
    %v1711 = vpop.f32.mrb[0].mxu0
    %v1712 = vadd.f32 0.0, %v1711
    %v1713 = vpop.f32.mrb[0].mxu0
    %1714 = vmatprep.mubr.f32.mxu0 0.0
    %1715 = vmatmul.mubr.f32.gmra.mrb[0].mxu0 %v1617
    %v1716 = vpop.f32.mrb[0].mxu0
    %v1717 = vadd.f32 0.0, %v1716
    %v1718 = vpop.f32.mrb[0].mxu0
    %1719 = vmatprep.mubr.f32.mxu0 0.0
    %1720 = vmatmul.mubr.f32.gmra.mrb[0].mxu0 %v1618
    %v1721 = vpop.f32.mrb[0].mxu0
    %v1722 = vadd.f32 0.0, %v1721
    %v1723 = vpop.f32.mrb[0].mxu0
    %1724 = vmatprep.mubr.f32.mxu0 0.0
    %1725 = vmatmul.mubr.f32.gmra.mrb[0].mxu0 %v1619
    %v1726 = vpop.f32.mrb[0].mxu0
    %v1727 = vadd.f32 0.0, %v1726
    %v1728 = vpop.f32.mrb[0].mxu0
    %1729 = vmatprep.mubr.f32.mxu0 0.0
    %1730 = vmatmul.mubr.f32.gmra.mrb[0].mxu0 %v1620
    %v1731 = vpop.f32.mrb[0].mxu0
    %v1732 = vadd.f32 0.0, %v1731
    %v1733 = vpop.f32.mrb[0].mxu0
    %1734 = vmatprep.mubr.f32.mxu0 0.0
    %1735 = vmatmul.mubr.f32.gmra.mrb[0].mxu0 %v1621
    %v1736 = vpop.f32.mrb[0].mxu0
    %v1737 = vadd.f32 0.0, %v1736
    %v1738 = vpop.f32.mrb[0].mxu0
    %1739 = vmatprep.mubr.f32.mxu0 0.0
    %1740 = vmatmul.mubr.f32.gmra.mrb[0].mxu0 %v1622
    %v1741 = vpop.f32.mrb[0].mxu0
    %v1742 = vadd.f32 0.0, %v1741
    %v1743 = vpop.f32.mrb[0].mxu0
    %1744 = vdwg.mxu0
    %v1745 = vadd.f32 %v1577, %v1707
    %v1746 = vadd.f32 %v1582, %v1712
    %v1747 = vadd.f32 %v1587, %v1717
    %v1748 = vadd.f32 %v1592, %v1722
    %v1749 = vadd.f32 %v1597, %v1727
    %v1750 = vadd.f32 %v1602, %v1732
    %v1751 = vadd.f32 %v1607, %v1737
    %v1752 = vadd.f32 %v1612, %v1742
    %s1753 = scalar_lea.vmem %s2, 3
    %v1754 = vld [vmem:[%s1753] sm:$0x1]
    %v1756 = vlaneseq
    %v1757 = vshrl.u32 %v1756, 7
    %v1758 = vsub.s32 0, %v1757
    %v1759 = vrot.slane %v1754, %v1758
    %v1761 = vadd.f32 %v1745, %v1759
    %v1762 = vadd.f32 %v1746, %v1759
    %v1763 = vadd.f32 %v1747, %v1759
    %v1764 = vadd.f32 %v1748, %v1759
    %v1765 = vadd.f32 %v1749, %v1759
    %v1766 = vadd.f32 %v1750, %v1759
    %v1767 = vadd.f32 %v1751, %v1759
    %v1768 = vadd.f32 %v1752, %v1759
    %v1769 = vmax.f32 %v1761, 0.0
    %v1770 = vmax.f32 %v1762, 0.0
    %v1771 = vmax.f32 %v1763, 0.0
    %v1772 = vmax.f32 %v1764, 0.0
    %v1773 = vmax.f32 %v1765, 0.0
    %v1774 = vmax.f32 %v1766, 0.0
    %v1775 = vmax.f32 %v1767, 0.0
    %v1776 = vmax.f32 %v1768, 0.0
    %1777 = vst [vmem:[#allocation2 + $0x1] sm:$0xff] %v1769
    %1778 = vst [vmem:[#allocation2 + $0x11] sm:$0xff] %v1770
    %1779 = vst [vmem:[#allocation2 + $0x21] sm:$0xff] %v1771
    %1780 = vst [vmem:[#allocation2 + $0x31] sm:$0xff] %v1772
    %1781 = vst [vmem:[#allocation2 + $0x41] sm:$0xff] %v1773
    %1782 = vst [vmem:[#allocation2 + $0x51] sm:$0xff] %v1774
    %1783 = vst [vmem:[#allocation2 + $0x61] sm:$0xff] %v1775
    %1784 = vst [vmem:[#allocation2 + $0x71] sm:$0xff] %v1776
    %v1785 = vld [vmem:[#allocation2 + $0x1] sm:$0x1]
    %v1786 = vld [vmem:[#allocation2 + $0x11] sm:$0x1]
    %v1787 = vld [vmem:[#allocation2 + $0x21] sm:$0x1]
    %v1788 = vld [vmem:[#allocation2 + $0x31] sm:$0x1]
    %v1789 = vld [vmem:[#allocation2 + $0x41] sm:$0x1]
    %v1790 = vld [vmem:[#allocation2 + $0x51] sm:$0x1]
    %v1791 = vld [vmem:[#allocation2 + $0x61] sm:$0x1]
    %v1792 = vld [vmem:[#allocation2 + $0x71] sm:$0x1]
    %v1793 = vld [vmem:[%s3] sm:$0xff]
    %v1794 = vld [vmem:[%s3 + $0x8] sm:$0xff]
    %v1795 = vld [vmem:[%s3 + $0x10] sm:$0xff]
    %v1796 = vld [vmem:[%s3 + $0x18] sm:$0xff]
    %v1797 = vld [vmem:[%s3 + $0x20] sm:$0xff]
    %v1798 = vld [vmem:[%s3 + $0x28] sm:$0xff]
    %v1799 = vld [vmem:[%s3 + $0x30] sm:$0xff]
    %v1800 = vld [vmem:[%s3 + $0x38] sm:$0xff]
    %v1801 = vld [vmem:[%s3 + $0x40] sm:$0xff]
    %v1802 = vld [vmem:[%s3 + $0x48] sm:$0xff]
    %v1803 = vld [vmem:[%s3 + $0x50] sm:$0xff]
    %v1804 = vld [vmem:[%s3 + $0x58] sm:$0xff]
    %v1805 = vld [vmem:[%s3 + $0x60] sm:$0xff]
    %v1806 = vld [vmem:[%s3 + $0x68] sm:$0xff]
    %v1807 = vld [vmem:[%s3 + $0x70] sm:$0xff]
    %v1808 = vld [vmem:[%s3 + $0x78] sm:$0xff]
    %v1809 = vld [vmem:[#allocation2 + $0x2] sm:$0x1]
    %v1810 = vld [vmem:[#allocation2 + $0x12] sm:$0x1]
    %v1811 = vld [vmem:[#allocation2 + $0x22] sm:$0x1]
    %v1812 = vld [vmem:[#allocation2 + $0x32] sm:$0x1]
    %v1813 = vld [vmem:[#allocation2 + $0x42] sm:$0x1]
    %v1814 = vld [vmem:[#allocation2 + $0x52] sm:$0x1]
    %v1815 = vld [vmem:[#allocation2 + $0x62] sm:$0x1]
    %v1816 = vld [vmem:[#allocation2 + $0x72] sm:$0x1]
    %s1817 = scalar_lea.vmem %s3, 128
    %v1818 = vld [vmem:[%s1817] sm:$0xff]
    %v1819 = vld [vmem:[%s1817 + $0x8] sm:$0xff]
    %v1820 = vld [vmem:[%s1817 + $0x10] sm:$0xff]
    %v1821 = vld [vmem:[%s1817 + $0x18] sm:$0xff]
    %v1822 = vld [vmem:[%s1817 + $0x20] sm:$0xff]
    %v1823 = vld [vmem:[%s1817 + $0x28] sm:$0xff]
    %v1824 = vld [vmem:[%s1817 + $0x30] sm:$0xff]
    %v1825 = vld [vmem:[%s1817 + $0x38] sm:$0xff]
    %v1826 = vld [vmem:[%s1817 + $0x40] sm:$0xff]
    %v1827 = vld [vmem:[%s1817 + $0x48] sm:$0xff]
    %v1828 = vld [vmem:[%s1817 + $0x50] sm:$0xff]
    %v1829 = vld [vmem:[%s1817 + $0x58] sm:$0xff]
    %v1830 = vld [vmem:[%s1817 + $0x60] sm:$0xff]
    %v1831 = vld [vmem:[%s1817 + $0x68] sm:$0xff]
    %v1832 = vld [vmem:[%s1817 + $0x70] sm:$0xff]
    %v1833 = vld [vmem:[%s1817 + $0x78] sm:$0xff]
    %v1842 = vrot.slane %v1810, 7
    %vm1843 = vcmask 1041409
    %v1844 = vsel %vm1843, %v1842, %v1809
    %v1845 = vrot.slane %v1811, 6
    %vm1846 = vcmask 1042434
    %v1847 = vsel %vm1846, %v1845, %v1844
    %v1848 = vrot.slane %v1812, 5
    %vm1849 = vcmask 1043459
    %v1850 = vsel %vm1849, %v1848, %v1847
    %v1851 = vrot.slane %v1813, 4
    %vm1852 = vcmask 1044484
    %v1853 = vsel %vm1852, %v1851, %v1850
    %v1854 = vrot.slane %v1814, 3
    %vm1855 = vcmask 1045509
    %v1856 = vsel %vm1855, %v1854, %v1853
    %v1857 = vrot.slane %v1815, 2
    %vm1858 = vcmask 1046534
    %v1859 = vsel %vm1858, %v1857, %v1856
    %v1860 = vrot.slane %v1816, 1
    %vm1861 = vcmask 1047559
    %v1862 = vsel %vm1861, %v1860, %v1859
    %1864 = vmatprep.subr.mxu0 0.0
    %1865 = vmatpush1.msra.mxu0 %v1818
    %1866 = vmatprep.subr.mxu0 0.0
    %1867 = vmatpush1.msra.mxu0 %v1819
    %1868 = vmatprep.subr.mxu0 0.0
    %1869 = vmatpush1.msra.mxu0 %v1820
    %1870 = vmatprep.subr.mxu0 0.0
    %1871 = vmatpush1.msra.mxu0 %v1821
    %1872 = vmatprep.subr.mxu0 0.0
    %1873 = vmatpush1.msra.mxu0 %v1822
    %1874 = vmatprep.subr.mxu0 0.0
    %1875 = vmatpush1.msra.mxu0 %v1823
    %1876 = vmatprep.subr.mxu0 0.0
    %1877 = vmatpush1.msra.mxu0 %v1824
    %1878 = vmatprep.subr.mxu0 0.0
    %1879 = vmatpush1.msra.mxu0 %v1825
    %1880 = vmatprep.subr.mxu0 0.0
    %1881 = vmatpush1.msra.mxu0 %v1826
    %1882 = vmatprep.subr.mxu0 0.0
    %1883 = vmatpush1.msra.mxu0 %v1827
    %1884 = vmatprep.subr.mxu0 0.0
    %1885 = vmatpush1.msra.mxu0 %v1828
    %1886 = vmatprep.subr.mxu0 0.0
    %1887 = vmatpush1.msra.mxu0 %v1829
    %1888 = vmatprep.subr.mxu0 0.0
    %1889 = vmatpush1.msra.mxu0 %v1830
    %1890 = vmatprep.subr.mxu0 0.0
    %1891 = vmatpush1.msra.mxu0 %v1831
    %1892 = vmatprep.subr.mxu0 0.0
    %1893 = vmatpush1.msra.mxu0 %v1832
    %1894 = vmatprep.subr.mxu0 0.0
    %1895 = vmatpush1.msra.mxu0 %v1833
    %1896 = vmatprep.subr.mxu0 0.0
    %1897 = vmatpush1.msra.mxu0 0.0
    %1898 = vmatprep.subr.mxu0 0.0
    %1899 = vmatpush1.msra.mxu0 0.0
    %1900 = vmatprep.subr.mxu0 0.0
    %1901 = vmatpush1.msra.mxu0 0.0
    %1902 = vmatprep.subr.mxu0 0.0
    %1903 = vmatpush1.msra.mxu0 0.0
    %1904 = vmatprep.subr.mxu0 0.0
    %1905 = vmatpush1.msra.mxu0 0.0
    %1906 = vmatprep.subr.mxu0 0.0
    %1907 = vmatpush1.msra.mxu0 0.0
    %1908 = vmatprep.subr.mxu0 0.0
    %1909 = vmatpush1.msra.mxu0 0.0
    %1910 = vmatprep.subr.mxu0 0.0
    %1911 = vmatpush1.msra.mxu0 0.0
    %1912 = vmatprep.subr.mxu0 0.0
    %1913 = vmatpush1.msra.mxu0 0.0
    %1914 = vmatprep.subr.mxu0 0.0
    %1915 = vmatpush1.msra.mxu0 0.0
    %1916 = vmatprep.subr.mxu0 0.0
    %1917 = vmatpush1.msra.mxu0 0.0
    %1918 = vmatprep.subr.mxu0 0.0
    %1919 = vmatpush1.msra.mxu0 0.0
    %1920 = vmatprep.subr.mxu0 0.0
    %1921 = vmatpush1.msra.mxu0 0.0
    %1922 = vmatprep.subr.mxu0 0.0
    %1923 = vmatpush1.msra.mxu0 0.0
    %1924 = vmatprep.subr.mxu0 0.0
    %1925 = vmatpush1.msra.mxu0 0.0
    %1926 = vmatprep.subr.mxu0 0.0
    %1927 = vmatpush1.msra.mxu0 0.0
    %1928 = vmatprep.mubr.f32.mxu0 0.0
    %1929 = vmatmul.mubr.f32.gmra.mrb[0].mxu0 %v1862
    %v1930 = vpop.f32.mrb[0].mxu0
    %v1931 = vadd.f32 0.0, %v1930
    %v1932 = vpop.f32.mrb[0].mxu0
    %1933 = vdwg.mxu0
    %v1942 = vrot.slane %v1786, 7
    %v1943 = vsel %vm1843, %v1942, %v1785
    %v1944 = vrot.slane %v1787, 6
    %v1945 = vsel %vm1846, %v1944, %v1943
    %v1946 = vrot.slane %v1788, 5
    %v1947 = vsel %vm1849, %v1946, %v1945
    %v1948 = vrot.slane %v1789, 4
    %v1949 = vsel %vm1852, %v1948, %v1947
    %v1950 = vrot.slane %v1790, 3
    %v1951 = vsel %vm1855, %v1950, %v1949
    %v1952 = vrot.slane %v1791, 2
    %v1953 = vsel %vm1858, %v1952, %v1951
    %v1954 = vrot.slane %v1792, 1
    %v1955 = vsel %vm1861, %v1954, %v1953
    %1957 = vmatprep.subr.mxu0 0.0
    %1958 = vmatpush1.msra.mxu0 %v1793
    %1959 = vmatprep.subr.mxu0 0.0
    %1960 = vmatpush1.msra.mxu0 %v1794
    %1961 = vmatprep.subr.mxu0 0.0
    %1962 = vmatpush1.msra.mxu0 %v1795
    %1963 = vmatprep.subr.mxu0 0.0
    %1964 = vmatpush1.msra.mxu0 %v1796
    %1965 = vmatprep.subr.mxu0 0.0
    %1966 = vmatpush1.msra.mxu0 %v1797
    %1967 = vmatprep.subr.mxu0 0.0
    %1968 = vmatpush1.msra.mxu0 %v1798
    %1969 = vmatprep.subr.mxu0 0.0
    %1970 = vmatpush1.msra.mxu0 %v1799
    %1971 = vmatprep.subr.mxu0 0.0
    %1972 = vmatpush1.msra.mxu0 %v1800
    %1973 = vmatprep.subr.mxu0 0.0
    %1974 = vmatpush1.msra.mxu0 %v1801
    %1975 = vmatprep.subr.mxu0 0.0
    %1976 = vmatpush1.msra.mxu0 %v1802
    %1977 = vmatprep.subr.mxu0 0.0
    %1978 = vmatpush1.msra.mxu0 %v1803
    %1979 = vmatprep.subr.mxu0 0.0
    %1980 = vmatpush1.msra.mxu0 %v1804
    %1981 = vmatprep.subr.mxu0 0.0
    %1982 = vmatpush1.msra.mxu0 %v1805
    %1983 = vmatprep.subr.mxu0 0.0
    %1984 = vmatpush1.msra.mxu0 %v1806
    %1985 = vmatprep.subr.mxu0 0.0
    %1986 = vmatpush1.msra.mxu0 %v1807
    %1987 = vmatprep.subr.mxu0 0.0
    %1988 = vmatpush1.msra.mxu0 %v1808
    %1989 = vmatprep.subr.mxu0 0.0
    %1990 = vmatpush1.msra.mxu0 0.0
    %1991 = vmatprep.subr.mxu0 0.0
    %1992 = vmatpush1.msra.mxu0 0.0
    %1993 = vmatprep.subr.mxu0 0.0
    %1994 = vmatpush1.msra.mxu0 0.0
    %1995 = vmatprep.subr.mxu0 0.0
    %1996 = vmatpush1.msra.mxu0 0.0
    %1997 = vmatprep.subr.mxu0 0.0
    %1998 = vmatpush1.msra.mxu0 0.0
    %1999 = vmatprep.subr.mxu0 0.0
    %2000 = vmatpush1.msra.mxu0 0.0
    %2001 = vmatprep.subr.mxu0 0.0
    %2002 = vmatpush1.msra.mxu0 0.0
    %2003 = vmatprep.subr.mxu0 0.0
    %2004 = vmatpush1.msra.mxu0 0.0
    %2005 = vmatprep.subr.mxu0 0.0
    %2006 = vmatpush1.msra.mxu0 0.0
    %2007 = vmatprep.subr.mxu0 0.0
    %2008 = vmatpush1.msra.mxu0 0.0
    %2009 = vmatprep.subr.mxu0 0.0
    %2010 = vmatpush1.msra.mxu0 0.0
    %2011 = vmatprep.subr.mxu0 0.0
    %2012 = vmatpush1.msra.mxu0 0.0
    %2013 = vmatprep.subr.mxu0 0.0
    %2014 = vmatpush1.msra.mxu0 0.0
    %2015 = vmatprep.subr.mxu0 0.0
    %2016 = vmatpush1.msra.mxu0 0.0
    %2017 = vmatprep.subr.mxu0 0.0
    %2018 = vmatpush1.msra.mxu0 0.0
    %2019 = vmatprep.subr.mxu0 0.0
    %2020 = vmatpush1.msra.mxu0 0.0
    %2021 = vmatprep.mubr.f32.mxu0 0.0
    %2022 = vmatmul.mubr.f32.gmra.mrb[0].mxu0 %v1955
    %v2023 = vpop.f32.mrb[0].mxu0
    %v2024 = vadd.f32 %v1931, %v2023
    %v2025 = vpop.f32.mrb[0].mxu0
    %2026 = vdwg.mxu0
    %v2027 = vld [vmem:[#allocation2 + $0x3] sm:$0x1]
    %v2028 = vld [vmem:[#allocation2 + $0x13] sm:$0x1]
    %v2029 = vld [vmem:[#allocation2 + $0x23] sm:$0x1]
    %v2030 = vld [vmem:[#allocation2 + $0x33] sm:$0x1]
    %v2031 = vld [vmem:[#allocation2 + $0x43] sm:$0x1]
    %v2032 = vld [vmem:[#allocation2 + $0x53] sm:$0x1]
    %v2033 = vld [vmem:[#allocation2 + $0x63] sm:$0x1]
    %v2034 = vld [vmem:[#allocation2 + $0x73] sm:$0x1]
    %s2035 = scalar_lea.vmem %s3, 256
    %v2036 = vld [vmem:[%s2035] sm:$0xff]
    %v2037 = vld [vmem:[%s2035 + $0x8] sm:$0xff]
    %v2038 = vld [vmem:[%s2035 + $0x10] sm:$0xff]
    %v2039 = vld [vmem:[%s2035 + $0x18] sm:$0xff]
    %v2040 = vld [vmem:[%s2035 + $0x20] sm:$0xff]
    %v2041 = vld [vmem:[%s2035 + $0x28] sm:$0xff]
    %v2042 = vld [vmem:[%s2035 + $0x30] sm:$0xff]
    %v2043 = vld [vmem:[%s2035 + $0x38] sm:$0xff]
    %v2044 = vld [vmem:[%s2035 + $0x40] sm:$0xff]
    %v2045 = vld [vmem:[%s2035 + $0x48] sm:$0xff]
    %v2046 = vld [vmem:[%s2035 + $0x50] sm:$0xff]
    %v2047 = vld [vmem:[%s2035 + $0x58] sm:$0xff]
    %v2048 = vld [vmem:[%s2035 + $0x60] sm:$0xff]
    %v2049 = vld [vmem:[%s2035 + $0x68] sm:$0xff]
    %v2050 = vld [vmem:[%s2035 + $0x70] sm:$0xff]
    %v2051 = vld [vmem:[%s2035 + $0x78] sm:$0xff]
    %v2060 = vrot.slane %v2028, 7
    %v2061 = vsel %vm1843, %v2060, %v2027
    %v2062 = vrot.slane %v2029, 6
    %v2063 = vsel %vm1846, %v2062, %v2061
    %v2064 = vrot.slane %v2030, 5
    %v2065 = vsel %vm1849, %v2064, %v2063
    %v2066 = vrot.slane %v2031, 4
    %v2067 = vsel %vm1852, %v2066, %v2065
    %v2068 = vrot.slane %v2032, 3
    %v2069 = vsel %vm1855, %v2068, %v2067
    %v2070 = vrot.slane %v2033, 2
    %v2071 = vsel %vm1858, %v2070, %v2069
    %v2072 = vrot.slane %v2034, 1
    %v2073 = vsel %vm1861, %v2072, %v2071
    %2075 = vmatprep.subr.mxu0 0.0
    %2076 = vmatpush1.msra.mxu0 %v2036
    %2077 = vmatprep.subr.mxu0 0.0
    %2078 = vmatpush1.msra.mxu0 %v2037
    %2079 = vmatprep.subr.mxu0 0.0
    %2080 = vmatpush1.msra.mxu0 %v2038
    %2081 = vmatprep.subr.mxu0 0.0
    %2082 = vmatpush1.msra.mxu0 %v2039
    %2083 = vmatprep.subr.mxu0 0.0
    %2084 = vmatpush1.msra.mxu0 %v2040
    %2085 = vmatprep.subr.mxu0 0.0
    %2086 = vmatpush1.msra.mxu0 %v2041
    %2087 = vmatprep.subr.mxu0 0.0
    %2088 = vmatpush1.msra.mxu0 %v2042
    %2089 = vmatprep.subr.mxu0 0.0
    %2090 = vmatpush1.msra.mxu0 %v2043
    %2091 = vmatprep.subr.mxu0 0.0
    %2092 = vmatpush1.msra.mxu0 %v2044
    %2093 = vmatprep.subr.mxu0 0.0
    %2094 = vmatpush1.msra.mxu0 %v2045
    %2095 = vmatprep.subr.mxu0 0.0
    %2096 = vmatpush1.msra.mxu0 %v2046
    %2097 = vmatprep.subr.mxu0 0.0
    %2098 = vmatpush1.msra.mxu0 %v2047
    %2099 = vmatprep.subr.mxu0 0.0
    %2100 = vmatpush1.msra.mxu0 %v2048
    %2101 = vmatprep.subr.mxu0 0.0
    %2102 = vmatpush1.msra.mxu0 %v2049
    %2103 = vmatprep.subr.mxu0 0.0
    %2104 = vmatpush1.msra.mxu0 %v2050
    %2105 = vmatprep.subr.mxu0 0.0
    %2106 = vmatpush1.msra.mxu0 %v2051
    %2107 = vmatprep.subr.mxu0 0.0
    %2108 = vmatpush1.msra.mxu0 0.0
    %2109 = vmatprep.subr.mxu0 0.0
    %2110 = vmatpush1.msra.mxu0 0.0
    %2111 = vmatprep.subr.mxu0 0.0
    %2112 = vmatpush1.msra.mxu0 0.0
    %2113 = vmatprep.subr.mxu0 0.0
    %2114 = vmatpush1.msra.mxu0 0.0
    %2115 = vmatprep.subr.mxu0 0.0
    %2116 = vmatpush1.msra.mxu0 0.0
    %2117 = vmatprep.subr.mxu0 0.0
    %2118 = vmatpush1.msra.mxu0 0.0
    %2119 = vmatprep.subr.mxu0 0.0
    %2120 = vmatpush1.msra.mxu0 0.0
    %2121 = vmatprep.subr.mxu0 0.0
    %2122 = vmatpush1.msra.mxu0 0.0
    %2123 = vmatprep.subr.mxu0 0.0
    %2124 = vmatpush1.msra.mxu0 0.0
    %2125 = vmatprep.subr.mxu0 0.0
    %2126 = vmatpush1.msra.mxu0 0.0
    %2127 = vmatprep.subr.mxu0 0.0
    %2128 = vmatpush1.msra.mxu0 0.0
    %2129 = vmatprep.subr.mxu0 0.0
    %2130 = vmatpush1.msra.mxu0 0.0
    %2131 = vmatprep.subr.mxu0 0.0
    %2132 = vmatpush1.msra.mxu0 0.0
    %2133 = vmatprep.subr.mxu0 0.0
    %2134 = vmatpush1.msra.mxu0 0.0
    %2135 = vmatprep.subr.mxu0 0.0
    %2136 = vmatpush1.msra.mxu0 0.0
    %2137 = vmatprep.subr.mxu0 0.0
    %2138 = vmatpush1.msra.mxu0 0.0
    %2139 = vmatprep.mubr.f32.mxu0 0.0
    %2140 = vmatmul.mubr.f32.gmra.mrb[0].mxu0 %v2073
    %v2141 = vpop.f32.mrb[0].mxu0
    %v2142 = vadd.f32 0.0, %v2141
    %v2143 = vpop.f32.mrb[0].mxu0
    %2144 = vdwg.mxu0
    %v2145 = vadd.f32 %v2024, %v2142
    %v2146 = vld [vmem:[#allocation2 + $0x4] sm:$0x1]
    %v2147 = vld [vmem:[#allocation2 + $0x14] sm:$0x1]
    %v2148 = vld [vmem:[#allocation2 + $0x24] sm:$0x1]
    %v2149 = vld [vmem:[#allocation2 + $0x34] sm:$0x1]
    %v2150 = vld [vmem:[#allocation2 + $0x44] sm:$0x1]
    %v2151 = vld [vmem:[#allocation2 + $0x54] sm:$0x1]
    %v2152 = vld [vmem:[#allocation2 + $0x64] sm:$0x1]
    %v2153 = vld [vmem:[#allocation2 + $0x74] sm:$0x1]
    %s2154 = scalar_lea.vmem %s3, 384
    %v2155 = vld [vmem:[%s2154] sm:$0xff]
    %v2156 = vld [vmem:[%s2154 + $0x8] sm:$0xff]
    %v2157 = vld [vmem:[%s2154 + $0x10] sm:$0xff]
    %v2158 = vld [vmem:[%s2154 + $0x18] sm:$0xff]
    %v2159 = vld [vmem:[%s2154 + $0x20] sm:$0xff]
    %v2160 = vld [vmem:[%s2154 + $0x28] sm:$0xff]
    %v2161 = vld [vmem:[%s2154 + $0x30] sm:$0xff]
    %v2162 = vld [vmem:[%s2154 + $0x38] sm:$0xff]
    %v2163 = vld [vmem:[%s2154 + $0x40] sm:$0xff]
    %v2164 = vld [vmem:[%s2154 + $0x48] sm:$0xff]
    %v2165 = vld [vmem:[%s2154 + $0x50] sm:$0xff]
    %v2166 = vld [vmem:[%s2154 + $0x58] sm:$0xff]
    %v2167 = vld [vmem:[%s2154 + $0x60] sm:$0xff]
    %v2168 = vld [vmem:[%s2154 + $0x68] sm:$0xff]
    %v2169 = vld [vmem:[%s2154 + $0x70] sm:$0xff]
    %v2170 = vld [vmem:[%s2154 + $0x78] sm:$0xff]
    %v2179 = vrot.slane %v2147, 7
    %v2180 = vsel %vm1843, %v2179, %v2146
    %v2181 = vrot.slane %v2148, 6
    %v2182 = vsel %vm1846, %v2181, %v2180
    %v2183 = vrot.slane %v2149, 5
    %v2184 = vsel %vm1849, %v2183, %v2182
    %v2185 = vrot.slane %v2150, 4
    %v2186 = vsel %vm1852, %v2185, %v2184
    %v2187 = vrot.slane %v2151, 3
    %v2188 = vsel %vm1855, %v2187, %v2186
    %v2189 = vrot.slane %v2152, 2
    %v2190 = vsel %vm1858, %v2189, %v2188
    %v2191 = vrot.slane %v2153, 1
    %v2192 = vsel %vm1861, %v2191, %v2190
    %2194 = vmatprep.subr.mxu0 0.0
    %2195 = vmatpush1.msra.mxu0 %v2155
    %2196 = vmatprep.subr.mxu0 0.0
    %2197 = vmatpush1.msra.mxu0 %v2156
    %2198 = vmatprep.subr.mxu0 0.0
    %2199 = vmatpush1.msra.mxu0 %v2157
    %2200 = vmatprep.subr.mxu0 0.0
    %2201 = vmatpush1.msra.mxu0 %v2158
    %2202 = vmatprep.subr.mxu0 0.0
    %2203 = vmatpush1.msra.mxu0 %v2159
    %2204 = vmatprep.subr.mxu0 0.0
    %2205 = vmatpush1.msra.mxu0 %v2160
    %2206 = vmatprep.subr.mxu0 0.0
    %2207 = vmatpush1.msra.mxu0 %v2161
    %2208 = vmatprep.subr.mxu0 0.0
    %2209 = vmatpush1.msra.mxu0 %v2162
    %2210 = vmatprep.subr.mxu0 0.0
    %2211 = vmatpush1.msra.mxu0 %v2163
    %2212 = vmatprep.subr.mxu0 0.0
    %2213 = vmatpush1.msra.mxu0 %v2164
    %2214 = vmatprep.subr.mxu0 0.0
    %2215 = vmatpush1.msra.mxu0 %v2165
    %2216 = vmatprep.subr.mxu0 0.0
    %2217 = vmatpush1.msra.mxu0 %v2166
    %2218 = vmatprep.subr.mxu0 0.0
    %2219 = vmatpush1.msra.mxu0 %v2167
    %2220 = vmatprep.subr.mxu0 0.0
    %2221 = vmatpush1.msra.mxu0 %v2168
    %2222 = vmatprep.subr.mxu0 0.0
    %2223 = vmatpush1.msra.mxu0 %v2169
    %2224 = vmatprep.subr.mxu0 0.0
    %2225 = vmatpush1.msra.mxu0 %v2170
    %2226 = vmatprep.subr.mxu0 0.0
    %2227 = vmatpush1.msra.mxu0 0.0
    %2228 = vmatprep.subr.mxu0 0.0
    %2229 = vmatpush1.msra.mxu0 0.0
    %2230 = vmatprep.subr.mxu0 0.0
    %2231 = vmatpush1.msra.mxu0 0.0
    %2232 = vmatprep.subr.mxu0 0.0
    %2233 = vmatpush1.msra.mxu0 0.0
    %2234 = vmatprep.subr.mxu0 0.0
    %2235 = vmatpush1.msra.mxu0 0.0
    %2236 = vmatprep.subr.mxu0 0.0
    %2237 = vmatpush1.msra.mxu0 0.0
    %2238 = vmatprep.subr.mxu0 0.0
    %2239 = vmatpush1.msra.mxu0 0.0
    %2240 = vmatprep.subr.mxu0 0.0
    %2241 = vmatpush1.msra.mxu0 0.0
    %2242 = vmatprep.subr.mxu0 0.0
    %2243 = vmatpush1.msra.mxu0 0.0
    %2244 = vmatprep.subr.mxu0 0.0
    %2245 = vmatpush1.msra.mxu0 0.0
    %2246 = vmatprep.subr.mxu0 0.0
    %2247 = vmatpush1.msra.mxu0 0.0
    %2248 = vmatprep.subr.mxu0 0.0
    %2249 = vmatpush1.msra.mxu0 0.0
    %2250 = vmatprep.subr.mxu0 0.0
    %2251 = vmatpush1.msra.mxu0 0.0
    %2252 = vmatprep.subr.mxu0 0.0
    %2253 = vmatpush1.msra.mxu0 0.0
    %2254 = vmatprep.subr.mxu0 0.0
    %2255 = vmatpush1.msra.mxu0 0.0
    %2256 = vmatprep.subr.mxu0 0.0
    %2257 = vmatpush1.msra.mxu0 0.0
    %2258 = vmatprep.mubr.f32.mxu0 0.0
    %2259 = vmatmul.mubr.f32.gmra.mrb[0].mxu0 %v2192
    %v2260 = vpop.f32.mrb[0].mxu0
    %v2261 = vadd.f32 0.0, %v2260
    %v2262 = vpop.f32.mrb[0].mxu0
    %2263 = vdwg.mxu0
    %v2264 = vadd.f32 %v2145, %v2261
    %v2265 = vld [vmem:[#allocation2 + $0x5] sm:$0x1]
    %v2266 = vld [vmem:[#allocation2 + $0x15] sm:$0x1]
    %v2267 = vld [vmem:[#allocation2 + $0x25] sm:$0x1]
    %v2268 = vld [vmem:[#allocation2 + $0x35] sm:$0x1]
    %v2269 = vld [vmem:[#allocation2 + $0x45] sm:$0x1]
    %v2270 = vld [vmem:[#allocation2 + $0x55] sm:$0x1]
    %v2271 = vld [vmem:[#allocation2 + $0x65] sm:$0x1]
    %v2272 = vld [vmem:[#allocation2 + $0x75] sm:$0x1]
    %s2273 = scalar_lea.vmem %s3, 512
    %v2274 = vld [vmem:[%s2273] sm:$0xff]
    %v2275 = vld [vmem:[%s2273 + $0x8] sm:$0xff]
    %v2276 = vld [vmem:[%s2273 + $0x10] sm:$0xff]
    %v2277 = vld [vmem:[%s2273 + $0x18] sm:$0xff]
    %v2278 = vld [vmem:[%s2273 + $0x20] sm:$0xff]
    %v2279 = vld [vmem:[%s2273 + $0x28] sm:$0xff]
    %v2280 = vld [vmem:[%s2273 + $0x30] sm:$0xff]
    %v2281 = vld [vmem:[%s2273 + $0x38] sm:$0xff]
    %v2282 = vld [vmem:[%s2273 + $0x40] sm:$0xff]
    %v2283 = vld [vmem:[%s2273 + $0x48] sm:$0xff]
    %v2284 = vld [vmem:[%s2273 + $0x50] sm:$0xff]
    %v2285 = vld [vmem:[%s2273 + $0x58] sm:$0xff]
    %v2286 = vld [vmem:[%s2273 + $0x60] sm:$0xff]
    %v2287 = vld [vmem:[%s2273 + $0x68] sm:$0xff]
    %v2288 = vld [vmem:[%s2273 + $0x70] sm:$0xff]
    %v2289 = vld [vmem:[%s2273 + $0x78] sm:$0xff]
    %v2298 = vrot.slane %v2266, 7
    %v2299 = vsel %vm1843, %v2298, %v2265
    %v2300 = vrot.slane %v2267, 6
    %v2301 = vsel %vm1846, %v2300, %v2299
    %v2302 = vrot.slane %v2268, 5
    %v2303 = vsel %vm1849, %v2302, %v2301
    %v2304 = vrot.slane %v2269, 4
    %v2305 = vsel %vm1852, %v2304, %v2303
    %v2306 = vrot.slane %v2270, 3
    %v2307 = vsel %vm1855, %v2306, %v2305
    %v2308 = vrot.slane %v2271, 2
    %v2309 = vsel %vm1858, %v2308, %v2307
    %v2310 = vrot.slane %v2272, 1
    %v2311 = vsel %vm1861, %v2310, %v2309
    %2313 = vmatprep.subr.mxu0 0.0
    %2314 = vmatpush1.msra.mxu0 %v2274
    %2315 = vmatprep.subr.mxu0 0.0
    %2316 = vmatpush1.msra.mxu0 %v2275
    %2317 = vmatprep.subr.mxu0 0.0
    %2318 = vmatpush1.msra.mxu0 %v2276
    %2319 = vmatprep.subr.mxu0 0.0
    %2320 = vmatpush1.msra.mxu0 %v2277
    %2321 = vmatprep.subr.mxu0 0.0
    %2322 = vmatpush1.msra.mxu0 %v2278
    %2323 = vmatprep.subr.mxu0 0.0
    %2324 = vmatpush1.msra.mxu0 %v2279
    %2325 = vmatprep.subr.mxu0 0.0
    %2326 = vmatpush1.msra.mxu0 %v2280
    %2327 = vmatprep.subr.mxu0 0.0
    %2328 = vmatpush1.msra.mxu0 %v2281
    %2329 = vmatprep.subr.mxu0 0.0
    %2330 = vmatpush1.msra.mxu0 %v2282
    %2331 = vmatprep.subr.mxu0 0.0
    %2332 = vmatpush1.msra.mxu0 %v2283
    %2333 = vmatprep.subr.mxu0 0.0
    %2334 = vmatpush1.msra.mxu0 %v2284
    %2335 = vmatprep.subr.mxu0 0.0
    %2336 = vmatpush1.msra.mxu0 %v2285
    %2337 = vmatprep.subr.mxu0 0.0
    %2338 = vmatpush1.msra.mxu0 %v2286
    %2339 = vmatprep.subr.mxu0 0.0
    %2340 = vmatpush1.msra.mxu0 %v2287
    %2341 = vmatprep.subr.mxu0 0.0
    %2342 = vmatpush1.msra.mxu0 %v2288
    %2343 = vmatprep.subr.mxu0 0.0
    %2344 = vmatpush1.msra.mxu0 %v2289
    %2345 = vmatprep.subr.mxu0 0.0
    %2346 = vmatpush1.msra.mxu0 0.0
    %2347 = vmatprep.subr.mxu0 0.0
    %2348 = vmatpush1.msra.mxu0 0.0
    %2349 = vmatprep.subr.mxu0 0.0
    %2350 = vmatpush1.msra.mxu0 0.0
    %2351 = vmatprep.subr.mxu0 0.0
    %2352 = vmatpush1.msra.mxu0 0.0
    %2353 = vmatprep.subr.mxu0 0.0
    %2354 = vmatpush1.msra.mxu0 0.0
    %2355 = vmatprep.subr.mxu0 0.0
    %2356 = vmatpush1.msra.mxu0 0.0
    %2357 = vmatprep.subr.mxu0 0.0
    %2358 = vmatpush1.msra.mxu0 0.0
    %2359 = vmatprep.subr.mxu0 0.0
    %2360 = vmatpush1.msra.mxu0 0.0
    %2361 = vmatprep.subr.mxu0 0.0
    %2362 = vmatpush1.msra.mxu0 0.0
    %2363 = vmatprep.subr.mxu0 0.0
    %2364 = vmatpush1.msra.mxu0 0.0
    %2365 = vmatprep.subr.mxu0 0.0
    %2366 = vmatpush1.msra.mxu0 0.0
    %2367 = vmatprep.subr.mxu0 0.0
    %2368 = vmatpush1.msra.mxu0 0.0
    %2369 = vmatprep.subr.mxu0 0.0
    %2370 = vmatpush1.msra.mxu0 0.0
    %2371 = vmatprep.subr.mxu0 0.0
    %2372 = vmatpush1.msra.mxu0 0.0
    %2373 = vmatprep.subr.mxu0 0.0
    %2374 = vmatpush1.msra.mxu0 0.0
    %2375 = vmatprep.subr.mxu0 0.0
    %2376 = vmatpush1.msra.mxu0 0.0
    %2377 = vmatprep.mubr.f32.mxu0 0.0
    %2378 = vmatmul.mubr.f32.gmra.mrb[0].mxu0 %v2311
    %v2379 = vpop.f32.mrb[0].mxu0
    %v2380 = vadd.f32 0.0, %v2379
    %v2381 = vpop.f32.mrb[0].mxu0
    %2382 = vdwg.mxu0
    %v2383 = vadd.f32 %v2264, %v2380
    %v2384 = vld [vmem:[#allocation2 + $0x6] sm:$0x1]
    %v2385 = vld [vmem:[#allocation2 + $0x16] sm:$0x1]
    %v2386 = vld [vmem:[#allocation2 + $0x26] sm:$0x1]
    %v2387 = vld [vmem:[#allocation2 + $0x36] sm:$0x1]
    %v2388 = vld [vmem:[#allocation2 + $0x46] sm:$0x1]
    %v2389 = vld [vmem:[#allocation2 + $0x56] sm:$0x1]
    %v2390 = vld [vmem:[#allocation2 + $0x66] sm:$0x1]
    %v2391 = vld [vmem:[#allocation2 + $0x76] sm:$0x1]
    %s2392 = scalar_lea.vmem %s3, 640
    %v2393 = vld [vmem:[%s2392] sm:$0xff]
    %v2394 = vld [vmem:[%s2392 + $0x8] sm:$0xff]
    %v2395 = vld [vmem:[%s2392 + $0x10] sm:$0xff]
    %v2396 = vld [vmem:[%s2392 + $0x18] sm:$0xff]
    %v2397 = vld [vmem:[%s2392 + $0x20] sm:$0xff]
    %v2398 = vld [vmem:[%s2392 + $0x28] sm:$0xff]
    %v2399 = vld [vmem:[%s2392 + $0x30] sm:$0xff]
    %v2400 = vld [vmem:[%s2392 + $0x38] sm:$0xff]
    %v2401 = vld [vmem:[%s2392 + $0x40] sm:$0xff]
    %v2402 = vld [vmem:[%s2392 + $0x48] sm:$0xff]
    %v2403 = vld [vmem:[%s2392 + $0x50] sm:$0xff]
    %v2404 = vld [vmem:[%s2392 + $0x58] sm:$0xff]
    %v2405 = vld [vmem:[%s2392 + $0x60] sm:$0xff]
    %v2406 = vld [vmem:[%s2392 + $0x68] sm:$0xff]
    %v2407 = vld [vmem:[%s2392 + $0x70] sm:$0xff]
    %v2408 = vld [vmem:[%s2392 + $0x78] sm:$0xff]
    %v2417 = vrot.slane %v2385, 7
    %v2418 = vsel %vm1843, %v2417, %v2384
    %v2419 = vrot.slane %v2386, 6
    %v2420 = vsel %vm1846, %v2419, %v2418
    %v2421 = vrot.slane %v2387, 5
    %v2422 = vsel %vm1849, %v2421, %v2420
    %v2423 = vrot.slane %v2388, 4
    %v2424 = vsel %vm1852, %v2423, %v2422
    %v2425 = vrot.slane %v2389, 3
    %v2426 = vsel %vm1855, %v2425, %v2424
    %v2427 = vrot.slane %v2390, 2
    %v2428 = vsel %vm1858, %v2427, %v2426
    %v2429 = vrot.slane %v2391, 1
    %v2430 = vsel %vm1861, %v2429, %v2428
    %2432 = vmatprep.subr.mxu0 0.0
    %2433 = vmatpush1.msra.mxu0 %v2393
    %2434 = vmatprep.subr.mxu0 0.0
    %2435 = vmatpush1.msra.mxu0 %v2394
    %2436 = vmatprep.subr.mxu0 0.0
    %2437 = vmatpush1.msra.mxu0 %v2395
    %2438 = vmatprep.subr.mxu0 0.0
    %2439 = vmatpush1.msra.mxu0 %v2396
    %2440 = vmatprep.subr.mxu0 0.0
    %2441 = vmatpush1.msra.mxu0 %v2397
    %2442 = vmatprep.subr.mxu0 0.0
    %2443 = vmatpush1.msra.mxu0 %v2398
    %2444 = vmatprep.subr.mxu0 0.0
    %2445 = vmatpush1.msra.mxu0 %v2399
    %2446 = vmatprep.subr.mxu0 0.0
    %2447 = vmatpush1.msra.mxu0 %v2400
    %2448 = vmatprep.subr.mxu0 0.0
    %2449 = vmatpush1.msra.mxu0 %v2401
    %2450 = vmatprep.subr.mxu0 0.0
    %2451 = vmatpush1.msra.mxu0 %v2402
    %2452 = vmatprep.subr.mxu0 0.0
    %2453 = vmatpush1.msra.mxu0 %v2403
    %2454 = vmatprep.subr.mxu0 0.0
    %2455 = vmatpush1.msra.mxu0 %v2404
    %2456 = vmatprep.subr.mxu0 0.0
    %2457 = vmatpush1.msra.mxu0 %v2405
    %2458 = vmatprep.subr.mxu0 0.0
    %2459 = vmatpush1.msra.mxu0 %v2406
    %2460 = vmatprep.subr.mxu0 0.0
    %2461 = vmatpush1.msra.mxu0 %v2407
    %2462 = vmatprep.subr.mxu0 0.0
    %2463 = vmatpush1.msra.mxu0 %v2408
    %2464 = vmatprep.subr.mxu0 0.0
    %2465 = vmatpush1.msra.mxu0 0.0
    %2466 = vmatprep.subr.mxu0 0.0
    %2467 = vmatpush1.msra.mxu0 0.0
    %2468 = vmatprep.subr.mxu0 0.0
    %2469 = vmatpush1.msra.mxu0 0.0
    %2470 = vmatprep.subr.mxu0 0.0
    %2471 = vmatpush1.msra.mxu0 0.0
    %2472 = vmatprep.subr.mxu0 0.0
    %2473 = vmatpush1.msra.mxu0 0.0
    %2474 = vmatprep.subr.mxu0 0.0
    %2475 = vmatpush1.msra.mxu0 0.0
    %2476 = vmatprep.subr.mxu0 0.0
    %2477 = vmatpush1.msra.mxu0 0.0
    %2478 = vmatprep.subr.mxu0 0.0
    %2479 = vmatpush1.msra.mxu0 0.0
    %2480 = vmatprep.subr.mxu0 0.0
    %2481 = vmatpush1.msra.mxu0 0.0
    %2482 = vmatprep.subr.mxu0 0.0
    %2483 = vmatpush1.msra.mxu0 0.0
    %2484 = vmatprep.subr.mxu0 0.0
    %2485 = vmatpush1.msra.mxu0 0.0
    %2486 = vmatprep.subr.mxu0 0.0
    %2487 = vmatpush1.msra.mxu0 0.0
    %2488 = vmatprep.subr.mxu0 0.0
    %2489 = vmatpush1.msra.mxu0 0.0
    %2490 = vmatprep.subr.mxu0 0.0
    %2491 = vmatpush1.msra.mxu0 0.0
    %2492 = vmatprep.subr.mxu0 0.0
    %2493 = vmatpush1.msra.mxu0 0.0
    %2494 = vmatprep.subr.mxu0 0.0
    %2495 = vmatpush1.msra.mxu0 0.0
    %2496 = vmatprep.mubr.f32.mxu0 0.0
    %2497 = vmatmul.mubr.f32.gmra.mrb[0].mxu0 %v2430
    %v2498 = vpop.f32.mrb[0].mxu0
    %v2499 = vadd.f32 0.0, %v2498
    %v2500 = vpop.f32.mrb[0].mxu0
    %2501 = vdwg.mxu0
    %v2502 = vadd.f32 %v2383, %v2499
    %v2503 = vld [vmem:[#allocation2 + $0x7] sm:$0x1]
    %v2504 = vld [vmem:[#allocation2 + $0x17] sm:$0x1]
    %v2505 = vld [vmem:[#allocation2 + $0x27] sm:$0x1]
    %v2506 = vld [vmem:[#allocation2 + $0x37] sm:$0x1]
    %v2507 = vld [vmem:[#allocation2 + $0x47] sm:$0x1]
    %v2508 = vld [vmem:[#allocation2 + $0x57] sm:$0x1]
    %v2509 = vld [vmem:[#allocation2 + $0x67] sm:$0x1]
    %v2510 = vld [vmem:[#allocation2 + $0x77] sm:$0x1]
    %s2511 = scalar_lea.vmem %s3, 768
    %v2512 = vld [vmem:[%s2511] sm:$0xff]
    %v2513 = vld [vmem:[%s2511 + $0x8] sm:$0xff]
    %v2514 = vld [vmem:[%s2511 + $0x10] sm:$0xff]
    %v2515 = vld [vmem:[%s2511 + $0x18] sm:$0xff]
    %v2516 = vld [vmem:[%s2511 + $0x20] sm:$0xff]
    %v2517 = vld [vmem:[%s2511 + $0x28] sm:$0xff]
    %v2518 = vld [vmem:[%s2511 + $0x30] sm:$0xff]
    %v2519 = vld [vmem:[%s2511 + $0x38] sm:$0xff]
    %v2520 = vld [vmem:[%s2511 + $0x40] sm:$0xff]
    %v2521 = vld [vmem:[%s2511 + $0x48] sm:$0xff]
    %v2522 = vld [vmem:[%s2511 + $0x50] sm:$0xff]
    %v2523 = vld [vmem:[%s2511 + $0x58] sm:$0xff]
    %v2524 = vld [vmem:[%s2511 + $0x60] sm:$0xff]
    %v2525 = vld [vmem:[%s2511 + $0x68] sm:$0xff]
    %v2526 = vld [vmem:[%s2511 + $0x70] sm:$0xff]
    %v2527 = vld [vmem:[%s2511 + $0x78] sm:$0xff]
    %v2536 = vrot.slane %v2504, 7
    %v2537 = vsel %vm1843, %v2536, %v2503
    %v2538 = vrot.slane %v2505, 6
    %v2539 = vsel %vm1846, %v2538, %v2537
    %v2540 = vrot.slane %v2506, 5
    %v2541 = vsel %vm1849, %v2540, %v2539
    %v2542 = vrot.slane %v2507, 4
    %v2543 = vsel %vm1852, %v2542, %v2541
    %v2544 = vrot.slane %v2508, 3
    %v2545 = vsel %vm1855, %v2544, %v2543
    %v2546 = vrot.slane %v2509, 2
    %v2547 = vsel %vm1858, %v2546, %v2545
    %v2548 = vrot.slane %v2510, 1
    %v2549 = vsel %vm1861, %v2548, %v2547
    %2551 = vmatprep.subr.mxu0 0.0
    %2552 = vmatpush1.msra.mxu0 %v2512
    %2553 = vmatprep.subr.mxu0 0.0
    %2554 = vmatpush1.msra.mxu0 %v2513
    %2555 = vmatprep.subr.mxu0 0.0
    %2556 = vmatpush1.msra.mxu0 %v2514
    %2557 = vmatprep.subr.mxu0 0.0
    %2558 = vmatpush1.msra.mxu0 %v2515
    %2559 = vmatprep.subr.mxu0 0.0
    %2560 = vmatpush1.msra.mxu0 %v2516
    %2561 = vmatprep.subr.mxu0 0.0
    %2562 = vmatpush1.msra.mxu0 %v2517
    %2563 = vmatprep.subr.mxu0 0.0
    %2564 = vmatpush1.msra.mxu0 %v2518
    %2565 = vmatprep.subr.mxu0 0.0
    %2566 = vmatpush1.msra.mxu0 %v2519
    %2567 = vmatprep.subr.mxu0 0.0
    %2568 = vmatpush1.msra.mxu0 %v2520
    %2569 = vmatprep.subr.mxu0 0.0
    %2570 = vmatpush1.msra.mxu0 %v2521
    %2571 = vmatprep.subr.mxu0 0.0
    %2572 = vmatpush1.msra.mxu0 %v2522
    %2573 = vmatprep.subr.mxu0 0.0
    %2574 = vmatpush1.msra.mxu0 %v2523
    %2575 = vmatprep.subr.mxu0 0.0
    %2576 = vmatpush1.msra.mxu0 %v2524
    %2577 = vmatprep.subr.mxu0 0.0
    %2578 = vmatpush1.msra.mxu0 %v2525
    %2579 = vmatprep.subr.mxu0 0.0
    %2580 = vmatpush1.msra.mxu0 %v2526
    %2581 = vmatprep.subr.mxu0 0.0
    %2582 = vmatpush1.msra.mxu0 %v2527
    %2583 = vmatprep.subr.mxu0 0.0
    %2584 = vmatpush1.msra.mxu0 0.0
    %2585 = vmatprep.subr.mxu0 0.0
    %2586 = vmatpush1.msra.mxu0 0.0
    %2587 = vmatprep.subr.mxu0 0.0
    %2588 = vmatpush1.msra.mxu0 0.0
    %2589 = vmatprep.subr.mxu0 0.0
    %2590 = vmatpush1.msra.mxu0 0.0
    %2591 = vmatprep.subr.mxu0 0.0
    %2592 = vmatpush1.msra.mxu0 0.0
    %2593 = vmatprep.subr.mxu0 0.0
    %2594 = vmatpush1.msra.mxu0 0.0
    %2595 = vmatprep.subr.mxu0 0.0
    %2596 = vmatpush1.msra.mxu0 0.0
    %2597 = vmatprep.subr.mxu0 0.0
    %2598 = vmatpush1.msra.mxu0 0.0
    %2599 = vmatprep.subr.mxu0 0.0
    %2600 = vmatpush1.msra.mxu0 0.0
    %2601 = vmatprep.subr.mxu0 0.0
    %2602 = vmatpush1.msra.mxu0 0.0
    %2603 = vmatprep.subr.mxu0 0.0
    %2604 = vmatpush1.msra.mxu0 0.0
    %2605 = vmatprep.subr.mxu0 0.0
    %2606 = vmatpush1.msra.mxu0 0.0
    %2607 = vmatprep.subr.mxu0 0.0
    %2608 = vmatpush1.msra.mxu0 0.0
    %2609 = vmatprep.subr.mxu0 0.0
    %2610 = vmatpush1.msra.mxu0 0.0
    %2611 = vmatprep.subr.mxu0 0.0
    %2612 = vmatpush1.msra.mxu0 0.0
    %2613 = vmatprep.subr.mxu0 0.0
    %2614 = vmatpush1.msra.mxu0 0.0
    %2615 = vmatprep.mubr.f32.mxu0 0.0
    %2616 = vmatmul.mubr.f32.gmra.mrb[0].mxu0 %v2549
    %v2617 = vpop.f32.mrb[0].mxu0
    %v2618 = vadd.f32 0.0, %v2617
    %v2619 = vpop.f32.mrb[0].mxu0
    %2620 = vdwg.mxu0
    %v2621 = vadd.f32 %v2502, %v2618
    %v2622 = vld [vmem:[#allocation2 + $0x8] sm:$0x1]
    %v2623 = vld [vmem:[#allocation2 + $0x18] sm:$0x1]
    %v2624 = vld [vmem:[#allocation2 + $0x28] sm:$0x1]
    %v2625 = vld [vmem:[#allocation2 + $0x38] sm:$0x1]
    %v2626 = vld [vmem:[#allocation2 + $0x48] sm:$0x1]
    %v2627 = vld [vmem:[#allocation2 + $0x58] sm:$0x1]
    %v2628 = vld [vmem:[#allocation2 + $0x68] sm:$0x1]
    %v2629 = vld [vmem:[#allocation2 + $0x78] sm:$0x1]
    %s2630 = scalar_lea.vmem %s3, 896
    %v2631 = vld [vmem:[%s2630] sm:$0xff]
    %v2632 = vld [vmem:[%s2630 + $0x8] sm:$0xff]
    %v2633 = vld [vmem:[%s2630 + $0x10] sm:$0xff]
    %v2634 = vld [vmem:[%s2630 + $0x18] sm:$0xff]
    %v2635 = vld [vmem:[%s2630 + $0x20] sm:$0xff]
    %v2636 = vld [vmem:[%s2630 + $0x28] sm:$0xff]
    %v2637 = vld [vmem:[%s2630 + $0x30] sm:$0xff]
    %v2638 = vld [vmem:[%s2630 + $0x38] sm:$0xff]
    %v2639 = vld [vmem:[%s2630 + $0x40] sm:$0xff]
    %v2640 = vld [vmem:[%s2630 + $0x48] sm:$0xff]
    %v2641 = vld [vmem:[%s2630 + $0x50] sm:$0xff]
    %v2642 = vld [vmem:[%s2630 + $0x58] sm:$0xff]
    %v2643 = vld [vmem:[%s2630 + $0x60] sm:$0xff]
    %v2644 = vld [vmem:[%s2630 + $0x68] sm:$0xff]
    %v2645 = vld [vmem:[%s2630 + $0x70] sm:$0xff]
    %v2646 = vld [vmem:[%s2630 + $0x78] sm:$0xff]
    %v2655 = vrot.slane %v2623, 7
    %v2656 = vsel %vm1843, %v2655, %v2622
    %v2657 = vrot.slane %v2624, 6
    %v2658 = vsel %vm1846, %v2657, %v2656
    %v2659 = vrot.slane %v2625, 5
    %v2660 = vsel %vm1849, %v2659, %v2658
    %v2661 = vrot.slane %v2626, 4
    %v2662 = vsel %vm1852, %v2661, %v2660
    %v2663 = vrot.slane %v2627, 3
    %v2664 = vsel %vm1855, %v2663, %v2662
    %v2665 = vrot.slane %v2628, 2
    %v2666 = vsel %vm1858, %v2665, %v2664
    %v2667 = vrot.slane %v2629, 1
    %v2668 = vsel %vm1861, %v2667, %v2666
    %2670 = vmatprep.subr.mxu0 0.0
    %2671 = vmatpush1.msra.mxu0 %v2631
    %2672 = vmatprep.subr.mxu0 0.0
    %2673 = vmatpush1.msra.mxu0 %v2632
    %2674 = vmatprep.subr.mxu0 0.0
    %2675 = vmatpush1.msra.mxu0 %v2633
    %2676 = vmatprep.subr.mxu0 0.0
    %2677 = vmatpush1.msra.mxu0 %v2634
    %2678 = vmatprep.subr.mxu0 0.0
    %2679 = vmatpush1.msra.mxu0 %v2635
    %2680 = vmatprep.subr.mxu0 0.0
    %2681 = vmatpush1.msra.mxu0 %v2636
    %2682 = vmatprep.subr.mxu0 0.0
    %2683 = vmatpush1.msra.mxu0 %v2637
    %2684 = vmatprep.subr.mxu0 0.0
    %2685 = vmatpush1.msra.mxu0 %v2638
    %2686 = vmatprep.subr.mxu0 0.0
    %2687 = vmatpush1.msra.mxu0 %v2639
    %2688 = vmatprep.subr.mxu0 0.0
    %2689 = vmatpush1.msra.mxu0 %v2640
    %2690 = vmatprep.subr.mxu0 0.0
    %2691 = vmatpush1.msra.mxu0 %v2641
    %2692 = vmatprep.subr.mxu0 0.0
    %2693 = vmatpush1.msra.mxu0 %v2642
    %2694 = vmatprep.subr.mxu0 0.0
    %2695 = vmatpush1.msra.mxu0 %v2643
    %2696 = vmatprep.subr.mxu0 0.0
    %2697 = vmatpush1.msra.mxu0 %v2644
    %2698 = vmatprep.subr.mxu0 0.0
    %2699 = vmatpush1.msra.mxu0 %v2645
    %2700 = vmatprep.subr.mxu0 0.0
    %2701 = vmatpush1.msra.mxu0 %v2646
    %2702 = vmatprep.subr.mxu0 0.0
    %2703 = vmatpush1.msra.mxu0 0.0
    %2704 = vmatprep.subr.mxu0 0.0
    %2705 = vmatpush1.msra.mxu0 0.0
    %2706 = vmatprep.subr.mxu0 0.0
    %2707 = vmatpush1.msra.mxu0 0.0
    %2708 = vmatprep.subr.mxu0 0.0
    %2709 = vmatpush1.msra.mxu0 0.0
    %2710 = vmatprep.subr.mxu0 0.0
    %2711 = vmatpush1.msra.mxu0 0.0
    %2712 = vmatprep.subr.mxu0 0.0
    %2713 = vmatpush1.msra.mxu0 0.0
    %2714 = vmatprep.subr.mxu0 0.0
    %2715 = vmatpush1.msra.mxu0 0.0
    %2716 = vmatprep.subr.mxu0 0.0
    %2717 = vmatpush1.msra.mxu0 0.0
    %2718 = vmatprep.subr.mxu0 0.0
    %2719 = vmatpush1.msra.mxu0 0.0
    %2720 = vmatprep.subr.mxu0 0.0
    %2721 = vmatpush1.msra.mxu0 0.0
    %2722 = vmatprep.subr.mxu0 0.0
    %2723 = vmatpush1.msra.mxu0 0.0
    %2724 = vmatprep.subr.mxu0 0.0
    %2725 = vmatpush1.msra.mxu0 0.0
    %2726 = vmatprep.subr.mxu0 0.0
    %2727 = vmatpush1.msra.mxu0 0.0
    %2728 = vmatprep.subr.mxu0 0.0
    %2729 = vmatpush1.msra.mxu0 0.0
    %2730 = vmatprep.subr.mxu0 0.0
    %2731 = vmatpush1.msra.mxu0 0.0
    %2732 = vmatprep.subr.mxu0 0.0
    %2733 = vmatpush1.msra.mxu0 0.0
    %2734 = vmatprep.mubr.f32.mxu0 0.0
    %2735 = vmatmul.mubr.f32.gmra.mrb[0].mxu0 %v2668
    %v2736 = vpop.f32.mrb[0].mxu0
    %v2737 = vadd.f32 0.0, %v2736
    %v2738 = vpop.f32.mrb[0].mxu0
    %2739 = vdwg.mxu0
    %v2740 = vadd.f32 %v2621, %v2737
    %v2741 = vld [vmem:[%s4] sm:$0x1]
    %v2743 = vlaneseq
    %v2744 = vshrl.u32 %v2743, 7
    %v2745 = vsub.s32 0, %v2744
    %v2746 = vrot.slane %v2741, %v2745
    %v2748 = vadd.f32 %v2740, %v2746
    %v2749 = vmax.f32 %v2748, 0.0
    %vm2750 = vcmask 261120
    %2751 = vst.msk [vmem:[#allocation6] sm:$0xff] %vm2750, %v2749
    // Predicated region
    $region26: #{tpu_custom_call.1} parent=1 // pred_check
      _
    $region27: #{tpu_custom_call.1} parent=1 // pred_check_branch
      %2753 = sbr.rel (0) target = $region29
    $region28: #{tpu_custom_call.1} parent=1 // pred_region
      %s2755 = ssub.s32 128, 128
      %2756 = vsyncadd [#allocation5], %s2755
      %s2758 = sshll.u32 [#allocation6], 4
      %s2759 = int_to_ptr.vmem [resolvable:$true] %s2758
      %2761 = dma.vmem_to_hbm [thread:$0]  %s2759, 128, %s5, [#allocation5]
    $region29: #{tpu_custom_call.1} parent=1 // pred_fallthru
      _
    // Predicated region
    $region30: #{tpu_custom_call.1} parent=1 // pred_check
      _
    $region31: #{tpu_custom_call.1} parent=1 // pred_check_branch
      %2763 = sbr.rel (0) target = $region33
    $region32: #{tpu_custom_call.1} parent=1 // pred_region
      %2764 = dma.done [#allocation5], 128
    $region33: #{tpu_custom_call.1} parent=1 // pred_fallthru
      _
    %2765 = vsyncpa [#allocation4], 1
    %2766 = vsyncpa [#allocation5], 1

</llo_original>
